<compile_context>
chip_gen: v5e
topology: v5e:2x2
jax: 0.10.0
libtpu: 0.0.40
codegen_flags: <defaults>
</compile_context>

<pallas_src>
import jax
import jax.numpy as jnp
from jax.experimental import pallas as pl
from jax.experimental.pallas import tpu as pltpu

DAW_BS = 128          # daw_bs == io_bs == model_bs (samples per frame, lane axis)
HIDDEN = 32           # synthetic w2w_base hidden width (logical)
H_PAD = 128           # hidden width padded to a full lane dimension
MAX_N_PARAMS = 4      # neutone MAX_N_PARAMS
TB = 128              # frames per grid step (matmul M dimension -> fills MXU rows)


def sqw_forward_kernel(x_ref, params_ref, w1_ref, b1_ref, w2_ref, b2_ref, out_ref):
    # --- param conditioning (hoisted off the MXU-dependent chain) -------------------
    # params_resample_sandwich is identity, params_queue is a pass-through; reduce the
    # (TB, MAX_N_PARAMS, T) buffer to a per-frame global gain.  Stay rank-2 throughout.
    p_sum = jnp.sum(params_ref[...], axis=1)                              # (TB, T)
    p_mean = jnp.sum(p_sum, axis=1, keepdims=True) * (
        1.0 / (MAX_N_PARAMS * DAW_BS))                                    # (TB, 1)
    gain = 0.5 + 0.5 * jax.nn.sigmoid(p_mean)                             # (TB, 1)

    # --- ChannelNormalizerSandwich: DAW stereo -> model mono (mixdown) --------------
    # The 0.5 mixdown factor is folded into W1 by the wrapper (linear, pre-tanh).
    mono = jnp.sum(x_ref[...], axis=1).astype(jnp.bfloat16)               # (TB, T)

    # --- resample_sandwich.process_in: identity (daw_sr == model_sr) ----------------
    # --- in_queue.push / pop: identity (io_bs == model_bs) --------------------------

    # --- synthetic w2w_base.forward(model_in_buffer, params_buffer) -----------------
    h = jnp.tanh(
        jnp.dot(mono, w1_ref[...], preferred_element_type=jnp.float32) + b1_ref[...]
    )                                                                     # (TB, H_PAD) f32
    y = (
        jnp.dot(h.astype(jnp.bfloat16), w2_ref[...],
                preferred_element_type=jnp.float32)
        + b2_ref[...]
    )                                                                     # (TB, T) f32
    y = y * gain

    # --- out_queue.pop / resample_sandwich.process_out: identity --------------------
    # --- ChannelNormalizerSandwich: model mono -> DAW stereo (duplicate) ------------
    out_ref[...] = jnp.broadcast_to(y[:, None, :], out_ref.shape)         # (TB, 2, T)


def sqw_forward(x, params, w1, b1, w2, b2):
    """x: (B, 2, DAW_BS) stacked stereo DAW frames; params: (B, MAX_N_PARAMS, DAW_BS).

    Each frame b is one forward() call of the SQW under the identity-queue config
    (equivalent to forward_offline over B consecutive 128-sample chunks).
    """
    B = x.shape[0]
    assert B % TB == 0, "batch must be a multiple of TB"
    H = w1.shape[1]

    # Fold the 0.5 stereo mixdown into W1 and zero-pad the hidden dim to 128 lanes.
    w1p = jnp.zeros((DAW_BS, H_PAD), jnp.float32).at[:, :H].set(0.5 * w1)
    b1p = jnp.zeros((1, H_PAD), jnp.float32).at[:, :H].set(b1)
    w2p = jnp.zeros((H_PAD, DAW_BS), jnp.float32).at[:H, :].set(w2)
    # bf16 MXU operands (f32 accumulation happens in-kernel).
    w1p = w1p.astype(jnp.bfloat16)
    w2p = w2p.astype(jnp.bfloat16)

    grid = (B // TB,)
    resident = lambda i: (0, 0)   # weights/biases: same block every step -> no re-DMA

    cost = pl.CostEstimate(
        flops=4 * B * DAW_BS * H_PAD + 8 * B * DAW_BS,
        transcendentals=B * (H_PAD + 1),
        bytes_accessed=(x.size + params.size + 2 * B * DAW_BS) * 4
        + (w1p.size + w2p.size) * 2
        + (b1p.size + b2.size) * 4,
    )

    return pl.pallas_call(
        sqw_forward_kernel,
        out_shape=jax.ShapeDtypeStruct((B, 2, DAW_BS), jnp.float32),
        grid_spec=pltpu.PrefetchScalarGridSpec(
            num_scalar_prefetch=0,
            grid=grid,
            in_specs=[
                pl.BlockSpec((TB, 2, DAW_BS), lambda i: (i, 0, 0)),
                pl.BlockSpec((TB, MAX_N_PARAMS, DAW_BS), lambda i: (i, 0, 0)),
                pl.BlockSpec((DAW_BS, H_PAD), resident),
                pl.BlockSpec((1, H_PAD), resident),
                pl.BlockSpec((H_PAD, DAW_BS), resident),
                pl.BlockSpec((1, DAW_BS), resident),
            ],
            out_specs=pl.BlockSpec((TB, 2, DAW_BS), lambda i: (i, 0, 0)),
        ),
        compiler_params=pltpu.CompilerParams(dimension_semantics=("parallel",)),
        cost_estimate=cost,
    )(x, params, w1p, b1p, w2p, b2)


def sqw_forward_ref(x, params, w1, b1, w2, b2):
    """Pure-JAX f32 reference of the same forward semantics (for a correctness check)."""
    B = x.shape[0]
    mono = 0.5 * (x[:, 0, :] + x[:, 1, :])                  # (B, T)
    h = jnp.tanh(mono @ w1 + b1)                            # (B, HIDDEN)
    y = h @ w2 + b2                                         # (B, T)
    gain = 0.5 + 0.5 * jax.nn.sigmoid(jnp.mean(params, axis=(1, 2)))[:, None]
    y = y * gain
    return jnp.broadcast_to(y[:, None, :], (B, 2, DAW_BS))


if __name__ == "__main__":
    key = jax.random.PRNGKey(0)
    kx, kp, k1, k2, kb1, kb2 = jax.random.split(key, 6)

    # Deterministic example inputs: B stacked stereo DAW frames + params buffers.
    B = 2 * TB   # 256 frames -> grid of 2 steps, each a 128-row MXU matmul
    x = jax.random.normal(kx, (B, 2, DAW_BS), dtype=jnp.float32)
    params = jax.random.uniform(kp, (B, MAX_N_PARAMS, DAW_BS), dtype=jnp.float32)

    # Deterministic synthetic w2w_base parameters (logical, unpadded f32).
    w1 = jax.random.normal(k1, (DAW_BS, HIDDEN), dtype=jnp.float32) * 0.05
    w2 = jax.random.normal(k2, (HIDDEN, DAW_BS), dtype=jnp.float32) * 0.05
    b1 = jax.random.normal(kb1, (1, HIDDEN), dtype=jnp.float32) * 0.01
    b2 = jax.random.normal(kb2, (1, DAW_BS), dtype=jnp.float32) * 0.01

    out = sqw_forward(x, params, w1, b1, w2, b2)
    out = jax.block_until_ready(out)

    ref = sqw_forward_ref(x, params, w1, b1, w2, b2)
    assert out.shape == (B, 2, DAW_BS) and out.dtype == jnp.float32
    # bf16 MXU operands with f32 accumulation -> loosened tolerance vs. the f32 ref.
    assert jnp.allclose(out, ref, atol=2e-2, rtol=2e-2), float(
        jnp.max(jnp.abs(out - ref)))

    print("KERNEL_OK")
</pallas_src>

<mosaic_0001>
module attributes {stable_mosaic.version = 11 : i64} {
  func.func @sqw_forward_kernel(%arg0: i32, %arg1: memref<128x2x128xf32, #tpu.memory_space<vmem>>, %arg2: memref<128x4x128xf32, #tpu.memory_space<vmem>>, %arg3: memref<128x128xbf16, #tpu.memory_space<vmem>>, %arg4: memref<1x128xf32, #tpu.memory_space<vmem>>, %arg5: memref<128x128xbf16, #tpu.memory_space<vmem>>, %arg6: memref<1x128xf32, #tpu.memory_space<vmem>>, %arg7: memref<128x2x128xf32, #tpu.memory_space<vmem>>) attributes {dimension_semantics = [#tpu.dimension_semantics<parallel>], iteration_bounds = array<i64: 2>, scalar_prefetch = 0 : i64, scratch_operands = 0 : i64, tpu.core_type = #tpu.core_type<tc>, window_params = [{transform_indices = @transform_0, window_bounds = array<i64: 128, 2, 128>}, {transform_indices = @transform_1, window_bounds = array<i64: 128, 4, 128>}, {pipeline_mode = #tpu.pipeline_mode<synchronous>, transform_indices = @transform_2, window_bounds = array<i64: 128, 128>}, {pipeline_mode = #tpu.pipeline_mode<synchronous>, transform_indices = @transform_3, window_bounds = array<i64: 1, 128>}, {pipeline_mode = #tpu.pipeline_mode<synchronous>, transform_indices = @transform_4, window_bounds = array<i64: 128, 128>}, {pipeline_mode = #tpu.pipeline_mode<synchronous>, transform_indices = @transform_5, window_bounds = array<i64: 1, 128>}, {transform_indices = @transform_6, window_bounds = array<i64: 128, 2, 128>}]} {
    %c0 = arith.constant 0 : index
    %c0_0 = arith.constant 0 : index
    %c0_1 = arith.constant 0 : index
    %0 = vector.load %arg2[%c0, %c0_0, %c0_1] : memref<128x4x128xf32, #tpu.memory_space<vmem>>, vector<128x4x128xf32>
    %cst = arith.constant dense<0.000000e+00> : vector<128x128xf32>
    %1 = vector.multi_reduction <add>, %0, %cst [1] : vector<128x4x128xf32> to vector<128x128xf32>
    %cst_2 = arith.constant dense<0.000000e+00> : vector<128xf32>
    %2 = vector.multi_reduction <add>, %1, %cst_2 [1] : vector<128x128xf32> to vector<128xf32>
    %3 = vector.shape_cast %2 : vector<128xf32> to vector<128x1xf32>
    %cst_3 = arith.constant 0.001953125 : f32
    %4 = vector.broadcast %cst_3 : f32 to vector<128x1xf32>
    %5 = arith.mulf %3, %4 : vector<128x1xf32>
    %6 = arith.negf %5 : vector<128x1xf32>
    %7 = math.exp %6 : vector<128x1xf32>
    %cst_4 = arith.constant 1.000000e+00 : f32
    %8 = vector.broadcast %cst_4 : f32 to vector<128x1xf32>
    %9 = arith.addf %8, %7 : vector<128x1xf32>
    %10 = arith.divf %8, %9 : vector<128x1xf32>
    %cst_5 = arith.constant 5.000000e-01 : f32
    %11 = vector.broadcast %cst_5 : f32 to vector<128x1xf32>
    %12 = arith.mulf %11, %10 : vector<128x1xf32>
    %cst_6 = arith.constant 5.000000e-01 : f32
    %13 = vector.broadcast %cst_6 : f32 to vector<128x1xf32>
    %14 = arith.addf %13, %12 : vector<128x1xf32>
    %c0_7 = arith.constant 0 : index
    %c0_8 = arith.constant 0 : index
    %c0_9 = arith.constant 0 : index
    %15 = vector.load %arg1[%c0_7, %c0_8, %c0_9] : memref<128x2x128xf32, #tpu.memory_space<vmem>>, vector<128x2x128xf32>
    %cst_10 = arith.constant dense<0.000000e+00> : vector<128x128xf32>
    %16 = vector.multi_reduction <add>, %15, %cst_10 [1] : vector<128x2x128xf32> to vector<128x128xf32>
    %17 = arith.truncf %16 : vector<128x128xf32> to vector<128x128xbf16>
    %c0_11 = arith.constant 0 : index
    %c0_12 = arith.constant 0 : index
    %18 = vector.load %arg3[%c0_11, %c0_12] : memref<128x128xbf16, #tpu.memory_space<vmem>>, vector<128x128xbf16>
    %cst_13 = arith.constant dense<0.000000e+00> : vector<128x128xf32>
    %19 = tpu.matmul %17, %18, %cst_13 {dimension_numbers = #tpu.dot_dimension_numbers<[1], [0], [0], [1], [0, 0, 1, 1], [], []>} : vector<128x128xbf16>, vector<128x128xbf16>, vector<128x128xf32> -> vector<128x128xf32>
    %c0_14 = arith.constant 0 : index
    %c0_15 = arith.constant 0 : index
    %20 = vector.load %arg4[%c0_14, %c0_15] : memref<1x128xf32, #tpu.memory_space<vmem>>, vector<1x128xf32>
    %21 = vector.broadcast %20 : vector<1x128xf32> to vector<128x128xf32>
    %22 = arith.addf %19, %21 : vector<128x128xf32>
    %23 = math.tanh %22 : vector<128x128xf32>
    %24 = arith.truncf %23 : vector<128x128xf32> to vector<128x128xbf16>
    %c0_16 = arith.constant 0 : index
    %c0_17 = arith.constant 0 : index
    %25 = vector.load %arg5[%c0_16, %c0_17] : memref<128x128xbf16, #tpu.memory_space<vmem>>, vector<128x128xbf16>
    %cst_18 = arith.constant dense<0.000000e+00> : vector<128x128xf32>
    %26 = tpu.matmul %24, %25, %cst_18 {dimension_numbers = #tpu.dot_dimension_numbers<[1], [0], [0], [1], [0, 0, 1, 1], [], []>} : vector<128x128xbf16>, vector<128x128xbf16>, vector<128x128xf32> -> vector<128x128xf32>
    %c0_19 = arith.constant 0 : index
    %c0_20 = arith.constant 0 : index
    %27 = vector.load %arg6[%c0_19, %c0_20] : memref<1x128xf32, #tpu.memory_space<vmem>>, vector<1x128xf32>
    %28 = vector.broadcast %27 : vector<1x128xf32> to vector<128x128xf32>
    %29 = arith.addf %26, %28 : vector<128x128xf32>
    %30 = vector.broadcast %14 : vector<128x1xf32> to vector<128x128xf32>
    %31 = arith.mulf %29, %30 : vector<128x128xf32>
    %32 = vector.shape_cast %31 : vector<128x128xf32> to vector<128x1x128xf32>
    %33 = vector.shape_cast %32 : vector<128x1x128xf32> to vector<128x1x128xf32>
    %34 = vector.broadcast %33 : vector<128x1x128xf32> to vector<128x2x128xf32>
    %c0_21 = arith.constant 0 : index
    %c0_22 = arith.constant 0 : index
    %c0_23 = arith.constant 0 : index
    %35 = vector.load %arg7[%c0_21, %c0_22, %c0_23] : memref<128x2x128xf32, #tpu.memory_space<vmem>>, vector<128x2x128xf32>
    tpu.vector_store %arg7[%c0_21, %c0_22, %c0_23], %34 {strides = array<i32>} : memref<128x2x128xf32, #tpu.memory_space<vmem>>, vector<128x2x128xf32>,
    return
  }
  func.func @transform_0(%arg0: i32) -> (i32, i32, i32) {
    %c0_i32 = arith.constant 0 : i32
    %c0_i32_0 = arith.constant 0 : i32
    %c0_i32_1 = arith.constant 0 : i32
    return %arg0, %c0_i32, %c0_i32_0 : i32, i32, i32
  }
  func.func @transform_1(%arg0: i32) -> (i32, i32, i32) {
    %c0_i32 = arith.constant 0 : i32
    %c0_i32_0 = arith.constant 0 : i32
    %c0_i32_1 = arith.constant 0 : i32
    return %arg0, %c0_i32, %c0_i32_0 : i32, i32, i32
  }
  func.func @transform_2(%arg0: i32) -> (i32, i32) {
    %c0_i32 = arith.constant 0 : i32
    %c0_i32_0 = arith.constant 0 : i32
    %c0_i32_1 = arith.constant 0 : i32
    return %c0_i32, %c0_i32_0 : i32, i32
  }
  func.func @transform_3(%arg0: i32) -> (i32, i32) {
    %c0_i32 = arith.constant 0 : i32
    %c0_i32_0 = arith.constant 0 : i32
    %c0_i32_1 = arith.constant 0 : i32
    return %c0_i32, %c0_i32_0 : i32, i32
  }
  func.func @transform_4(%arg0: i32) -> (i32, i32) {
    %c0_i32 = arith.constant 0 : i32
    %c0_i32_0 = arith.constant 0 : i32
    %c0_i32_1 = arith.constant 0 : i32
    return %c0_i32, %c0_i32_0 : i32, i32
  }
  func.func @transform_5(%arg0: i32) -> (i32, i32) {
    %c0_i32 = arith.constant 0 : i32
    %c0_i32_0 = arith.constant 0 : i32
    %c0_i32_1 = arith.constant 0 : i32
    return %c0_i32, %c0_i32_0 : i32, i32
  }
  func.func @transform_6(%arg0: i32) -> (i32, i32, i32) {
    %c0_i32 = arith.constant 0 : i32
    %c0_i32_0 = arith.constant 0 : i32
    %c0_i32_1 = arith.constant 0 : i32
    return %arg0, %c0_i32, %c0_i32_0 : i32, i32, i32
  }
}

</mosaic_0001>

<llo_original>
// kernel: tpu_custom_call.1
$region0: #{tpu_custom_call.1}
  #allocation0 [shape = 'u32[]', space=smem, size = 0x4, offset = 0x4, fixed_abs, tag = 'smem constant byte address 0x4 - core index']
  #allocation1 [shape = 'u32[72,128]{1,0:T(1,128)}', space=vmem, size = 0x9000, scoped, tag = 'internal scratch']
  %s0 = inlined_call_operand.hbm [shape: f32[256,2,128], index: 0, kind: input, shape index: {}]
  %s1 = inlined_call_operand.hbm [shape: f32[256,4,128], index: 1, kind: input, shape index: {}]
  %s2 = inlined_call_operand.hbm [shape: bf16[128,128], index: 2, kind: input, shape index: {}]
  %s3 = inlined_call_operand.vmem [shape: f32[1,128], index: 3, kind: input, shape index: {}]
  %s4 = inlined_call_operand.hbm [shape: bf16[128,128], index: 4, kind: input, shape index: {}]
  %s5 = inlined_call_operand.vmem [shape: f32[1,128], index: 5, kind: input, shape index: {}]
  %s6 = inlined_call_operand.hbm [shape: f32[256,2,128], index: 6, kind: output, shape index: {}]
  %s7 = sld [smem:[#allocation0]]
  $region73: #{tpu_custom_call.1} parent=0
    _
  %s9 = ssub.s32 1, %s7
  %s10 = scalar_select 0, %s9, %s7
  $region1: #{tpu_custom_call.1} parent=0
    #allocation2 [shape = 'u8[262144]{0}', space=vmem, size = 0x40000, scoped, tag = 'input window, operand 0']
    #allocation3 [shape = 's32[2]{0}', space=sflag, size = 0x8, scoped, tag = 'scoped memory for tpu_custom_call.1']
    #allocation4 [shape = 's32[2]{0}', space=sflag, size = 0x8, scoped, tag = 'scoped memory for tpu_custom_call.1']
    #allocation5 [shape = 'u8[524288]{0}', space=vmem, size = 0x80000, scoped, tag = 'input window, operand 1']
    #allocation6 [shape = 's32[2]{0}', space=sflag, size = 0x8, scoped, tag = 'scoped memory for tpu_custom_call.1']
    #allocation7 [shape = 'u8[32768]{0}', space=vmem, size = 0x8000, scoped, tag = 'input window, operand 2, single buffered']
    #allocation8 [shape = 'u8[32768]{0}', space=vmem, size = 0x8000, scoped, tag = 'input window, operand 4, single buffered']
    #allocation9 [shape = 's32[1]{0}', space=sflag, size = 0x4, scoped, tag = 'scoped memory for tpu_custom_call.1']
    #allocation10 [shape = 'u8[262144]{0}', space=vmem, size = 0x40000, scoped, tag = 'output window, operand 0']
    %11 = vsyncpa [#allocation3], 0
    %s12 = scalar_lea.sflag [#allocation3], 1
    %13 = vsyncpa %s12, 0
    %14 = vsyncpa [#allocation6], 0
    %s15 = scalar_lea.sflag [#allocation6], 1
    %16 = vsyncpa %s15, 0
    %17 = vsyncpa [#allocation9], 0
    %18 = vsyncpa [#allocation4], 0
    %s19 = scalar_lea.sflag [#allocation4], 1
    %20 = vsyncpa %s19, 0
    loop: start=0, step=1, limit=4
    $region2: #{tpu_custom_call.1} parent=1 // loop_pre_header
      _
    $region3: #{tpu_custom_call.1} parent=1 // loop_header
      %s22 = sphi 0, %s26
      %p23 = scmp.ge.s32.totalorder %s22, 4
      %s32 = sphi 0, %s34
      %s35 = sphi 0, %s32
      %s36 = sphi 0, %s35
      %s52 = sphi 0, %s36
      %s58 = sphi 0, %s60
      %s61 = sphi 0, %s58
      %s62 = sphi 0, %s61
      %s78 = sphi 0, %s62
      %s82 = sphi 0, %s82
      %s84 = sphi 0, %s82
      %s85 = sphi 0, %s84
      %s99 = sphi 0, %s85
      %s103 = sphi 0, %s103
      %s105 = sphi 0, %s103
      %s106 = sphi 0, %s105
      %s120 = sphi 0, %s106
      %s124 = sphi 0, %s124
      %s126 = sphi 0, %s124
      %s127 = sphi 0, %s126
      %s141 = sphi 0, %s127
      %s145 = sphi 0, %s145
      %s147 = sphi 0, %s145
      %s148 = sphi 0, %s147
      %s162 = sphi 0, %s148
      %s168 = sphi 0, %s170
      %s171 = sphi 0, %s168
      %s172 = sphi 0, %s171
      %s188 = sphi 0, %s172
    $region4: #{tpu_custom_call.1} parent=1 // loop_header_branch
      %25 = sbr.rel (%p23) target = $region8
    $region5: #{tpu_custom_call.1} parent=1 // loop_body
      %s27 = ssub.s32 %s22, 1
      %s28 = ssub.s32 %s22, 2
      %s29 = sadd.s32 %s22, 1
      %s30 = ssub.s32 %s22, %s29
      %p31 = scmp.eq.s32.totalorder %s30, 0
      %s33 = sadd.s32 %s32, 1
      %s34 = scalar_select %p31, %s32, %s33
      %p37 = pneg %p31
      %p38 = scmp.eq.s32.totalorder %s22, 1
      %p39 = por %p37, %p38
      %p40 = scmp.ne.s32.totalorder %s32, %s35
      %p41 = scmp.eq.s32.totalorder %s22, 0
      %p42 = por %p40, %p41
      %p43 = scmp.ne.s32.totalorder %s32, %s35
      %p44 = scmp.eq.s32.totalorder %s27, 1
      %p45 = por %p43, %p44
      %p46 = scmp.ne.s32.totalorder %s35, %s36
      %p47 = scmp.eq.s32.totalorder %s27, 0
      %p48 = por %p46, %p47
      %p49 = scmp.ne.s32.totalorder %s35, %s36
      %p50 = scmp.eq.s32.totalorder %s28, 1
      %p51 = por %p49, %p50
      %p53 = scmp.ne.s32.totalorder %s36, %s52
      %p54 = scmp.eq.s32.totalorder %s28, 0
      %p55 = por %p53, %p54
      %s56 = ssub.s32 %s22, %s29
      %p57 = scmp.eq.s32.totalorder %s56, 0
      %s59 = sadd.s32 %s58, 1
      %s60 = scalar_select %p57, %s58, %s59
      %p63 = pneg %p57
      %p64 = scmp.eq.s32.totalorder %s22, 1
      %p65 = por %p63, %p64
      %p66 = scmp.ne.s32.totalorder %s58, %s61
      %p67 = scmp.eq.s32.totalorder %s22, 0
      %p68 = por %p66, %p67
      %p69 = scmp.ne.s32.totalorder %s58, %s61
      %p70 = scmp.eq.s32.totalorder %s27, 1
      %p71 = por %p69, %p70
      %p72 = scmp.ne.s32.totalorder %s61, %s62
      %p73 = scmp.eq.s32.totalorder %s27, 0
      %p74 = por %p72, %p73
      %p75 = scmp.ne.s32.totalorder %s61, %s62
      %p76 = scmp.eq.s32.totalorder %s28, 1
      %p77 = por %p75, %p76
      %p79 = scmp.ne.s32.totalorder %s62, %s78
      %p80 = scmp.eq.s32.totalorder %s28, 0
      %p81 = por %p79, %p80
      %s83 = sadd.s32 %s82, 1
      %p86 = scmp.eq.s32.totalorder %s22, 1
      %p87 = scmp.ne.s32.totalorder %s82, %s84
      %p88 = scmp.eq.s32.totalorder %s22, 0
      %p89 = por %p87, %p88
      %p90 = scmp.ne.s32.totalorder %s82, %s84
      %p91 = scmp.eq.s32.totalorder %s27, 1
      %p92 = por %p90, %p91
      %p93 = scmp.ne.s32.totalorder %s84, %s85
      %p94 = scmp.eq.s32.totalorder %s27, 0
      %p95 = por %p93, %p94
      %p96 = scmp.ne.s32.totalorder %s84, %s85
      %p97 = scmp.eq.s32.totalorder %s28, 1
      %p98 = por %p96, %p97
      %p100 = scmp.ne.s32.totalorder %s85, %s99
      %p101 = scmp.eq.s32.totalorder %s28, 0
      %p102 = por %p100, %p101
      %s104 = sadd.s32 %s103, 1
      %p107 = scmp.eq.s32.totalorder %s22, 1
      %p108 = scmp.ne.s32.totalorder %s103, %s105
      %p109 = scmp.eq.s32.totalorder %s22, 0
      %p110 = por %p108, %p109
      %p111 = scmp.ne.s32.totalorder %s103, %s105
      %p112 = scmp.eq.s32.totalorder %s27, 1
      %p113 = por %p111, %p112
      %p114 = scmp.ne.s32.totalorder %s105, %s106
      %p115 = scmp.eq.s32.totalorder %s27, 0
      %p116 = por %p114, %p115
      %p117 = scmp.ne.s32.totalorder %s105, %s106
      %p118 = scmp.eq.s32.totalorder %s28, 1
      %p119 = por %p117, %p118
      %p121 = scmp.ne.s32.totalorder %s106, %s120
      %p122 = scmp.eq.s32.totalorder %s28, 0
      %p123 = por %p121, %p122
      %s125 = sadd.s32 %s124, 1
      %p128 = scmp.eq.s32.totalorder %s22, 1
      %p129 = scmp.ne.s32.totalorder %s124, %s126
      %p130 = scmp.eq.s32.totalorder %s22, 0
      %p131 = por %p129, %p130
      %p132 = scmp.ne.s32.totalorder %s124, %s126
      %p133 = scmp.eq.s32.totalorder %s27, 1
      %p134 = por %p132, %p133
      %p135 = scmp.ne.s32.totalorder %s126, %s127
      %p136 = scmp.eq.s32.totalorder %s27, 0
      %p137 = por %p135, %p136
      %p138 = scmp.ne.s32.totalorder %s126, %s127
      %p139 = scmp.eq.s32.totalorder %s28, 1
      %p140 = por %p138, %p139
      %p142 = scmp.ne.s32.totalorder %s127, %s141
      %p143 = scmp.eq.s32.totalorder %s28, 0
      %p144 = por %p142, %p143
      %s146 = sadd.s32 %s145, 1
      %p149 = scmp.eq.s32.totalorder %s22, 1
      %p150 = scmp.ne.s32.totalorder %s145, %s147
      %p151 = scmp.eq.s32.totalorder %s22, 0
      %p152 = por %p150, %p151
      %p153 = scmp.ne.s32.totalorder %s145, %s147
      %p154 = scmp.eq.s32.totalorder %s27, 1
      %p155 = por %p153, %p154
      %p156 = scmp.ne.s32.totalorder %s147, %s148
      %p157 = scmp.eq.s32.totalorder %s27, 0
      %p158 = por %p156, %p157
      %p159 = scmp.ne.s32.totalorder %s147, %s148
      %p160 = scmp.eq.s32.totalorder %s28, 1
      %p161 = por %p159, %p160
      %p163 = scmp.ne.s32.totalorder %s148, %s162
      %p164 = scmp.eq.s32.totalorder %s28, 0
      %p165 = por %p163, %p164
      %s166 = ssub.s32 %s22, %s29
      %p167 = scmp.eq.s32.totalorder %s166, 0
      %s169 = sadd.s32 %s168, 1
      %s170 = scalar_select %p167, %s168, %s169
      %p173 = pneg %p167
      %p174 = scmp.eq.s32.totalorder %s22, 1
      %p175 = por %p173, %p174
      %p176 = scmp.ne.s32.totalorder %s168, %s171
      %p177 = scmp.eq.s32.totalorder %s22, 0
      %p178 = por %p176, %p177
      %p179 = scmp.ne.s32.totalorder %s168, %s171
      %p180 = scmp.eq.s32.totalorder %s27, 1
      %p181 = por %p179, %p180
      %p182 = scmp.ne.s32.totalorder %s171, %s172
      %p183 = scmp.eq.s32.totalorder %s27, 0
      %p184 = por %p182, %p183
      %p185 = scmp.ne.s32.totalorder %s171, %s172
      %p186 = scmp.eq.s32.totalorder %s28, 1
      %p187 = por %p185, %p186
      %p189 = scmp.ne.s32.totalorder %s172, %s188
      %p190 = scmp.eq.s32.totalorder %s28, 0
      %p191 = por %p189, %p190
      %p192 = scmp.le.s32.totalorder 1, %s22
      %p193 = scmp.lt.s32.totalorder %s22, 3
      %p194 = pnand %p192, %p193
      %p195 = pneg %p194
      // Predicated region
      $region9: #{tpu_custom_call.1} parent=5 // pred_check
        _
      $region10: #{tpu_custom_call.1} parent=5 // pred_check_branch
        %197 = sbr.rel (%p194) target = $region12
      $region11: #{tpu_custom_call.1} parent=5 // pred_region
        %s198 = ssub.s32 %s22, 1
        // Predicated region
        $region13: #{tpu_custom_call.1} parent=11 // pred_check
          %p199 = pneg %p95
        $region14: #{tpu_custom_call.1} parent=11 // pred_check_branch
          %201 = sbr.rel (%p199) target = $region16
        $region15: #{tpu_custom_call.1} parent=11 // pred_region
          %203 = vsyncadd [#allocation6], 0
          %s204 = sshll.u32 %s2, 4
          %s205 = int_to_ptr.hbm [resolvable:$true] %s204
          %s206 = sshll.u32 [#allocation7], 4
          %s207 = int_to_ptr.vmem [resolvable:$true] %s206
          %212 = dma.hbm_to_vmem [thread:$0]  %s205, 1024, %s207, [#allocation6], 64, 64, 4
        $region16: #{tpu_custom_call.1} parent=11 // pred_fallthru
          _
        // Predicated region
        $region17: #{tpu_custom_call.1} parent=11 // pred_check
          %p213 = pneg %p116
        $region18: #{tpu_custom_call.1} parent=11 // pred_check_branch
          %215 = sbr.rel (%p213) target = $region20
        $region19: #{tpu_custom_call.1} parent=11 // pred_region
          _
        $region20: #{tpu_custom_call.1} parent=11 // pred_fallthru
          _
        // Predicated region
        $region21: #{tpu_custom_call.1} parent=11 // pred_check
          %p216 = pneg %p137
        $region22: #{tpu_custom_call.1} parent=11 // pred_check_branch
          %218 = sbr.rel (%p216) target = $region24
        $region23: #{tpu_custom_call.1} parent=11 // pred_region
          %220 = vsyncadd [#allocation9], 0
          %s221 = sshll.u32 %s4, 4
          %s222 = int_to_ptr.hbm [resolvable:$true] %s221
          %s223 = sshll.u32 [#allocation8], 4
          %s224 = int_to_ptr.vmem [resolvable:$true] %s223
          %229 = dma.hbm_to_vmem [thread:$0]  %s222, 1024, %s224, [#allocation9], 64, 64, 4
        $region24: #{tpu_custom_call.1} parent=11 // pred_fallthru
          _
        // Predicated region
        $region25: #{tpu_custom_call.1} parent=11 // pred_check
          %p230 = pneg %p158
        $region26: #{tpu_custom_call.1} parent=11 // pred_check_branch
          %232 = sbr.rel (%p230) target = $region28
        $region27: #{tpu_custom_call.1} parent=11 // pred_region
          _
        $region28: #{tpu_custom_call.1} parent=11 // pred_fallthru
          _
      $region12: #{tpu_custom_call.1} parent=5 // pred_fallthru
        _
      %p233 = scmp.lt.s32.totalorder %s22, 2
      // Predicated region
      $region29: #{tpu_custom_call.1} parent=5 // pred_check
        %p234 = pneg %p233
      $region30: #{tpu_custom_call.1} parent=5 // pred_check_branch
        %236 = sbr.rel (%p234) target = $region32
      $region31: #{tpu_custom_call.1} parent=5 // pred_region
        // Predicated region
        $region33: #{tpu_custom_call.1} parent=31 // pred_check
          %p237 = pneg %p42
        $region34: #{tpu_custom_call.1} parent=31 // pred_check_branch
          %239 = sbr.rel (%p237) target = $region36
        $region35: #{tpu_custom_call.1} parent=31 // pred_region
          %s240 = sand.u32 %s32, 1
          %s241 = scalar_lea.sflag [#allocation3], %s240
          %s242 = sand.u32 %s32, 1
          %s243 = smul.addr %s242, 256
          %s244 = scalar_lea.vmem [#allocation2], %s243
          %s245 = smul.u32 128, %s22
          %247 = vsyncadd %s241, 0
          %s248 = smul.addr %s245, 2
          %s249 = scalar_lea.hbm %s0, %s248
          %s250 = sshll.u32 %s249, 4
          %s251 = int_to_ptr.hbm [resolvable:$true] %s250
          %s252 = sshll.u32 %s244, 4
          %s253 = int_to_ptr.vmem [resolvable:$true] %s252
          %258 = dma.hbm_to_vmem [thread:$0]  %s251, 4096, %s253, %s241, 32, 32, 2
        $region36: #{tpu_custom_call.1} parent=31 // pred_fallthru
          _
        // Predicated region
        $region37: #{tpu_custom_call.1} parent=31 // pred_check
          %p259 = pneg %p68
        $region38: #{tpu_custom_call.1} parent=31 // pred_check_branch
          %261 = sbr.rel (%p259) target = $region40
        $region39: #{tpu_custom_call.1} parent=31 // pred_region
          %s262 = sand.u32 %s22, 1
          %s263 = scalar_lea.sflag [#allocation6], %s262
          %s264 = sand.u32 %s58, 1
          %s265 = smul.addr %s264, 512
          %s266 = scalar_lea.vmem [#allocation5], %s265
          %s267 = smul.u32 128, %s22
          %269 = vsyncadd %s263, 0
          %s270 = smul.addr %s267, 4
          %s271 = scalar_lea.hbm %s1, %s270
          %s272 = sshll.u32 %s271, 4
          %s273 = int_to_ptr.hbm [resolvable:$true] %s272
          %s274 = sshll.u32 %s266, 4
          %s275 = int_to_ptr.vmem [resolvable:$true] %s274
          %280 = dma.hbm_to_vmem [thread:$0]  %s273, 8192, %s275, %s263, 64, 64, 4
        $region40: #{tpu_custom_call.1} parent=31 // pred_fallthru
          _
      $region32: #{tpu_custom_call.1} parent=5 // pred_fallthru
        _
      %p281 = scmp.le.s32.totalorder 1, %s22
      %p282 = scmp.lt.s32.totalorder %s22, 3
      %p283 = pnand %p281, %p282
      %p284 = pneg %p283
      // Predicated region
      $region41: #{tpu_custom_call.1} parent=5 // pred_check
        _
      $region42: #{tpu_custom_call.1} parent=5 // pred_check_branch
        %286 = sbr.rel (%p283) target = $region44
      $region43: #{tpu_custom_call.1} parent=5 // pred_region
        %s287 = ssub.s32 %s22, 1
        %s288 = sand.u32 %s35, 1
        %s289 = scalar_lea.sflag [#allocation3], %s288
        %s290 = sand.u32 %s35, 1
        %s291 = smul.addr %s290, 256
        %s292 = scalar_lea.vmem [#allocation2], %s291
        // Predicated region
        $region45: #{tpu_custom_call.1} parent=43 // pred_check
          %p293 = pneg %p48
        $region46: #{tpu_custom_call.1} parent=43 // pred_check_branch
          %295 = sbr.rel (%p293) target = $region48
        $region47: #{tpu_custom_call.1} parent=43 // pred_region
          %297 = dma.done %s289, 4096
        $region48: #{tpu_custom_call.1} parent=43 // pred_fallthru
          _
        %s298 = sand.u32 %s27, 1
        %s299 = scalar_lea.sflag [#allocation6], %s298
        %s300 = sand.u32 %s61, 1
        %s301 = smul.addr %s300, 512
        %s302 = scalar_lea.vmem [#allocation5], %s301
        // Predicated region
        $region49: #{tpu_custom_call.1} parent=43 // pred_check
          %p303 = pneg %p74
        $region50: #{tpu_custom_call.1} parent=43 // pred_check_branch
          %305 = sbr.rel (%p303) target = $region52
        $region51: #{tpu_custom_call.1} parent=43 // pred_region
          %307 = dma.done %s299, 8192
        $region52: #{tpu_custom_call.1} parent=43 // pred_fallthru
          _
        // Predicated region
        $region53: #{tpu_custom_call.1} parent=43 // pred_check
          %p308 = pneg %p95
        $region54: #{tpu_custom_call.1} parent=43 // pred_check_branch
          %310 = sbr.rel (%p308) target = $region56
        $region55: #{tpu_custom_call.1} parent=43 // pred_region
          %312 = dma.done [#allocation6], 1024
        $region56: #{tpu_custom_call.1} parent=43 // pred_fallthru
          _
        // Predicated region
        $region57: #{tpu_custom_call.1} parent=43 // pred_check
          %p313 = pneg %p137
        $region58: #{tpu_custom_call.1} parent=43 // pred_check_branch
          %315 = sbr.rel (%p313) target = $region60
        $region59: #{tpu_custom_call.1} parent=43 // pred_region
          %317 = dma.done [#allocation9], 1024
        $region60: #{tpu_custom_call.1} parent=43 // pred_fallthru
          _
        %s318 = sand.u32 %s35, 1
        %s319 = scalar_lea.sflag [#allocation3], %s318
        %s320 = sand.u32 %s35, 1
        %s321 = smul.addr %s320, 256
        %s322 = scalar_lea.vmem [#allocation2], %s321
        %p323 = pneg %p48
        %p324 = pneg %p45
        %s325 = sand.u32 %s27, 1
        %s326 = scalar_lea.sflag [#allocation6], %s325
        %s327 = sand.u32 %s61, 1
        %s328 = smul.addr %s327, 512
        %s329 = scalar_lea.vmem [#allocation5], %s328
        %p330 = pneg %p74
        %p331 = pneg %p71
        %p332 = pneg %p95
        %p333 = pneg %p92
        %p334 = pneg %p116
        %p335 = pneg %p113
        %p336 = pneg %p137
        %p337 = pneg %p134
        %p338 = pneg %p158
        %p339 = pneg %p155
        %p340 = pneg %p184
        %p341 = pneg %p181
        %s342 = sand.u32 %s171, 1
        %s343 = scalar_lea.sflag [#allocation4], %s342
        %s344 = sand.u32 %s171, 1
        %s345 = smul.addr %s344, 256
        %s346 = scalar_lea.vmem [#allocation10], %s345
        %s347 = smul.u32 128, %s27
        %s348 = smul.u32 128, %s27
        %s349 = smul.u32 128, %s27
        %v350 = vld [vmem:[%s302] sm:$0xf]
        %v351 = vld [vmem:[%s302 + $0x4] sm:$0xf]
        %v352 = vld [vmem:[%s302 + $0x8] sm:$0xf]
        %v353 = vld [vmem:[%s302 + $0xc] sm:$0xf]
        %v354 = vld [vmem:[%s302 + $0x10] sm:$0xf]
        %v355 = vld [vmem:[%s302 + $0x14] sm:$0xf]
        %v356 = vld [vmem:[%s302 + $0x18] sm:$0xf]
        %v357 = vld [vmem:[%s302 + $0x1c] sm:$0xf]
        %v358 = vld [vmem:[%s302 + $0x20] sm:$0xf]
        %v359 = vld [vmem:[%s302 + $0x24] sm:$0xf]
        %v360 = vld [vmem:[%s302 + $0x28] sm:$0xf]
        %v361 = vld [vmem:[%s302 + $0x2c] sm:$0xf]
        %v362 = vld [vmem:[%s302 + $0x30] sm:$0xf]
        %v363 = vld [vmem:[%s302 + $0x34] sm:$0xf]
        %v364 = vld [vmem:[%s302 + $0x38] sm:$0xf]
        %v365 = vld [vmem:[%s302 + $0x3c] sm:$0xf]
        %v366 = vld [vmem:[%s302 + $0x40] sm:$0xf]
        %v367 = vld [vmem:[%s302 + $0x44] sm:$0xf]
        %v368 = vld [vmem:[%s302 + $0x48] sm:$0xf]
        %v369 = vld [vmem:[%s302 + $0x4c] sm:$0xf]
        %v370 = vld [vmem:[%s302 + $0x50] sm:$0xf]
        %v371 = vld [vmem:[%s302 + $0x54] sm:$0xf]
        %v372 = vld [vmem:[%s302 + $0x58] sm:$0xf]
        %v373 = vld [vmem:[%s302 + $0x5c] sm:$0xf]
        %v374 = vld [vmem:[%s302 + $0x60] sm:$0xf]
        %v375 = vld [vmem:[%s302 + $0x64] sm:$0xf]
        %v376 = vld [vmem:[%s302 + $0x68] sm:$0xf]
        %v377 = vld [vmem:[%s302 + $0x6c] sm:$0xf]
        %v378 = vld [vmem:[%s302 + $0x70] sm:$0xf]
        %v379 = vld [vmem:[%s302 + $0x74] sm:$0xf]
        %v380 = vld [vmem:[%s302 + $0x78] sm:$0xf]
        %v381 = vld [vmem:[%s302 + $0x7c] sm:$0xf]
        %v382 = vld [vmem:[%s302 + $0x80] sm:$0xf]
        %v383 = vld [vmem:[%s302 + $0x84] sm:$0xf]
        %v384 = vld [vmem:[%s302 + $0x88] sm:$0xf]
        %v385 = vld [vmem:[%s302 + $0x8c] sm:$0xf]
        %v386 = vld [vmem:[%s302 + $0x90] sm:$0xf]
        %v387 = vld [vmem:[%s302 + $0x94] sm:$0xf]
        %v388 = vld [vmem:[%s302 + $0x98] sm:$0xf]
        %v389 = vld [vmem:[%s302 + $0x9c] sm:$0xf]
        %v390 = vld [vmem:[%s302 + $0xa0] sm:$0xf]
        %v391 = vld [vmem:[%s302 + $0xa4] sm:$0xf]
        %v392 = vld [vmem:[%s302 + $0xa8] sm:$0xf]
        %v393 = vld [vmem:[%s302 + $0xac] sm:$0xf]
        %v394 = vld [vmem:[%s302 + $0xb0] sm:$0xf]
        %v395 = vld [vmem:[%s302 + $0xb4] sm:$0xf]
        %v396 = vld [vmem:[%s302 + $0xb8] sm:$0xf]
        %v397 = vld [vmem:[%s302 + $0xbc] sm:$0xf]
        %v398 = vld [vmem:[%s302 + $0xc0] sm:$0xf]
        %v399 = vld [vmem:[%s302 + $0xc4] sm:$0xf]
        %v400 = vld [vmem:[%s302 + $0xc8] sm:$0xf]
        %v401 = vld [vmem:[%s302 + $0xcc] sm:$0xf]
        %v402 = vld [vmem:[%s302 + $0xd0] sm:$0xf]
        %v403 = vld [vmem:[%s302 + $0xd4] sm:$0xf]
        %v404 = vld [vmem:[%s302 + $0xd8] sm:$0xf]
        %v405 = vld [vmem:[%s302 + $0xdc] sm:$0xf]
        %v406 = vld [vmem:[%s302 + $0xe0] sm:$0xf]
        %v407 = vld [vmem:[%s302 + $0xe4] sm:$0xf]
        %v408 = vld [vmem:[%s302 + $0xe8] sm:$0xf]
        %v409 = vld [vmem:[%s302 + $0xec] sm:$0xf]
        %v410 = vld [vmem:[%s302 + $0xf0] sm:$0xf]
        %v411 = vld [vmem:[%s302 + $0xf4] sm:$0xf]
        %v412 = vld [vmem:[%s302 + $0xf8] sm:$0xf]
        %v413 = vld [vmem:[%s302 + $0xfc] sm:$0xf]
        %v414 = vld [vmem:[%s302 + $0x100] sm:$0xf]
        %v415 = vld [vmem:[%s302 + $0x104] sm:$0xf]
        %v416 = vld [vmem:[%s302 + $0x108] sm:$0xf]
        %v417 = vld [vmem:[%s302 + $0x10c] sm:$0xf]
        %v418 = vld [vmem:[%s302 + $0x110] sm:$0xf]
        %v419 = vld [vmem:[%s302 + $0x114] sm:$0xf]
        %v420 = vld [vmem:[%s302 + $0x118] sm:$0xf]
        %v421 = vld [vmem:[%s302 + $0x11c] sm:$0xf]
        %v422 = vld [vmem:[%s302 + $0x120] sm:$0xf]
        %v423 = vld [vmem:[%s302 + $0x124] sm:$0xf]
        %v424 = vld [vmem:[%s302 + $0x128] sm:$0xf]
        %v425 = vld [vmem:[%s302 + $0x12c] sm:$0xf]
        %v426 = vld [vmem:[%s302 + $0x130] sm:$0xf]
        %v427 = vld [vmem:[%s302 + $0x134] sm:$0xf]
        %v428 = vld [vmem:[%s302 + $0x138] sm:$0xf]
        %v429 = vld [vmem:[%s302 + $0x13c] sm:$0xf]
        %v430 = vld [vmem:[%s302 + $0x140] sm:$0xf]
        %v431 = vld [vmem:[%s302 + $0x144] sm:$0xf]
        %v432 = vld [vmem:[%s302 + $0x148] sm:$0xf]
        %v433 = vld [vmem:[%s302 + $0x14c] sm:$0xf]
        %v434 = vld [vmem:[%s302 + $0x150] sm:$0xf]
        %v435 = vld [vmem:[%s302 + $0x154] sm:$0xf]
        %v436 = vld [vmem:[%s302 + $0x158] sm:$0xf]
        %v437 = vld [vmem:[%s302 + $0x15c] sm:$0xf]
        %v438 = vld [vmem:[%s302 + $0x160] sm:$0xf]
        %v439 = vld [vmem:[%s302 + $0x164] sm:$0xf]
        %v440 = vld [vmem:[%s302 + $0x168] sm:$0xf]
        %v441 = vld [vmem:[%s302 + $0x16c] sm:$0xf]
        %v442 = vld [vmem:[%s302 + $0x170] sm:$0xf]
        %v443 = vld [vmem:[%s302 + $0x174] sm:$0xf]
        %v444 = vld [vmem:[%s302 + $0x178] sm:$0xf]
        %v445 = vld [vmem:[%s302 + $0x17c] sm:$0xf]
        %v446 = vld [vmem:[%s302 + $0x180] sm:$0xf]
        %v447 = vld [vmem:[%s302 + $0x184] sm:$0xf]
        %v448 = vld [vmem:[%s302 + $0x188] sm:$0xf]
        %v449 = vld [vmem:[%s302 + $0x18c] sm:$0xf]
        %v450 = vld [vmem:[%s302 + $0x190] sm:$0xf]
        %v451 = vld [vmem:[%s302 + $0x194] sm:$0xf]
        %v452 = vld [vmem:[%s302 + $0x198] sm:$0xf]
        %v453 = vld [vmem:[%s302 + $0x19c] sm:$0xf]
        %v454 = vld [vmem:[%s302 + $0x1a0] sm:$0xf]
        %v455 = vld [vmem:[%s302 + $0x1a4] sm:$0xf]
        %v456 = vld [vmem:[%s302 + $0x1a8] sm:$0xf]
        %v457 = vld [vmem:[%s302 + $0x1ac] sm:$0xf]
        %v458 = vld [vmem:[%s302 + $0x1b0] sm:$0xf]
        %v459 = vld [vmem:[%s302 + $0x1b4] sm:$0xf]
        %v460 = vld [vmem:[%s302 + $0x1b8] sm:$0xf]
        %v461 = vld [vmem:[%s302 + $0x1bc] sm:$0xf]
        %v462 = vld [vmem:[%s302 + $0x1c0] sm:$0xf]
        %v463 = vld [vmem:[%s302 + $0x1c4] sm:$0xf]
        %v464 = vld [vmem:[%s302 + $0x1c8] sm:$0xf]
        %v465 = vld [vmem:[%s302 + $0x1cc] sm:$0xf]
        %v466 = vld [vmem:[%s302 + $0x1d0] sm:$0xf]
        %v467 = vld [vmem:[%s302 + $0x1d4] sm:$0xf]
        %v468 = vld [vmem:[%s302 + $0x1d8] sm:$0xf]
        %v469 = vld [vmem:[%s302 + $0x1dc] sm:$0xf]
        %v470 = vld [vmem:[%s302 + $0x1e0] sm:$0xf]
        %v471 = vld [vmem:[%s302 + $0x1e4] sm:$0xf]
        %v472 = vld [vmem:[%s302 + $0x1e8] sm:$0xf]
        %v473 = vld [vmem:[%s302 + $0x1ec] sm:$0xf]
        %v474 = vld [vmem:[%s302 + $0x1f0] sm:$0xf]
        %v475 = vld [vmem:[%s302 + $0x1f4] sm:$0xf]
        %v476 = vld [vmem:[%s302 + $0x1f8] sm:$0xf]
        %v477 = vld [vmem:[%s302 + $0x1fc] sm:$0xf]
        %vm478 = vcmask 1043456
        %v479 = vsel %vm478, %v350, 0.0
        %v480 = vrot.slane %v479, 4
        %v481 = vadd.f32 %v479, %v480
        %v482 = vrot.slane %v481, 2
        %v483 = vadd.f32 %v481, %v482
        %v484 = vrot.slane %v483, 1
        %v485 = vadd.f32 %v483, %v484
        %v486 = vsel %vm478, %v351, 0.0
        %v487 = vrot.slane %v486, 4
        %v488 = vadd.f32 %v486, %v487
        %v489 = vrot.slane %v488, 2
        %v490 = vadd.f32 %v488, %v489
        %v491 = vrot.slane %v490, 1
        %v492 = vadd.f32 %v490, %v491
        %v493 = vsel %vm478, %v352, 0.0
        %v494 = vrot.slane %v493, 4
        %v495 = vadd.f32 %v493, %v494
        %v496 = vrot.slane %v495, 2
        %v497 = vadd.f32 %v495, %v496
        %v498 = vrot.slane %v497, 1
        %v499 = vadd.f32 %v497, %v498
        %v500 = vsel %vm478, %v353, 0.0
        %v501 = vrot.slane %v500, 4
        %v502 = vadd.f32 %v500, %v501
        %v503 = vrot.slane %v502, 2
        %v504 = vadd.f32 %v502, %v503
        %v505 = vrot.slane %v504, 1
        %v506 = vadd.f32 %v504, %v505
        %v507 = vsel %vm478, %v354, 0.0
        %v508 = vrot.slane %v507, 4
        %v509 = vadd.f32 %v507, %v508
        %v510 = vrot.slane %v509, 2
        %v511 = vadd.f32 %v509, %v510
        %v512 = vrot.slane %v511, 1
        %v513 = vadd.f32 %v511, %v512
        %v514 = vsel %vm478, %v355, 0.0
        %v515 = vrot.slane %v514, 4
        %v516 = vadd.f32 %v514, %v515
        %v517 = vrot.slane %v516, 2
        %v518 = vadd.f32 %v516, %v517
        %v519 = vrot.slane %v518, 1
        %v520 = vadd.f32 %v518, %v519
        %v521 = vsel %vm478, %v356, 0.0
        %v522 = vrot.slane %v521, 4
        %v523 = vadd.f32 %v521, %v522
        %v524 = vrot.slane %v523, 2
        %v525 = vadd.f32 %v523, %v524
        %v526 = vrot.slane %v525, 1
        %v527 = vadd.f32 %v525, %v526
        %v528 = vsel %vm478, %v357, 0.0
        %v529 = vrot.slane %v528, 4
        %v530 = vadd.f32 %v528, %v529
        %v531 = vrot.slane %v530, 2
        %v532 = vadd.f32 %v530, %v531
        %v533 = vrot.slane %v532, 1
        %v534 = vadd.f32 %v532, %v533
        %v535 = vsel %vm478, %v358, 0.0
        %v536 = vrot.slane %v535, 4
        %v537 = vadd.f32 %v535, %v536
        %v538 = vrot.slane %v537, 2
        %v539 = vadd.f32 %v537, %v538
        %v540 = vrot.slane %v539, 1
        %v541 = vadd.f32 %v539, %v540
        %v542 = vsel %vm478, %v359, 0.0
        %v543 = vrot.slane %v542, 4
        %v544 = vadd.f32 %v542, %v543
        %v545 = vrot.slane %v544, 2
        %v546 = vadd.f32 %v544, %v545
        %v547 = vrot.slane %v546, 1
        %v548 = vadd.f32 %v546, %v547
        %v549 = vsel %vm478, %v360, 0.0
        %v550 = vrot.slane %v549, 4
        %v551 = vadd.f32 %v549, %v550
        %v552 = vrot.slane %v551, 2
        %v553 = vadd.f32 %v551, %v552
        %v554 = vrot.slane %v553, 1
        %v555 = vadd.f32 %v553, %v554
        %v556 = vsel %vm478, %v361, 0.0
        %v557 = vrot.slane %v556, 4
        %v558 = vadd.f32 %v556, %v557
        %v559 = vrot.slane %v558, 2
        %v560 = vadd.f32 %v558, %v559
        %v561 = vrot.slane %v560, 1
        %v562 = vadd.f32 %v560, %v561
        %v563 = vsel %vm478, %v362, 0.0
        %v564 = vrot.slane %v563, 4
        %v565 = vadd.f32 %v563, %v564
        %v566 = vrot.slane %v565, 2
        %v567 = vadd.f32 %v565, %v566
        %v568 = vrot.slane %v567, 1
        %v569 = vadd.f32 %v567, %v568
        %v570 = vsel %vm478, %v363, 0.0
        %v571 = vrot.slane %v570, 4
        %v572 = vadd.f32 %v570, %v571
        %v573 = vrot.slane %v572, 2
        %v574 = vadd.f32 %v572, %v573
        %v575 = vrot.slane %v574, 1
        %v576 = vadd.f32 %v574, %v575
        %v577 = vsel %vm478, %v364, 0.0
        %v578 = vrot.slane %v577, 4
        %v579 = vadd.f32 %v577, %v578
        %v580 = vrot.slane %v579, 2
        %v581 = vadd.f32 %v579, %v580
        %v582 = vrot.slane %v581, 1
        %v583 = vadd.f32 %v581, %v582
        %v584 = vsel %vm478, %v365, 0.0
        %v585 = vrot.slane %v584, 4
        %v586 = vadd.f32 %v584, %v585
        %v587 = vrot.slane %v586, 2
        %v588 = vadd.f32 %v586, %v587
        %v589 = vrot.slane %v588, 1
        %v590 = vadd.f32 %v588, %v589
        %v591 = vsel %vm478, %v366, 0.0
        %v592 = vrot.slane %v591, 4
        %v593 = vadd.f32 %v591, %v592
        %v594 = vrot.slane %v593, 2
        %v595 = vadd.f32 %v593, %v594
        %v596 = vrot.slane %v595, 1
        %v597 = vadd.f32 %v595, %v596
        %v598 = vsel %vm478, %v367, 0.0
        %v599 = vrot.slane %v598, 4
        %v600 = vadd.f32 %v598, %v599
        %v601 = vrot.slane %v600, 2
        %v602 = vadd.f32 %v600, %v601
        %v603 = vrot.slane %v602, 1
        %v604 = vadd.f32 %v602, %v603
        %v605 = vsel %vm478, %v368, 0.0
        %v606 = vrot.slane %v605, 4
        %v607 = vadd.f32 %v605, %v606
        %v608 = vrot.slane %v607, 2
        %v609 = vadd.f32 %v607, %v608
        %v610 = vrot.slane %v609, 1
        %v611 = vadd.f32 %v609, %v610
        %v612 = vsel %vm478, %v369, 0.0
        %v613 = vrot.slane %v612, 4
        %v614 = vadd.f32 %v612, %v613
        %v615 = vrot.slane %v614, 2
        %v616 = vadd.f32 %v614, %v615
        %v617 = vrot.slane %v616, 1
        %v618 = vadd.f32 %v616, %v617
        %v619 = vsel %vm478, %v370, 0.0
        %v620 = vrot.slane %v619, 4
        %v621 = vadd.f32 %v619, %v620
        %v622 = vrot.slane %v621, 2
        %v623 = vadd.f32 %v621, %v622
        %v624 = vrot.slane %v623, 1
        %v625 = vadd.f32 %v623, %v624
        %v626 = vsel %vm478, %v371, 0.0
        %v627 = vrot.slane %v626, 4
        %v628 = vadd.f32 %v626, %v627
        %v629 = vrot.slane %v628, 2
        %v630 = vadd.f32 %v628, %v629
        %v631 = vrot.slane %v630, 1
        %v632 = vadd.f32 %v630, %v631
        %v633 = vsel %vm478, %v372, 0.0
        %v634 = vrot.slane %v633, 4
        %v635 = vadd.f32 %v633, %v634
        %v636 = vrot.slane %v635, 2
        %v637 = vadd.f32 %v635, %v636
        %v638 = vrot.slane %v637, 1
        %v639 = vadd.f32 %v637, %v638
        %v640 = vsel %vm478, %v373, 0.0
        %v641 = vrot.slane %v640, 4
        %v642 = vadd.f32 %v640, %v641
        %v643 = vrot.slane %v642, 2
        %v644 = vadd.f32 %v642, %v643
        %v645 = vrot.slane %v644, 1
        %v646 = vadd.f32 %v644, %v645
        %v647 = vsel %vm478, %v374, 0.0
        %v648 = vrot.slane %v647, 4
        %v649 = vadd.f32 %v647, %v648
        %v650 = vrot.slane %v649, 2
        %v651 = vadd.f32 %v649, %v650
        %v652 = vrot.slane %v651, 1
        %v653 = vadd.f32 %v651, %v652
        %v654 = vsel %vm478, %v375, 0.0
        %v655 = vrot.slane %v654, 4
        %v656 = vadd.f32 %v654, %v655
        %v657 = vrot.slane %v656, 2
        %v658 = vadd.f32 %v656, %v657
        %v659 = vrot.slane %v658, 1
        %v660 = vadd.f32 %v658, %v659
        %v661 = vsel %vm478, %v376, 0.0
        %v662 = vrot.slane %v661, 4
        %v663 = vadd.f32 %v661, %v662
        %v664 = vrot.slane %v663, 2
        %v665 = vadd.f32 %v663, %v664
        %v666 = vrot.slane %v665, 1
        %v667 = vadd.f32 %v665, %v666
        %v668 = vsel %vm478, %v377, 0.0
        %v669 = vrot.slane %v668, 4
        %v670 = vadd.f32 %v668, %v669
        %v671 = vrot.slane %v670, 2
        %v672 = vadd.f32 %v670, %v671
        %v673 = vrot.slane %v672, 1
        %v674 = vadd.f32 %v672, %v673
        %v675 = vsel %vm478, %v378, 0.0
        %v676 = vrot.slane %v675, 4
        %v677 = vadd.f32 %v675, %v676
        %v678 = vrot.slane %v677, 2
        %v679 = vadd.f32 %v677, %v678
        %v680 = vrot.slane %v679, 1
        %v681 = vadd.f32 %v679, %v680
        %v682 = vsel %vm478, %v379, 0.0
        %v683 = vrot.slane %v682, 4
        %v684 = vadd.f32 %v682, %v683
        %v685 = vrot.slane %v684, 2
        %v686 = vadd.f32 %v684, %v685
        %v687 = vrot.slane %v686, 1
        %v688 = vadd.f32 %v686, %v687
        %v689 = vsel %vm478, %v380, 0.0
        %v690 = vrot.slane %v689, 4
        %v691 = vadd.f32 %v689, %v690
        %v692 = vrot.slane %v691, 2
        %v693 = vadd.f32 %v691, %v692
        %v694 = vrot.slane %v693, 1
        %v695 = vadd.f32 %v693, %v694
        %v696 = vsel %vm478, %v381, 0.0
        %v697 = vrot.slane %v696, 4
        %v698 = vadd.f32 %v696, %v697
        %v699 = vrot.slane %v698, 2
        %v700 = vadd.f32 %v698, %v699
        %v701 = vrot.slane %v700, 1
        %v702 = vadd.f32 %v700, %v701
        %v703 = vsel %vm478, %v382, 0.0
        %v704 = vrot.slane %v703, 4
        %v705 = vadd.f32 %v703, %v704
        %v706 = vrot.slane %v705, 2
        %v707 = vadd.f32 %v705, %v706
        %v708 = vrot.slane %v707, 1
        %v709 = vadd.f32 %v707, %v708
        %v710 = vsel %vm478, %v383, 0.0
        %v711 = vrot.slane %v710, 4
        %v712 = vadd.f32 %v710, %v711
        %v713 = vrot.slane %v712, 2
        %v714 = vadd.f32 %v712, %v713
        %v715 = vrot.slane %v714, 1
        %v716 = vadd.f32 %v714, %v715
        %v717 = vsel %vm478, %v384, 0.0
        %v718 = vrot.slane %v717, 4
        %v719 = vadd.f32 %v717, %v718
        %v720 = vrot.slane %v719, 2
        %v721 = vadd.f32 %v719, %v720
        %v722 = vrot.slane %v721, 1
        %v723 = vadd.f32 %v721, %v722
        %v724 = vsel %vm478, %v385, 0.0
        %v725 = vrot.slane %v724, 4
        %v726 = vadd.f32 %v724, %v725
        %v727 = vrot.slane %v726, 2
        %v728 = vadd.f32 %v726, %v727
        %v729 = vrot.slane %v728, 1
        %v730 = vadd.f32 %v728, %v729
        %v731 = vsel %vm478, %v386, 0.0
        %v732 = vrot.slane %v731, 4
        %v733 = vadd.f32 %v731, %v732
        %v734 = vrot.slane %v733, 2
        %v735 = vadd.f32 %v733, %v734
        %v736 = vrot.slane %v735, 1
        %v737 = vadd.f32 %v735, %v736
        %v738 = vsel %vm478, %v387, 0.0
        %v739 = vrot.slane %v738, 4
        %v740 = vadd.f32 %v738, %v739
        %v741 = vrot.slane %v740, 2
        %v742 = vadd.f32 %v740, %v741
        %v743 = vrot.slane %v742, 1
        %v744 = vadd.f32 %v742, %v743
        %v745 = vsel %vm478, %v388, 0.0
        %v746 = vrot.slane %v745, 4
        %v747 = vadd.f32 %v745, %v746
        %v748 = vrot.slane %v747, 2
        %v749 = vadd.f32 %v747, %v748
        %v750 = vrot.slane %v749, 1
        %v751 = vadd.f32 %v749, %v750
        %v752 = vsel %vm478, %v389, 0.0
        %v753 = vrot.slane %v752, 4
        %v754 = vadd.f32 %v752, %v753
        %v755 = vrot.slane %v754, 2
        %v756 = vadd.f32 %v754, %v755
        %v757 = vrot.slane %v756, 1
        %v758 = vadd.f32 %v756, %v757
        %v759 = vsel %vm478, %v390, 0.0
        %v760 = vrot.slane %v759, 4
        %v761 = vadd.f32 %v759, %v760
        %v762 = vrot.slane %v761, 2
        %v763 = vadd.f32 %v761, %v762
        %v764 = vrot.slane %v763, 1
        %v765 = vadd.f32 %v763, %v764
        %v766 = vsel %vm478, %v391, 0.0
        %v767 = vrot.slane %v766, 4
        %v768 = vadd.f32 %v766, %v767
        %v769 = vrot.slane %v768, 2
        %v770 = vadd.f32 %v768, %v769
        %v771 = vrot.slane %v770, 1
        %v772 = vadd.f32 %v770, %v771
        %v773 = vsel %vm478, %v392, 0.0
        %v774 = vrot.slane %v773, 4
        %v775 = vadd.f32 %v773, %v774
        %v776 = vrot.slane %v775, 2
        %v777 = vadd.f32 %v775, %v776
        %v778 = vrot.slane %v777, 1
        %v779 = vadd.f32 %v777, %v778
        %v780 = vsel %vm478, %v393, 0.0
        %v781 = vrot.slane %v780, 4
        %v782 = vadd.f32 %v780, %v781
        %v783 = vrot.slane %v782, 2
        %v784 = vadd.f32 %v782, %v783
        %v785 = vrot.slane %v784, 1
        %v786 = vadd.f32 %v784, %v785
        %v787 = vsel %vm478, %v394, 0.0
        %v788 = vrot.slane %v787, 4
        %v789 = vadd.f32 %v787, %v788
        %v790 = vrot.slane %v789, 2
        %v791 = vadd.f32 %v789, %v790
        %v792 = vrot.slane %v791, 1
        %v793 = vadd.f32 %v791, %v792
        %v794 = vsel %vm478, %v395, 0.0
        %v795 = vrot.slane %v794, 4
        %v796 = vadd.f32 %v794, %v795
        %v797 = vrot.slane %v796, 2
        %v798 = vadd.f32 %v796, %v797
        %v799 = vrot.slane %v798, 1
        %v800 = vadd.f32 %v798, %v799
        %v801 = vsel %vm478, %v396, 0.0
        %v802 = vrot.slane %v801, 4
        %v803 = vadd.f32 %v801, %v802
        %v804 = vrot.slane %v803, 2
        %v805 = vadd.f32 %v803, %v804
        %v806 = vrot.slane %v805, 1
        %v807 = vadd.f32 %v805, %v806
        %v808 = vsel %vm478, %v397, 0.0
        %v809 = vrot.slane %v808, 4
        %v810 = vadd.f32 %v808, %v809
        %v811 = vrot.slane %v810, 2
        %v812 = vadd.f32 %v810, %v811
        %v813 = vrot.slane %v812, 1
        %v814 = vadd.f32 %v812, %v813
        %v815 = vsel %vm478, %v398, 0.0
        %v816 = vrot.slane %v815, 4
        %v817 = vadd.f32 %v815, %v816
        %v818 = vrot.slane %v817, 2
        %v819 = vadd.f32 %v817, %v818
        %v820 = vrot.slane %v819, 1
        %v821 = vadd.f32 %v819, %v820
        %v822 = vsel %vm478, %v399, 0.0
        %v823 = vrot.slane %v822, 4
        %v824 = vadd.f32 %v822, %v823
        %v825 = vrot.slane %v824, 2
        %v826 = vadd.f32 %v824, %v825
        %v827 = vrot.slane %v826, 1
        %v828 = vadd.f32 %v826, %v827
        %v829 = vsel %vm478, %v400, 0.0
        %v830 = vrot.slane %v829, 4
        %v831 = vadd.f32 %v829, %v830
        %v832 = vrot.slane %v831, 2
        %v833 = vadd.f32 %v831, %v832
        %v834 = vrot.slane %v833, 1
        %v835 = vadd.f32 %v833, %v834
        %v836 = vsel %vm478, %v401, 0.0
        %v837 = vrot.slane %v836, 4
        %v838 = vadd.f32 %v836, %v837
        %v839 = vrot.slane %v838, 2
        %v840 = vadd.f32 %v838, %v839
        %v841 = vrot.slane %v840, 1
        %v842 = vadd.f32 %v840, %v841
        %v843 = vsel %vm478, %v402, 0.0
        %v844 = vrot.slane %v843, 4
        %v845 = vadd.f32 %v843, %v844
        %v846 = vrot.slane %v845, 2
        %v847 = vadd.f32 %v845, %v846
        %v848 = vrot.slane %v847, 1
        %v849 = vadd.f32 %v847, %v848
        %v850 = vsel %vm478, %v403, 0.0
        %v851 = vrot.slane %v850, 4
        %v852 = vadd.f32 %v850, %v851
        %v853 = vrot.slane %v852, 2
        %v854 = vadd.f32 %v852, %v853
        %v855 = vrot.slane %v854, 1
        %v856 = vadd.f32 %v854, %v855
        %v857 = vsel %vm478, %v404, 0.0
        %v858 = vrot.slane %v857, 4
        %v859 = vadd.f32 %v857, %v858
        %v860 = vrot.slane %v859, 2
        %v861 = vadd.f32 %v859, %v860
        %v862 = vrot.slane %v861, 1
        %v863 = vadd.f32 %v861, %v862
        %v864 = vsel %vm478, %v405, 0.0
        %v865 = vrot.slane %v864, 4
        %v866 = vadd.f32 %v864, %v865
        %v867 = vrot.slane %v866, 2
        %v868 = vadd.f32 %v866, %v867
        %v869 = vrot.slane %v868, 1
        %v870 = vadd.f32 %v868, %v869
        %v871 = vsel %vm478, %v406, 0.0
        %v872 = vrot.slane %v871, 4
        %v873 = vadd.f32 %v871, %v872
        %v874 = vrot.slane %v873, 2
        %v875 = vadd.f32 %v873, %v874
        %v876 = vrot.slane %v875, 1
        %v877 = vadd.f32 %v875, %v876
        %v878 = vsel %vm478, %v407, 0.0
        %v879 = vrot.slane %v878, 4
        %v880 = vadd.f32 %v878, %v879
        %v881 = vrot.slane %v880, 2
        %v882 = vadd.f32 %v880, %v881
        %v883 = vrot.slane %v882, 1
        %v884 = vadd.f32 %v882, %v883
        %v885 = vsel %vm478, %v408, 0.0
        %v886 = vrot.slane %v885, 4
        %v887 = vadd.f32 %v885, %v886
        %v888 = vrot.slane %v887, 2
        %v889 = vadd.f32 %v887, %v888
        %v890 = vrot.slane %v889, 1
        %v891 = vadd.f32 %v889, %v890
        %v892 = vsel %vm478, %v409, 0.0
        %v893 = vrot.slane %v892, 4
        %v894 = vadd.f32 %v892, %v893
        %v895 = vrot.slane %v894, 2
        %v896 = vadd.f32 %v894, %v895
        %v897 = vrot.slane %v896, 1
        %v898 = vadd.f32 %v896, %v897
        %v899 = vsel %vm478, %v410, 0.0
        %v900 = vrot.slane %v899, 4
        %v901 = vadd.f32 %v899, %v900
        %v902 = vrot.slane %v901, 2
        %v903 = vadd.f32 %v901, %v902
        %v904 = vrot.slane %v903, 1
        %v905 = vadd.f32 %v903, %v904
        %v906 = vsel %vm478, %v411, 0.0
        %v907 = vrot.slane %v906, 4
        %v908 = vadd.f32 %v906, %v907
        %v909 = vrot.slane %v908, 2
        %v910 = vadd.f32 %v908, %v909
        %v911 = vrot.slane %v910, 1
        %v912 = vadd.f32 %v910, %v911
        %v913 = vsel %vm478, %v412, 0.0
        %v914 = vrot.slane %v913, 4
        %v915 = vadd.f32 %v913, %v914
        %v916 = vrot.slane %v915, 2
        %v917 = vadd.f32 %v915, %v916
        %v918 = vrot.slane %v917, 1
        %v919 = vadd.f32 %v917, %v918
        %v920 = vsel %vm478, %v413, 0.0
        %v921 = vrot.slane %v920, 4
        %v922 = vadd.f32 %v920, %v921
        %v923 = vrot.slane %v922, 2
        %v924 = vadd.f32 %v922, %v923
        %v925 = vrot.slane %v924, 1
        %v926 = vadd.f32 %v924, %v925
        %v927 = vsel %vm478, %v414, 0.0
        %v928 = vrot.slane %v927, 4
        %v929 = vadd.f32 %v927, %v928
        %v930 = vrot.slane %v929, 2
        %v931 = vadd.f32 %v929, %v930
        %v932 = vrot.slane %v931, 1
        %v933 = vadd.f32 %v931, %v932
        %v934 = vsel %vm478, %v415, 0.0
        %v935 = vrot.slane %v934, 4
        %v936 = vadd.f32 %v934, %v935
        %v937 = vrot.slane %v936, 2
        %v938 = vadd.f32 %v936, %v937
        %v939 = vrot.slane %v938, 1
        %v940 = vadd.f32 %v938, %v939
        %v941 = vsel %vm478, %v416, 0.0
        %v942 = vrot.slane %v941, 4
        %v943 = vadd.f32 %v941, %v942
        %v944 = vrot.slane %v943, 2
        %v945 = vadd.f32 %v943, %v944
        %v946 = vrot.slane %v945, 1
        %v947 = vadd.f32 %v945, %v946
        %v948 = vsel %vm478, %v417, 0.0
        %v949 = vrot.slane %v948, 4
        %v950 = vadd.f32 %v948, %v949
        %v951 = vrot.slane %v950, 2
        %v952 = vadd.f32 %v950, %v951
        %v953 = vrot.slane %v952, 1
        %v954 = vadd.f32 %v952, %v953
        %v955 = vsel %vm478, %v418, 0.0
        %v956 = vrot.slane %v955, 4
        %v957 = vadd.f32 %v955, %v956
        %v958 = vrot.slane %v957, 2
        %v959 = vadd.f32 %v957, %v958
        %v960 = vrot.slane %v959, 1
        %v961 = vadd.f32 %v959, %v960
        %v962 = vsel %vm478, %v419, 0.0
        %v963 = vrot.slane %v962, 4
        %v964 = vadd.f32 %v962, %v963
        %v965 = vrot.slane %v964, 2
        %v966 = vadd.f32 %v964, %v965
        %v967 = vrot.slane %v966, 1
        %v968 = vadd.f32 %v966, %v967
        %v969 = vsel %vm478, %v420, 0.0
        %v970 = vrot.slane %v969, 4
        %v971 = vadd.f32 %v969, %v970
        %v972 = vrot.slane %v971, 2
        %v973 = vadd.f32 %v971, %v972
        %v974 = vrot.slane %v973, 1
        %v975 = vadd.f32 %v973, %v974
        %v976 = vsel %vm478, %v421, 0.0
        %v977 = vrot.slane %v976, 4
        %v978 = vadd.f32 %v976, %v977
        %v979 = vrot.slane %v978, 2
        %v980 = vadd.f32 %v978, %v979
        %v981 = vrot.slane %v980, 1
        %v982 = vadd.f32 %v980, %v981
        %v983 = vsel %vm478, %v422, 0.0
        %v984 = vrot.slane %v983, 4
        %v985 = vadd.f32 %v983, %v984
        %v986 = vrot.slane %v985, 2
        %v987 = vadd.f32 %v985, %v986
        %v988 = vrot.slane %v987, 1
        %v989 = vadd.f32 %v987, %v988
        %v990 = vsel %vm478, %v423, 0.0
        %v991 = vrot.slane %v990, 4
        %v992 = vadd.f32 %v990, %v991
        %v993 = vrot.slane %v992, 2
        %v994 = vadd.f32 %v992, %v993
        %v995 = vrot.slane %v994, 1
        %v996 = vadd.f32 %v994, %v995
        %v997 = vsel %vm478, %v424, 0.0
        %v998 = vrot.slane %v997, 4
        %v999 = vadd.f32 %v997, %v998
        %v1000 = vrot.slane %v999, 2
        %v1001 = vadd.f32 %v999, %v1000
        %v1002 = vrot.slane %v1001, 1
        %v1003 = vadd.f32 %v1001, %v1002
        %v1004 = vsel %vm478, %v425, 0.0
        %v1005 = vrot.slane %v1004, 4
        %v1006 = vadd.f32 %v1004, %v1005
        %v1007 = vrot.slane %v1006, 2
        %v1008 = vadd.f32 %v1006, %v1007
        %v1009 = vrot.slane %v1008, 1
        %v1010 = vadd.f32 %v1008, %v1009
        %v1011 = vsel %vm478, %v426, 0.0
        %v1012 = vrot.slane %v1011, 4
        %v1013 = vadd.f32 %v1011, %v1012
        %v1014 = vrot.slane %v1013, 2
        %v1015 = vadd.f32 %v1013, %v1014
        %v1016 = vrot.slane %v1015, 1
        %v1017 = vadd.f32 %v1015, %v1016
        %v1018 = vsel %vm478, %v427, 0.0
        %v1019 = vrot.slane %v1018, 4
        %v1020 = vadd.f32 %v1018, %v1019
        %v1021 = vrot.slane %v1020, 2
        %v1022 = vadd.f32 %v1020, %v1021
        %v1023 = vrot.slane %v1022, 1
        %v1024 = vadd.f32 %v1022, %v1023
        %v1025 = vsel %vm478, %v428, 0.0
        %v1026 = vrot.slane %v1025, 4
        %v1027 = vadd.f32 %v1025, %v1026
        %v1028 = vrot.slane %v1027, 2
        %v1029 = vadd.f32 %v1027, %v1028
        %v1030 = vrot.slane %v1029, 1
        %v1031 = vadd.f32 %v1029, %v1030
        %v1032 = vsel %vm478, %v429, 0.0
        %v1033 = vrot.slane %v1032, 4
        %v1034 = vadd.f32 %v1032, %v1033
        %v1035 = vrot.slane %v1034, 2
        %v1036 = vadd.f32 %v1034, %v1035
        %v1037 = vrot.slane %v1036, 1
        %v1038 = vadd.f32 %v1036, %v1037
        %v1039 = vsel %vm478, %v430, 0.0
        %v1040 = vrot.slane %v1039, 4
        %v1041 = vadd.f32 %v1039, %v1040
        %v1042 = vrot.slane %v1041, 2
        %v1043 = vadd.f32 %v1041, %v1042
        %v1044 = vrot.slane %v1043, 1
        %v1045 = vadd.f32 %v1043, %v1044
        %v1046 = vsel %vm478, %v431, 0.0
        %v1047 = vrot.slane %v1046, 4
        %v1048 = vadd.f32 %v1046, %v1047
        %v1049 = vrot.slane %v1048, 2
        %v1050 = vadd.f32 %v1048, %v1049
        %v1051 = vrot.slane %v1050, 1
        %v1052 = vadd.f32 %v1050, %v1051
        %v1053 = vsel %vm478, %v432, 0.0
        %v1054 = vrot.slane %v1053, 4
        %v1055 = vadd.f32 %v1053, %v1054
        %v1056 = vrot.slane %v1055, 2
        %v1057 = vadd.f32 %v1055, %v1056
        %v1058 = vrot.slane %v1057, 1
        %v1059 = vadd.f32 %v1057, %v1058
        %v1060 = vsel %vm478, %v433, 0.0
        %v1061 = vrot.slane %v1060, 4
        %v1062 = vadd.f32 %v1060, %v1061
        %v1063 = vrot.slane %v1062, 2
        %v1064 = vadd.f32 %v1062, %v1063
        %v1065 = vrot.slane %v1064, 1
        %v1066 = vadd.f32 %v1064, %v1065
        %v1067 = vsel %vm478, %v434, 0.0
        %v1068 = vrot.slane %v1067, 4
        %v1069 = vadd.f32 %v1067, %v1068
        %v1070 = vrot.slane %v1069, 2
        %v1071 = vadd.f32 %v1069, %v1070
        %v1072 = vrot.slane %v1071, 1
        %v1073 = vadd.f32 %v1071, %v1072
        %v1074 = vsel %vm478, %v435, 0.0
        %v1075 = vrot.slane %v1074, 4
        %v1076 = vadd.f32 %v1074, %v1075
        %v1077 = vrot.slane %v1076, 2
        %v1078 = vadd.f32 %v1076, %v1077
        %v1079 = vrot.slane %v1078, 1
        %v1080 = vadd.f32 %v1078, %v1079
        %v1081 = vsel %vm478, %v436, 0.0
        %v1082 = vrot.slane %v1081, 4
        %v1083 = vadd.f32 %v1081, %v1082
        %v1084 = vrot.slane %v1083, 2
        %v1085 = vadd.f32 %v1083, %v1084
        %v1086 = vrot.slane %v1085, 1
        %v1087 = vadd.f32 %v1085, %v1086
        %v1088 = vsel %vm478, %v437, 0.0
        %v1089 = vrot.slane %v1088, 4
        %v1090 = vadd.f32 %v1088, %v1089
        %v1091 = vrot.slane %v1090, 2
        %v1092 = vadd.f32 %v1090, %v1091
        %v1093 = vrot.slane %v1092, 1
        %v1094 = vadd.f32 %v1092, %v1093
        %v1095 = vsel %vm478, %v438, 0.0
        %v1096 = vrot.slane %v1095, 4
        %v1097 = vadd.f32 %v1095, %v1096
        %v1098 = vrot.slane %v1097, 2
        %v1099 = vadd.f32 %v1097, %v1098
        %v1100 = vrot.slane %v1099, 1
        %v1101 = vadd.f32 %v1099, %v1100
        %v1102 = vsel %vm478, %v439, 0.0
        %v1103 = vrot.slane %v1102, 4
        %v1104 = vadd.f32 %v1102, %v1103
        %v1105 = vrot.slane %v1104, 2
        %v1106 = vadd.f32 %v1104, %v1105
        %v1107 = vrot.slane %v1106, 1
        %v1108 = vadd.f32 %v1106, %v1107
        %v1109 = vsel %vm478, %v440, 0.0
        %v1110 = vrot.slane %v1109, 4
        %v1111 = vadd.f32 %v1109, %v1110
        %v1112 = vrot.slane %v1111, 2
        %v1113 = vadd.f32 %v1111, %v1112
        %v1114 = vrot.slane %v1113, 1
        %v1115 = vadd.f32 %v1113, %v1114
        %v1116 = vsel %vm478, %v441, 0.0
        %v1117 = vrot.slane %v1116, 4
        %v1118 = vadd.f32 %v1116, %v1117
        %v1119 = vrot.slane %v1118, 2
        %v1120 = vadd.f32 %v1118, %v1119
        %v1121 = vrot.slane %v1120, 1
        %v1122 = vadd.f32 %v1120, %v1121
        %v1123 = vsel %vm478, %v442, 0.0
        %v1124 = vrot.slane %v1123, 4
        %v1125 = vadd.f32 %v1123, %v1124
        %v1126 = vrot.slane %v1125, 2
        %v1127 = vadd.f32 %v1125, %v1126
        %v1128 = vrot.slane %v1127, 1
        %v1129 = vadd.f32 %v1127, %v1128
        %v1130 = vsel %vm478, %v443, 0.0
        %v1131 = vrot.slane %v1130, 4
        %v1132 = vadd.f32 %v1130, %v1131
        %v1133 = vrot.slane %v1132, 2
        %v1134 = vadd.f32 %v1132, %v1133
        %v1135 = vrot.slane %v1134, 1
        %v1136 = vadd.f32 %v1134, %v1135
        %v1137 = vsel %vm478, %v444, 0.0
        %v1138 = vrot.slane %v1137, 4
        %v1139 = vadd.f32 %v1137, %v1138
        %v1140 = vrot.slane %v1139, 2
        %v1141 = vadd.f32 %v1139, %v1140
        %v1142 = vrot.slane %v1141, 1
        %v1143 = vadd.f32 %v1141, %v1142
        %v1144 = vsel %vm478, %v445, 0.0
        %v1145 = vrot.slane %v1144, 4
        %v1146 = vadd.f32 %v1144, %v1145
        %v1147 = vrot.slane %v1146, 2
        %v1148 = vadd.f32 %v1146, %v1147
        %v1149 = vrot.slane %v1148, 1
        %v1150 = vadd.f32 %v1148, %v1149
        %v1151 = vsel %vm478, %v446, 0.0
        %v1152 = vrot.slane %v1151, 4
        %v1153 = vadd.f32 %v1151, %v1152
        %v1154 = vrot.slane %v1153, 2
        %v1155 = vadd.f32 %v1153, %v1154
        %v1156 = vrot.slane %v1155, 1
        %v1157 = vadd.f32 %v1155, %v1156
        %v1158 = vsel %vm478, %v447, 0.0
        %v1159 = vrot.slane %v1158, 4
        %v1160 = vadd.f32 %v1158, %v1159
        %v1161 = vrot.slane %v1160, 2
        %v1162 = vadd.f32 %v1160, %v1161
        %v1163 = vrot.slane %v1162, 1
        %v1164 = vadd.f32 %v1162, %v1163
        %v1165 = vsel %vm478, %v448, 0.0
        %v1166 = vrot.slane %v1165, 4
        %v1167 = vadd.f32 %v1165, %v1166
        %v1168 = vrot.slane %v1167, 2
        %v1169 = vadd.f32 %v1167, %v1168
        %v1170 = vrot.slane %v1169, 1
        %v1171 = vadd.f32 %v1169, %v1170
        %v1172 = vsel %vm478, %v449, 0.0
        %v1173 = vrot.slane %v1172, 4
        %v1174 = vadd.f32 %v1172, %v1173
        %v1175 = vrot.slane %v1174, 2
        %v1176 = vadd.f32 %v1174, %v1175
        %v1177 = vrot.slane %v1176, 1
        %v1178 = vadd.f32 %v1176, %v1177
        %v1179 = vsel %vm478, %v450, 0.0
        %v1180 = vrot.slane %v1179, 4
        %v1181 = vadd.f32 %v1179, %v1180
        %v1182 = vrot.slane %v1181, 2
        %v1183 = vadd.f32 %v1181, %v1182
        %v1184 = vrot.slane %v1183, 1
        %v1185 = vadd.f32 %v1183, %v1184
        %v1186 = vsel %vm478, %v451, 0.0
        %v1187 = vrot.slane %v1186, 4
        %v1188 = vadd.f32 %v1186, %v1187
        %v1189 = vrot.slane %v1188, 2
        %v1190 = vadd.f32 %v1188, %v1189
        %v1191 = vrot.slane %v1190, 1
        %v1192 = vadd.f32 %v1190, %v1191
        %v1193 = vsel %vm478, %v452, 0.0
        %v1194 = vrot.slane %v1193, 4
        %v1195 = vadd.f32 %v1193, %v1194
        %v1196 = vrot.slane %v1195, 2
        %v1197 = vadd.f32 %v1195, %v1196
        %v1198 = vrot.slane %v1197, 1
        %v1199 = vadd.f32 %v1197, %v1198
        %v1200 = vsel %vm478, %v453, 0.0
        %v1201 = vrot.slane %v1200, 4
        %v1202 = vadd.f32 %v1200, %v1201
        %v1203 = vrot.slane %v1202, 2
        %v1204 = vadd.f32 %v1202, %v1203
        %v1205 = vrot.slane %v1204, 1
        %v1206 = vadd.f32 %v1204, %v1205
        %v1207 = vsel %vm478, %v454, 0.0
        %v1208 = vrot.slane %v1207, 4
        %v1209 = vadd.f32 %v1207, %v1208
        %v1210 = vrot.slane %v1209, 2
        %v1211 = vadd.f32 %v1209, %v1210
        %v1212 = vrot.slane %v1211, 1
        %v1213 = vadd.f32 %v1211, %v1212
        %v1214 = vsel %vm478, %v455, 0.0
        %v1215 = vrot.slane %v1214, 4
        %v1216 = vadd.f32 %v1214, %v1215
        %v1217 = vrot.slane %v1216, 2
        %v1218 = vadd.f32 %v1216, %v1217
        %v1219 = vrot.slane %v1218, 1
        %v1220 = vadd.f32 %v1218, %v1219
        %v1221 = vsel %vm478, %v456, 0.0
        %v1222 = vrot.slane %v1221, 4
        %v1223 = vadd.f32 %v1221, %v1222
        %v1224 = vrot.slane %v1223, 2
        %v1225 = vadd.f32 %v1223, %v1224
        %v1226 = vrot.slane %v1225, 1
        %v1227 = vadd.f32 %v1225, %v1226
        %v1228 = vsel %vm478, %v457, 0.0
        %v1229 = vrot.slane %v1228, 4
        %v1230 = vadd.f32 %v1228, %v1229
        %v1231 = vrot.slane %v1230, 2
        %v1232 = vadd.f32 %v1230, %v1231
        %v1233 = vrot.slane %v1232, 1
        %v1234 = vadd.f32 %v1232, %v1233
        %v1235 = vsel %vm478, %v458, 0.0
        %v1236 = vrot.slane %v1235, 4
        %v1237 = vadd.f32 %v1235, %v1236
        %v1238 = vrot.slane %v1237, 2
        %v1239 = vadd.f32 %v1237, %v1238
        %v1240 = vrot.slane %v1239, 1
        %v1241 = vadd.f32 %v1239, %v1240
        %v1242 = vsel %vm478, %v459, 0.0
        %v1243 = vrot.slane %v1242, 4
        %v1244 = vadd.f32 %v1242, %v1243
        %v1245 = vrot.slane %v1244, 2
        %v1246 = vadd.f32 %v1244, %v1245
        %v1247 = vrot.slane %v1246, 1
        %v1248 = vadd.f32 %v1246, %v1247
        %v1249 = vsel %vm478, %v460, 0.0
        %v1250 = vrot.slane %v1249, 4
        %v1251 = vadd.f32 %v1249, %v1250
        %v1252 = vrot.slane %v1251, 2
        %v1253 = vadd.f32 %v1251, %v1252
        %v1254 = vrot.slane %v1253, 1
        %v1255 = vadd.f32 %v1253, %v1254
        %v1256 = vsel %vm478, %v461, 0.0
        %v1257 = vrot.slane %v1256, 4
        %v1258 = vadd.f32 %v1256, %v1257
        %v1259 = vrot.slane %v1258, 2
        %v1260 = vadd.f32 %v1258, %v1259
        %v1261 = vrot.slane %v1260, 1
        %v1262 = vadd.f32 %v1260, %v1261
        %v1263 = vsel %vm478, %v462, 0.0
        %v1264 = vrot.slane %v1263, 4
        %v1265 = vadd.f32 %v1263, %v1264
        %v1266 = vrot.slane %v1265, 2
        %v1267 = vadd.f32 %v1265, %v1266
        %v1268 = vrot.slane %v1267, 1
        %v1269 = vadd.f32 %v1267, %v1268
        %v1270 = vsel %vm478, %v463, 0.0
        %v1271 = vrot.slane %v1270, 4
        %v1272 = vadd.f32 %v1270, %v1271
        %v1273 = vrot.slane %v1272, 2
        %v1274 = vadd.f32 %v1272, %v1273
        %v1275 = vrot.slane %v1274, 1
        %v1276 = vadd.f32 %v1274, %v1275
        %v1277 = vsel %vm478, %v464, 0.0
        %v1278 = vrot.slane %v1277, 4
        %v1279 = vadd.f32 %v1277, %v1278
        %v1280 = vrot.slane %v1279, 2
        %v1281 = vadd.f32 %v1279, %v1280
        %v1282 = vrot.slane %v1281, 1
        %v1283 = vadd.f32 %v1281, %v1282
        %v1284 = vsel %vm478, %v465, 0.0
        %v1285 = vrot.slane %v1284, 4
        %v1286 = vadd.f32 %v1284, %v1285
        %v1287 = vrot.slane %v1286, 2
        %v1288 = vadd.f32 %v1286, %v1287
        %v1289 = vrot.slane %v1288, 1
        %v1290 = vadd.f32 %v1288, %v1289
        %v1291 = vsel %vm478, %v466, 0.0
        %v1292 = vrot.slane %v1291, 4
        %v1293 = vadd.f32 %v1291, %v1292
        %v1294 = vrot.slane %v1293, 2
        %v1295 = vadd.f32 %v1293, %v1294
        %v1296 = vrot.slane %v1295, 1
        %v1297 = vadd.f32 %v1295, %v1296
        %v1298 = vsel %vm478, %v467, 0.0
        %v1299 = vrot.slane %v1298, 4
        %v1300 = vadd.f32 %v1298, %v1299
        %v1301 = vrot.slane %v1300, 2
        %v1302 = vadd.f32 %v1300, %v1301
        %v1303 = vrot.slane %v1302, 1
        %v1304 = vadd.f32 %v1302, %v1303
        %v1305 = vsel %vm478, %v468, 0.0
        %v1306 = vrot.slane %v1305, 4
        %v1307 = vadd.f32 %v1305, %v1306
        %v1308 = vrot.slane %v1307, 2
        %v1309 = vadd.f32 %v1307, %v1308
        %v1310 = vrot.slane %v1309, 1
        %v1311 = vadd.f32 %v1309, %v1310
        %v1312 = vsel %vm478, %v469, 0.0
        %v1313 = vrot.slane %v1312, 4
        %v1314 = vadd.f32 %v1312, %v1313
        %v1315 = vrot.slane %v1314, 2
        %v1316 = vadd.f32 %v1314, %v1315
        %v1317 = vrot.slane %v1316, 1
        %v1318 = vadd.f32 %v1316, %v1317
        %v1319 = vsel %vm478, %v470, 0.0
        %v1320 = vrot.slane %v1319, 4
        %v1321 = vadd.f32 %v1319, %v1320
        %v1322 = vrot.slane %v1321, 2
        %v1323 = vadd.f32 %v1321, %v1322
        %v1324 = vrot.slane %v1323, 1
        %v1325 = vadd.f32 %v1323, %v1324
        %v1326 = vsel %vm478, %v471, 0.0
        %v1327 = vrot.slane %v1326, 4
        %v1328 = vadd.f32 %v1326, %v1327
        %v1329 = vrot.slane %v1328, 2
        %v1330 = vadd.f32 %v1328, %v1329
        %v1331 = vrot.slane %v1330, 1
        %v1332 = vadd.f32 %v1330, %v1331
        %v1333 = vsel %vm478, %v472, 0.0
        %v1334 = vrot.slane %v1333, 4
        %v1335 = vadd.f32 %v1333, %v1334
        %v1336 = vrot.slane %v1335, 2
        %v1337 = vadd.f32 %v1335, %v1336
        %v1338 = vrot.slane %v1337, 1
        %v1339 = vadd.f32 %v1337, %v1338
        %v1340 = vsel %vm478, %v473, 0.0
        %v1341 = vrot.slane %v1340, 4
        %v1342 = vadd.f32 %v1340, %v1341
        %v1343 = vrot.slane %v1342, 2
        %v1344 = vadd.f32 %v1342, %v1343
        %v1345 = vrot.slane %v1344, 1
        %v1346 = vadd.f32 %v1344, %v1345
        %v1347 = vsel %vm478, %v474, 0.0
        %v1348 = vrot.slane %v1347, 4
        %v1349 = vadd.f32 %v1347, %v1348
        %v1350 = vrot.slane %v1349, 2
        %v1351 = vadd.f32 %v1349, %v1350
        %v1352 = vrot.slane %v1351, 1
        %v1353 = vadd.f32 %v1351, %v1352
        %v1354 = vsel %vm478, %v475, 0.0
        %v1355 = vrot.slane %v1354, 4
        %v1356 = vadd.f32 %v1354, %v1355
        %v1357 = vrot.slane %v1356, 2
        %v1358 = vadd.f32 %v1356, %v1357
        %v1359 = vrot.slane %v1358, 1
        %v1360 = vadd.f32 %v1358, %v1359
        %v1361 = vsel %vm478, %v476, 0.0
        %v1362 = vrot.slane %v1361, 4
        %v1363 = vadd.f32 %v1361, %v1362
        %v1364 = vrot.slane %v1363, 2
        %v1365 = vadd.f32 %v1363, %v1364
        %v1366 = vrot.slane %v1365, 1
        %v1367 = vadd.f32 %v1365, %v1366
        %v1368 = vsel %vm478, %v477, 0.0
        %v1369 = vrot.slane %v1368, 4
        %v1370 = vadd.f32 %v1368, %v1369
        %v1371 = vrot.slane %v1370, 2
        %v1372 = vadd.f32 %v1370, %v1371
        %v1373 = vrot.slane %v1372, 1
        %v1374 = vadd.f32 %v1372, %v1373
        %vm1503 = vcmask 1041409
        %v1504 = vsel %vm1503, %v492, %v485
        %vm1505 = vcmask 1042434
        %v1506 = vsel %vm1505, %v499, %v1504
        %vm1507 = vcmask 1043459
        %v1508 = vsel %vm1507, %v506, %v1506
        %vm1509 = vcmask 1044484
        %v1510 = vsel %vm1509, %v513, %v1508
        %vm1511 = vcmask 1045509
        %v1512 = vsel %vm1511, %v520, %v1510
        %vm1513 = vcmask 1046534
        %v1514 = vsel %vm1513, %v527, %v1512
        %vm1515 = vcmask 1047559
        %v1516 = vsel %vm1515, %v534, %v1514
        %v1517 = vsel %vm1503, %v548, %v541
        %v1518 = vsel %vm1505, %v555, %v1517
        %v1519 = vsel %vm1507, %v562, %v1518
        %v1520 = vsel %vm1509, %v569, %v1519
        %v1521 = vsel %vm1511, %v576, %v1520
        %v1522 = vsel %vm1513, %v583, %v1521
        %v1523 = vsel %vm1515, %v590, %v1522
        %v1524 = vsel %vm1503, %v604, %v597
        %v1525 = vsel %vm1505, %v611, %v1524
        %v1526 = vsel %vm1507, %v618, %v1525
        %v1527 = vsel %vm1509, %v625, %v1526
        %v1528 = vsel %vm1511, %v632, %v1527
        %v1529 = vsel %vm1513, %v639, %v1528
        %v1530 = vsel %vm1515, %v646, %v1529
        %v1531 = vsel %vm1503, %v660, %v653
        %v1532 = vsel %vm1505, %v667, %v1531
        %v1533 = vsel %vm1507, %v674, %v1532
        %v1534 = vsel %vm1509, %v681, %v1533
        %v1535 = vsel %vm1511, %v688, %v1534
        %v1536 = vsel %vm1513, %v695, %v1535
        %v1537 = vsel %vm1515, %v702, %v1536
        %v1538 = vsel %vm1503, %v716, %v709
        %v1539 = vsel %vm1505, %v723, %v1538
        %v1540 = vsel %vm1507, %v730, %v1539
        %v1541 = vsel %vm1509, %v737, %v1540
        %v1542 = vsel %vm1511, %v744, %v1541
        %v1543 = vsel %vm1513, %v751, %v1542
        %v1544 = vsel %vm1515, %v758, %v1543
        %v1545 = vsel %vm1503, %v772, %v765
        %v1546 = vsel %vm1505, %v779, %v1545
        %v1547 = vsel %vm1507, %v786, %v1546
        %v1548 = vsel %vm1509, %v793, %v1547
        %v1549 = vsel %vm1511, %v800, %v1548
        %v1550 = vsel %vm1513, %v807, %v1549
        %v1551 = vsel %vm1515, %v814, %v1550
        %v1552 = vsel %vm1503, %v828, %v821
        %v1553 = vsel %vm1505, %v835, %v1552
        %v1554 = vsel %vm1507, %v842, %v1553
        %v1555 = vsel %vm1509, %v849, %v1554
        %v1556 = vsel %vm1511, %v856, %v1555
        %v1557 = vsel %vm1513, %v863, %v1556
        %v1558 = vsel %vm1515, %v870, %v1557
        %v1559 = vsel %vm1503, %v884, %v877
        %v1560 = vsel %vm1505, %v891, %v1559
        %v1561 = vsel %vm1507, %v898, %v1560
        %v1562 = vsel %vm1509, %v905, %v1561
        %v1563 = vsel %vm1511, %v912, %v1562
        %v1564 = vsel %vm1513, %v919, %v1563
        %v1565 = vsel %vm1515, %v926, %v1564
        %v1566 = vsel %vm1503, %v940, %v933
        %v1567 = vsel %vm1505, %v947, %v1566
        %v1568 = vsel %vm1507, %v954, %v1567
        %v1569 = vsel %vm1509, %v961, %v1568
        %v1570 = vsel %vm1511, %v968, %v1569
        %v1571 = vsel %vm1513, %v975, %v1570
        %v1572 = vsel %vm1515, %v982, %v1571
        %v1573 = vsel %vm1503, %v996, %v989
        %v1574 = vsel %vm1505, %v1003, %v1573
        %v1575 = vsel %vm1507, %v1010, %v1574
        %v1576 = vsel %vm1509, %v1017, %v1575
        %v1577 = vsel %vm1511, %v1024, %v1576
        %v1578 = vsel %vm1513, %v1031, %v1577
        %v1579 = vsel %vm1515, %v1038, %v1578
        %v1580 = vsel %vm1503, %v1052, %v1045
        %v1581 = vsel %vm1505, %v1059, %v1580
        %v1582 = vsel %vm1507, %v1066, %v1581
        %v1583 = vsel %vm1509, %v1073, %v1582
        %v1584 = vsel %vm1511, %v1080, %v1583
        %v1585 = vsel %vm1513, %v1087, %v1584
        %v1586 = vsel %vm1515, %v1094, %v1585
        %v1587 = vsel %vm1503, %v1108, %v1101
        %v1588 = vsel %vm1505, %v1115, %v1587
        %v1589 = vsel %vm1507, %v1122, %v1588
        %v1590 = vsel %vm1509, %v1129, %v1589
        %v1591 = vsel %vm1511, %v1136, %v1590
        %v1592 = vsel %vm1513, %v1143, %v1591
        %v1593 = vsel %vm1515, %v1150, %v1592
        %v1594 = vsel %vm1503, %v1164, %v1157
        %v1595 = vsel %vm1505, %v1171, %v1594
        %v1596 = vsel %vm1507, %v1178, %v1595
        %v1597 = vsel %vm1509, %v1185, %v1596
        %v1598 = vsel %vm1511, %v1192, %v1597
        %v1599 = vsel %vm1513, %v1199, %v1598
        %v1600 = vsel %vm1515, %v1206, %v1599
        %v1601 = vsel %vm1503, %v1220, %v1213
        %v1602 = vsel %vm1505, %v1227, %v1601
        %v1603 = vsel %vm1507, %v1234, %v1602
        %v1604 = vsel %vm1509, %v1241, %v1603
        %v1605 = vsel %vm1511, %v1248, %v1604
        %v1606 = vsel %vm1513, %v1255, %v1605
        %v1607 = vsel %vm1515, %v1262, %v1606
        %v1608 = vsel %vm1503, %v1276, %v1269
        %v1609 = vsel %vm1505, %v1283, %v1608
        %v1610 = vsel %vm1507, %v1290, %v1609
        %v1611 = vsel %vm1509, %v1297, %v1610
        %v1612 = vsel %vm1511, %v1304, %v1611
        %v1613 = vsel %vm1513, %v1311, %v1612
        %v1614 = vsel %vm1515, %v1318, %v1613
        %v1615 = vsel %vm1503, %v1332, %v1325
        %v1616 = vsel %vm1505, %v1339, %v1615
        %v1617 = vsel %vm1507, %v1346, %v1616
        %v1618 = vsel %vm1509, %v1353, %v1617
        %v1619 = vsel %vm1511, %v1360, %v1618
        %v1620 = vsel %vm1513, %v1367, %v1619
        %v1621 = vsel %vm1515, %v1374, %v1620
        %1638 = vadd.xlane.f32.xlu0 %v1516
        %v1639 = vpop.xlane.xlu0 %1638
        %1640 = vadd.xlane.f32.xlu0 %v1523
        %v1641 = vpop.xlane.xlu0 %1640
        %1642 = vadd.xlane.f32.xlu0 %v1530
        %v1643 = vpop.xlane.xlu0 %1642
        %1644 = vadd.xlane.f32.xlu0 %v1537
        %v1645 = vpop.xlane.xlu0 %1644
        %1646 = vadd.xlane.f32.xlu0 %v1544
        %v1647 = vpop.xlane.xlu0 %1646
        %1648 = vadd.xlane.f32.xlu0 %v1551
        %v1649 = vpop.xlane.xlu0 %1648
        %1650 = vadd.xlane.f32.xlu0 %v1558
        %v1651 = vpop.xlane.xlu0 %1650
        %1652 = vadd.xlane.f32.xlu0 %v1565
        %v1653 = vpop.xlane.xlu0 %1652
        %1654 = vadd.xlane.f32.xlu0 %v1572
        %v1655 = vpop.xlane.xlu0 %1654
        %1656 = vadd.xlane.f32.xlu0 %v1579
        %v1657 = vpop.xlane.xlu0 %1656
        %1658 = vadd.xlane.f32.xlu0 %v1586
        %v1659 = vpop.xlane.xlu0 %1658
        %1660 = vadd.xlane.f32.xlu0 %v1593
        %v1661 = vpop.xlane.xlu0 %1660
        %1662 = vadd.xlane.f32.xlu0 %v1600
        %v1663 = vpop.xlane.xlu0 %1662
        %1664 = vadd.xlane.f32.xlu0 %v1607
        %v1665 = vpop.xlane.xlu0 %1664
        %1666 = vadd.xlane.f32.xlu0 %v1614
        %v1667 = vpop.xlane.xlu0 %1666
        %1668 = vadd.xlane.f32.xlu0 %v1621
        %v1669 = vpop.xlane.xlu0 %1668
        %v1670 = vmul.f32 %v1639, 0.001953125
        %v1671 = vmul.f32 %v1641, 0.001953125
        %v1672 = vmul.f32 %v1643, 0.001953125
        %v1673 = vmul.f32 %v1645, 0.001953125
        %v1674 = vmul.f32 %v1647, 0.001953125
        %v1675 = vmul.f32 %v1649, 0.001953125
        %v1676 = vmul.f32 %v1651, 0.001953125
        %v1677 = vmul.f32 %v1653, 0.001953125
        %v1678 = vmul.f32 %v1655, 0.001953125
        %v1679 = vmul.f32 %v1657, 0.001953125
        %v1680 = vmul.f32 %v1659, 0.001953125
        %v1681 = vmul.f32 %v1661, 0.001953125
        %v1682 = vmul.f32 %v1663, 0.001953125
        %v1683 = vmul.f32 %v1665, 0.001953125
        %v1684 = vmul.f32 %v1667, 0.001953125
        %v1685 = vmul.f32 %v1669, 0.001953125
        %v1686 = vxor.u32 %v1670, 2147483648
        %v1687 = vxor.u32 %v1671, 2147483648
        %v1688 = vxor.u32 %v1672, 2147483648
        %v1689 = vxor.u32 %v1673, 2147483648
        %v1690 = vxor.u32 %v1674, 2147483648
        %v1691 = vxor.u32 %v1675, 2147483648
        %v1692 = vxor.u32 %v1676, 2147483648
        %v1693 = vxor.u32 %v1677, 2147483648
        %v1694 = vxor.u32 %v1678, 2147483648
        %v1695 = vxor.u32 %v1679, 2147483648
        %v1696 = vxor.u32 %v1680, 2147483648
        %v1697 = vxor.u32 %v1681, 2147483648
        %v1698 = vxor.u32 %v1682, 2147483648
        %v1699 = vxor.u32 %v1683, 2147483648
        %v1700 = vxor.u32 %v1684, 2147483648
        %v1701 = vxor.u32 %v1685, 2147483648
        %v1702 = vmul.f32 %v1686, 1.442695
        %v1703 = vpow.pop %v1702
        %v1704 = vmul.f32 %v1687, 1.442695
        %v1705 = vpow.pop %v1704
        %v1706 = vmul.f32 %v1688, 1.442695
        %v1707 = vpow.pop %v1706
        %v1708 = vmul.f32 %v1689, 1.442695
        %v1709 = vpow.pop %v1708
        %v1710 = vmul.f32 %v1690, 1.442695
        %v1711 = vpow.pop %v1710
        %v1712 = vmul.f32 %v1691, 1.442695
        %v1713 = vpow.pop %v1712
        %v1714 = vmul.f32 %v1692, 1.442695
        %v1715 = vpow.pop %v1714
        %v1716 = vmul.f32 %v1693, 1.442695
        %v1717 = vpow.pop %v1716
        %v1718 = vmul.f32 %v1694, 1.442695
        %v1719 = vpow.pop %v1718
        %v1720 = vmul.f32 %v1695, 1.442695
        %v1721 = vpow.pop %v1720
        %v1722 = vmul.f32 %v1696, 1.442695
        %v1723 = vpow.pop %v1722
        %v1724 = vmul.f32 %v1697, 1.442695
        %v1725 = vpow.pop %v1724
        %v1726 = vmul.f32 %v1698, 1.442695
        %v1727 = vpow.pop %v1726
        %v1728 = vmul.f32 %v1699, 1.442695
        %v1729 = vpow.pop %v1728
        %v1730 = vmul.f32 %v1700, 1.442695
        %v1731 = vpow.pop %v1730
        %v1732 = vmul.f32 %v1701, 1.442695
        %v1733 = vpow.pop %v1732
        %v1734 = vadd.f32 %v1703, 1.0
        %v1735 = vadd.f32 %v1705, 1.0
        %v1736 = vadd.f32 %v1707, 1.0
        %v1737 = vadd.f32 %v1709, 1.0
        %v1738 = vadd.f32 %v1711, 1.0
        %v1739 = vadd.f32 %v1713, 1.0
        %v1740 = vadd.f32 %v1715, 1.0
        %v1741 = vadd.f32 %v1717, 1.0
        %v1742 = vadd.f32 %v1719, 1.0
        %v1743 = vadd.f32 %v1721, 1.0
        %v1744 = vadd.f32 %v1723, 1.0
        %v1745 = vadd.f32 %v1725, 1.0
        %v1746 = vadd.f32 %v1727, 1.0
        %v1747 = vadd.f32 %v1729, 1.0
        %v1748 = vadd.f32 %v1731, 1.0
        %v1749 = vadd.f32 %v1733, 1.0
        %v1750 = vrcp.pop %v1734
        %v1751 = vmul.f32 %v1734, %v1750
        %v1752 = vsub.f32 1.0, %v1751
        %v1753 = vmul.f32 %v1750, %v1752
        %v1754 = vadd.f32 %v1750, %v1753
        %vm1755 = vweird.f32 %v1734
        %vm1756 = vweird.f32 %v1750
        %vm1757 = vmor %vm1755, %vm1756
        %v1758 = vsel %vm1757, %v1750, %v1754
        %v1759 = vand.u32 2147483647, %v1734
        %vm1760 = vcmp.eq.f32.partialorder %v1759, 8.507059e+37
        %v1761 = vand.u32 %v1734, 2147483648
        %v1762 = vor.u32 1.1754944e-38, %v1761
        %v1763 = vsel %vm1760, %v1762, %v1758
        %v1764 = vmul.f32 1.0, %v1763
        %v1765 = vrcp.pop %v1735
        %v1766 = vmul.f32 %v1735, %v1765
        %v1767 = vsub.f32 1.0, %v1766
        %v1768 = vmul.f32 %v1765, %v1767
        %v1769 = vadd.f32 %v1765, %v1768
        %vm1770 = vweird.f32 %v1735
        %vm1771 = vweird.f32 %v1765
        %vm1772 = vmor %vm1770, %vm1771
        %v1773 = vsel %vm1772, %v1765, %v1769
        %v1774 = vand.u32 2147483647, %v1735
        %vm1775 = vcmp.eq.f32.partialorder %v1774, 8.507059e+37
        %v1776 = vand.u32 %v1735, 2147483648
        %v1777 = vor.u32 1.1754944e-38, %v1776
        %v1778 = vsel %vm1775, %v1777, %v1773
        %v1779 = vmul.f32 1.0, %v1778
        %v1780 = vrcp.pop %v1736
        %v1781 = vmul.f32 %v1736, %v1780
        %v1782 = vsub.f32 1.0, %v1781
        %v1783 = vmul.f32 %v1780, %v1782
        %v1784 = vadd.f32 %v1780, %v1783
        %vm1785 = vweird.f32 %v1736
        %vm1786 = vweird.f32 %v1780
        %vm1787 = vmor %vm1785, %vm1786
        %v1788 = vsel %vm1787, %v1780, %v1784
        %v1789 = vand.u32 2147483647, %v1736
        %vm1790 = vcmp.eq.f32.partialorder %v1789, 8.507059e+37
        %v1791 = vand.u32 %v1736, 2147483648
        %v1792 = vor.u32 1.1754944e-38, %v1791
        %v1793 = vsel %vm1790, %v1792, %v1788
        %v1794 = vmul.f32 1.0, %v1793
        %v1795 = vrcp.pop %v1737
        %v1796 = vmul.f32 %v1737, %v1795
        %v1797 = vsub.f32 1.0, %v1796
        %v1798 = vmul.f32 %v1795, %v1797
        %v1799 = vadd.f32 %v1795, %v1798
        %vm1800 = vweird.f32 %v1737
        %vm1801 = vweird.f32 %v1795
        %vm1802 = vmor %vm1800, %vm1801
        %v1803 = vsel %vm1802, %v1795, %v1799
        %v1804 = vand.u32 2147483647, %v1737
        %vm1805 = vcmp.eq.f32.partialorder %v1804, 8.507059e+37
        %v1806 = vand.u32 %v1737, 2147483648
        %v1807 = vor.u32 1.1754944e-38, %v1806
        %v1808 = vsel %vm1805, %v1807, %v1803
        %v1809 = vmul.f32 1.0, %v1808
        %v1810 = vrcp.pop %v1738
        %v1811 = vmul.f32 %v1738, %v1810
        %v1812 = vsub.f32 1.0, %v1811
        %v1813 = vmul.f32 %v1810, %v1812
        %v1814 = vadd.f32 %v1810, %v1813
        %vm1815 = vweird.f32 %v1738
        %vm1816 = vweird.f32 %v1810
        %vm1817 = vmor %vm1815, %vm1816
        %v1818 = vsel %vm1817, %v1810, %v1814
        %v1819 = vand.u32 2147483647, %v1738
        %vm1820 = vcmp.eq.f32.partialorder %v1819, 8.507059e+37
        %v1821 = vand.u32 %v1738, 2147483648
        %v1822 = vor.u32 1.1754944e-38, %v1821
        %v1823 = vsel %vm1820, %v1822, %v1818
        %v1824 = vmul.f32 1.0, %v1823
        %v1825 = vrcp.pop %v1739
        %v1826 = vmul.f32 %v1739, %v1825
        %v1827 = vsub.f32 1.0, %v1826
        %v1828 = vmul.f32 %v1825, %v1827
        %v1829 = vadd.f32 %v1825, %v1828
        %vm1830 = vweird.f32 %v1739
        %vm1831 = vweird.f32 %v1825
        %vm1832 = vmor %vm1830, %vm1831
        %v1833 = vsel %vm1832, %v1825, %v1829
        %v1834 = vand.u32 2147483647, %v1739
        %vm1835 = vcmp.eq.f32.partialorder %v1834, 8.507059e+37
        %v1836 = vand.u32 %v1739, 2147483648
        %v1837 = vor.u32 1.1754944e-38, %v1836
        %v1838 = vsel %vm1835, %v1837, %v1833
        %v1839 = vmul.f32 1.0, %v1838
        %v1840 = vrcp.pop %v1740
        %v1841 = vmul.f32 %v1740, %v1840
        %v1842 = vsub.f32 1.0, %v1841
        %v1843 = vmul.f32 %v1840, %v1842
        %v1844 = vadd.f32 %v1840, %v1843
        %vm1845 = vweird.f32 %v1740
        %vm1846 = vweird.f32 %v1840
        %vm1847 = vmor %vm1845, %vm1846
        %v1848 = vsel %vm1847, %v1840, %v1844
        %v1849 = vand.u32 2147483647, %v1740
        %vm1850 = vcmp.eq.f32.partialorder %v1849, 8.507059e+37
        %v1851 = vand.u32 %v1740, 2147483648
        %v1852 = vor.u32 1.1754944e-38, %v1851
        %v1853 = vsel %vm1850, %v1852, %v1848
        %v1854 = vmul.f32 1.0, %v1853
        %v1855 = vrcp.pop %v1741
        %v1856 = vmul.f32 %v1741, %v1855
        %v1857 = vsub.f32 1.0, %v1856
        %v1858 = vmul.f32 %v1855, %v1857
        %v1859 = vadd.f32 %v1855, %v1858
        %vm1860 = vweird.f32 %v1741
        %vm1861 = vweird.f32 %v1855
        %vm1862 = vmor %vm1860, %vm1861
        %v1863 = vsel %vm1862, %v1855, %v1859
        %v1864 = vand.u32 2147483647, %v1741
        %vm1865 = vcmp.eq.f32.partialorder %v1864, 8.507059e+37
        %v1866 = vand.u32 %v1741, 2147483648
        %v1867 = vor.u32 1.1754944e-38, %v1866
        %v1868 = vsel %vm1865, %v1867, %v1863
        %v1869 = vmul.f32 1.0, %v1868
        %v1870 = vrcp.pop %v1742
        %v1871 = vmul.f32 %v1742, %v1870
        %v1872 = vsub.f32 1.0, %v1871
        %v1873 = vmul.f32 %v1870, %v1872
        %v1874 = vadd.f32 %v1870, %v1873
        %vm1875 = vweird.f32 %v1742
        %vm1876 = vweird.f32 %v1870
        %vm1877 = vmor %vm1875, %vm1876
        %v1878 = vsel %vm1877, %v1870, %v1874
        %v1879 = vand.u32 2147483647, %v1742
        %vm1880 = vcmp.eq.f32.partialorder %v1879, 8.507059e+37
        %v1881 = vand.u32 %v1742, 2147483648
        %v1882 = vor.u32 1.1754944e-38, %v1881
        %v1883 = vsel %vm1880, %v1882, %v1878
        %v1884 = vmul.f32 1.0, %v1883
        %v1885 = vrcp.pop %v1743
        %v1886 = vmul.f32 %v1743, %v1885
        %v1887 = vsub.f32 1.0, %v1886
        %v1888 = vmul.f32 %v1885, %v1887
        %v1889 = vadd.f32 %v1885, %v1888
        %vm1890 = vweird.f32 %v1743
        %vm1891 = vweird.f32 %v1885
        %vm1892 = vmor %vm1890, %vm1891
        %v1893 = vsel %vm1892, %v1885, %v1889
        %v1894 = vand.u32 2147483647, %v1743
        %vm1895 = vcmp.eq.f32.partialorder %v1894, 8.507059e+37
        %v1896 = vand.u32 %v1743, 2147483648
        %v1897 = vor.u32 1.1754944e-38, %v1896
        %v1898 = vsel %vm1895, %v1897, %v1893
        %v1899 = vmul.f32 1.0, %v1898
        %v1900 = vrcp.pop %v1744
        %v1901 = vmul.f32 %v1744, %v1900
        %v1902 = vsub.f32 1.0, %v1901
        %v1903 = vmul.f32 %v1900, %v1902
        %v1904 = vadd.f32 %v1900, %v1903
        %vm1905 = vweird.f32 %v1744
        %vm1906 = vweird.f32 %v1900
        %vm1907 = vmor %vm1905, %vm1906
        %v1908 = vsel %vm1907, %v1900, %v1904
        %v1909 = vand.u32 2147483647, %v1744
        %vm1910 = vcmp.eq.f32.partialorder %v1909, 8.507059e+37
        %v1911 = vand.u32 %v1744, 2147483648
        %v1912 = vor.u32 1.1754944e-38, %v1911
        %v1913 = vsel %vm1910, %v1912, %v1908
        %v1914 = vmul.f32 1.0, %v1913
        %v1915 = vrcp.pop %v1745
        %v1916 = vmul.f32 %v1745, %v1915
        %v1917 = vsub.f32 1.0, %v1916
        %v1918 = vmul.f32 %v1915, %v1917
        %v1919 = vadd.f32 %v1915, %v1918
        %vm1920 = vweird.f32 %v1745
        %vm1921 = vweird.f32 %v1915
        %vm1922 = vmor %vm1920, %vm1921
        %v1923 = vsel %vm1922, %v1915, %v1919
        %v1924 = vand.u32 2147483647, %v1745
        %vm1925 = vcmp.eq.f32.partialorder %v1924, 8.507059e+37
        %v1926 = vand.u32 %v1745, 2147483648
        %v1927 = vor.u32 1.1754944e-38, %v1926
        %v1928 = vsel %vm1925, %v1927, %v1923
        %v1929 = vmul.f32 1.0, %v1928
        %v1930 = vrcp.pop %v1746
        %v1931 = vmul.f32 %v1746, %v1930
        %v1932 = vsub.f32 1.0, %v1931
        %v1933 = vmul.f32 %v1930, %v1932
        %v1934 = vadd.f32 %v1930, %v1933
        %vm1935 = vweird.f32 %v1746
        %vm1936 = vweird.f32 %v1930
        %vm1937 = vmor %vm1935, %vm1936
        %v1938 = vsel %vm1937, %v1930, %v1934
        %v1939 = vand.u32 2147483647, %v1746
        %vm1940 = vcmp.eq.f32.partialorder %v1939, 8.507059e+37
        %v1941 = vand.u32 %v1746, 2147483648
        %v1942 = vor.u32 1.1754944e-38, %v1941
        %v1943 = vsel %vm1940, %v1942, %v1938
        %v1944 = vmul.f32 1.0, %v1943
        %v1945 = vrcp.pop %v1747
        %v1946 = vmul.f32 %v1747, %v1945
        %v1947 = vsub.f32 1.0, %v1946
        %v1948 = vmul.f32 %v1945, %v1947
        %v1949 = vadd.f32 %v1945, %v1948
        %vm1950 = vweird.f32 %v1747
        %vm1951 = vweird.f32 %v1945
        %vm1952 = vmor %vm1950, %vm1951
        %v1953 = vsel %vm1952, %v1945, %v1949
        %v1954 = vand.u32 2147483647, %v1747
        %vm1955 = vcmp.eq.f32.partialorder %v1954, 8.507059e+37
        %v1956 = vand.u32 %v1747, 2147483648
        %v1957 = vor.u32 1.1754944e-38, %v1956
        %v1958 = vsel %vm1955, %v1957, %v1953
        %v1959 = vmul.f32 1.0, %v1958
        %v1960 = vrcp.pop %v1748
        %v1961 = vmul.f32 %v1748, %v1960
        %v1962 = vsub.f32 1.0, %v1961
        %v1963 = vmul.f32 %v1960, %v1962
        %v1964 = vadd.f32 %v1960, %v1963
        %vm1965 = vweird.f32 %v1748
        %vm1966 = vweird.f32 %v1960
        %vm1967 = vmor %vm1965, %vm1966
        %v1968 = vsel %vm1967, %v1960, %v1964
        %v1969 = vand.u32 2147483647, %v1748
        %vm1970 = vcmp.eq.f32.partialorder %v1969, 8.507059e+37
        %v1971 = vand.u32 %v1748, 2147483648
        %v1972 = vor.u32 1.1754944e-38, %v1971
        %v1973 = vsel %vm1970, %v1972, %v1968
        %v1974 = vmul.f32 1.0, %v1973
        %v1975 = vrcp.pop %v1749
        %v1976 = vmul.f32 %v1749, %v1975
        %v1977 = vsub.f32 1.0, %v1976
        %v1978 = vmul.f32 %v1975, %v1977
        %v1979 = vadd.f32 %v1975, %v1978
        %vm1980 = vweird.f32 %v1749
        %vm1981 = vweird.f32 %v1975
        %vm1982 = vmor %vm1980, %vm1981
        %v1983 = vsel %vm1982, %v1975, %v1979
        %v1984 = vand.u32 2147483647, %v1749
        %vm1985 = vcmp.eq.f32.partialorder %v1984, 8.507059e+37
        %v1986 = vand.u32 %v1749, 2147483648
        %v1987 = vor.u32 1.1754944e-38, %v1986
        %v1988 = vsel %vm1985, %v1987, %v1983
        %v1989 = vmul.f32 1.0, %v1988
        %v1990 = vmul.f32 %v1764, 0.5
        %v1991 = vmul.f32 %v1779, 0.5
        %v1992 = vmul.f32 %v1794, 0.5
        %v1993 = vmul.f32 %v1809, 0.5
        %v1994 = vmul.f32 %v1824, 0.5
        %v1995 = vmul.f32 %v1839, 0.5
        %v1996 = vmul.f32 %v1854, 0.5
        %v1997 = vmul.f32 %v1869, 0.5
        %v1998 = vmul.f32 %v1884, 0.5
        %v1999 = vmul.f32 %v1899, 0.5
        %v2000 = vmul.f32 %v1914, 0.5
        %v2001 = vmul.f32 %v1929, 0.5
        %v2002 = vmul.f32 %v1944, 0.5
        %v2003 = vmul.f32 %v1959, 0.5
        %v2004 = vmul.f32 %v1974, 0.5
        %v2005 = vmul.f32 %v1989, 0.5
        %v2006 = vadd.f32 %v1990, 0.5
        %v2007 = vadd.f32 %v1991, 0.5
        %v2008 = vadd.f32 %v1992, 0.5
        %v2009 = vadd.f32 %v1993, 0.5
        %v2010 = vadd.f32 %v1994, 0.5
        %v2011 = vadd.f32 %v1995, 0.5
        %v2012 = vadd.f32 %v1996, 0.5
        %v2013 = vadd.f32 %v1997, 0.5
        %v2014 = vadd.f32 %v1998, 0.5
        %v2015 = vadd.f32 %v1999, 0.5
        %v2016 = vadd.f32 %v2000, 0.5
        %v2017 = vadd.f32 %v2001, 0.5
        %v2018 = vadd.f32 %v2002, 0.5
        %v2019 = vadd.f32 %v2003, 0.5
        %v2020 = vadd.f32 %v2004, 0.5
        %v2021 = vadd.f32 %v2005, 0.5
        %v2022 = vld [vmem:[%s292] sm:$0x3]
        %v2023 = vld [vmem:[%s292 + $0x2] sm:$0x3]
        %v2024 = vld [vmem:[%s292 + $0x4] sm:$0x3]
        %v2025 = vld [vmem:[%s292 + $0x6] sm:$0x3]
        %v2026 = vld [vmem:[%s292 + $0x8] sm:$0x3]
        %v2027 = vld [vmem:[%s292 + $0xa] sm:$0x3]
        %v2028 = vld [vmem:[%s292 + $0xc] sm:$0x3]
        %v2029 = vld [vmem:[%s292 + $0xe] sm:$0x3]
        %v2030 = vld [vmem:[%s292 + $0x10] sm:$0x3]
        %v2031 = vld [vmem:[%s292 + $0x12] sm:$0x3]
        %v2032 = vld [vmem:[%s292 + $0x14] sm:$0x3]
        %v2033 = vld [vmem:[%s292 + $0x16] sm:$0x3]
        %v2034 = vld [vmem:[%s292 + $0x18] sm:$0x3]
        %v2035 = vld [vmem:[%s292 + $0x1a] sm:$0x3]
        %v2036 = vld [vmem:[%s292 + $0x1c] sm:$0x3]
        %v2037 = vld [vmem:[%s292 + $0x1e] sm:$0x3]
        %v2038 = vld [vmem:[%s292 + $0x20] sm:$0x3]
        %v2039 = vld [vmem:[%s292 + $0x22] sm:$0x3]
        %v2040 = vld [vmem:[%s292 + $0x24] sm:$0x3]
        %v2041 = vld [vmem:[%s292 + $0x26] sm:$0x3]
        %v2042 = vld [vmem:[%s292 + $0x28] sm:$0x3]
        %v2043 = vld [vmem:[%s292 + $0x2a] sm:$0x3]
        %v2044 = vld [vmem:[%s292 + $0x2c] sm:$0x3]
        %v2045 = vld [vmem:[%s292 + $0x2e] sm:$0x3]
        %v2046 = vld [vmem:[%s292 + $0x30] sm:$0x3]
        %v2047 = vld [vmem:[%s292 + $0x32] sm:$0x3]
        %v2048 = vld [vmem:[%s292 + $0x34] sm:$0x3]
        %v2049 = vld [vmem:[%s292 + $0x36] sm:$0x3]
        %v2050 = vld [vmem:[%s292 + $0x38] sm:$0x3]
        %v2051 = vld [vmem:[%s292 + $0x3a] sm:$0x3]
        %v2052 = vld [vmem:[%s292 + $0x3c] sm:$0x3]
        %v2053 = vld [vmem:[%s292 + $0x3e] sm:$0x3]
        %v2054 = vld [vmem:[%s292 + $0x40] sm:$0x3]
        %v2055 = vld [vmem:[%s292 + $0x42] sm:$0x3]
        %v2056 = vld [vmem:[%s292 + $0x44] sm:$0x3]
        %v2057 = vld [vmem:[%s292 + $0x46] sm:$0x3]
        %v2058 = vld [vmem:[%s292 + $0x48] sm:$0x3]
        %v2059 = vld [vmem:[%s292 + $0x4a] sm:$0x3]
        %v2060 = vld [vmem:[%s292 + $0x4c] sm:$0x3]
        %v2061 = vld [vmem:[%s292 + $0x4e] sm:$0x3]
        %v2062 = vld [vmem:[%s292 + $0x50] sm:$0x3]
        %v2063 = vld [vmem:[%s292 + $0x52] sm:$0x3]
        %v2064 = vld [vmem:[%s292 + $0x54] sm:$0x3]
        %v2065 = vld [vmem:[%s292 + $0x56] sm:$0x3]
        %v2066 = vld [vmem:[%s292 + $0x58] sm:$0x3]
        %v2067 = vld [vmem:[%s292 + $0x5a] sm:$0x3]
        %v2068 = vld [vmem:[%s292 + $0x5c] sm:$0x3]
        %v2069 = vld [vmem:[%s292 + $0x5e] sm:$0x3]
        %v2070 = vld [vmem:[%s292 + $0x60] sm:$0x3]
        %v2071 = vld [vmem:[%s292 + $0x62] sm:$0x3]
        %v2072 = vld [vmem:[%s292 + $0x64] sm:$0x3]
        %v2073 = vld [vmem:[%s292 + $0x66] sm:$0x3]
        %v2074 = vld [vmem:[%s292 + $0x68] sm:$0x3]
        %v2075 = vld [vmem:[%s292 + $0x6a] sm:$0x3]
        %v2076 = vld [vmem:[%s292 + $0x6c] sm:$0x3]
        %v2077 = vld [vmem:[%s292 + $0x6e] sm:$0x3]
        %v2078 = vld [vmem:[%s292 + $0x70] sm:$0x3]
        %v2079 = vld [vmem:[%s292 + $0x72] sm:$0x3]
        %v2080 = vld [vmem:[%s292 + $0x74] sm:$0x3]
        %v2081 = vld [vmem:[%s292 + $0x76] sm:$0x3]
        %v2082 = vld [vmem:[%s292 + $0x78] sm:$0x3]
        %v2083 = vld [vmem:[%s292 + $0x7a] sm:$0x3]
        %v2084 = vld [vmem:[%s292 + $0x7c] sm:$0x3]
        %v2085 = vld [vmem:[%s292 + $0x7e] sm:$0x3]
        %v2086 = vld [vmem:[%s292 + $0x80] sm:$0x3]
        %v2087 = vld [vmem:[%s292 + $0x82] sm:$0x3]
        %v2088 = vld [vmem:[%s292 + $0x84] sm:$0x3]
        %v2089 = vld [vmem:[%s292 + $0x86] sm:$0x3]
        %v2090 = vld [vmem:[%s292 + $0x88] sm:$0x3]
        %v2091 = vld [vmem:[%s292 + $0x8a] sm:$0x3]
        %v2092 = vld [vmem:[%s292 + $0x8c] sm:$0x3]
        %v2093 = vld [vmem:[%s292 + $0x8e] sm:$0x3]
        %v2094 = vld [vmem:[%s292 + $0x90] sm:$0x3]
        %v2095 = vld [vmem:[%s292 + $0x92] sm:$0x3]
        %v2096 = vld [vmem:[%s292 + $0x94] sm:$0x3]
        %v2097 = vld [vmem:[%s292 + $0x96] sm:$0x3]
        %v2098 = vld [vmem:[%s292 + $0x98] sm:$0x3]
        %v2099 = vld [vmem:[%s292 + $0x9a] sm:$0x3]
        %v2100 = vld [vmem:[%s292 + $0x9c] sm:$0x3]
        %v2101 = vld [vmem:[%s292 + $0x9e] sm:$0x3]
        %v2102 = vld [vmem:[%s292 + $0xa0] sm:$0x3]
        %v2103 = vld [vmem:[%s292 + $0xa2] sm:$0x3]
        %v2104 = vld [vmem:[%s292 + $0xa4] sm:$0x3]
        %v2105 = vld [vmem:[%s292 + $0xa6] sm:$0x3]
        %v2106 = vld [vmem:[%s292 + $0xa8] sm:$0x3]
        %v2107 = vld [vmem:[%s292 + $0xaa] sm:$0x3]
        %v2108 = vld [vmem:[%s292 + $0xac] sm:$0x3]
        %v2109 = vld [vmem:[%s292 + $0xae] sm:$0x3]
        %v2110 = vld [vmem:[%s292 + $0xb0] sm:$0x3]
        %v2111 = vld [vmem:[%s292 + $0xb2] sm:$0x3]
        %v2112 = vld [vmem:[%s292 + $0xb4] sm:$0x3]
        %v2113 = vld [vmem:[%s292 + $0xb6] sm:$0x3]
        %v2114 = vld [vmem:[%s292 + $0xb8] sm:$0x3]
        %v2115 = vld [vmem:[%s292 + $0xba] sm:$0x3]
        %v2116 = vld [vmem:[%s292 + $0xbc] sm:$0x3]
        %v2117 = vld [vmem:[%s292 + $0xbe] sm:$0x3]
        %v2118 = vld [vmem:[%s292 + $0xc0] sm:$0x3]
        %v2119 = vld [vmem:[%s292 + $0xc2] sm:$0x3]
        %v2120 = vld [vmem:[%s292 + $0xc4] sm:$0x3]
        %v2121 = vld [vmem:[%s292 + $0xc6] sm:$0x3]
        %v2122 = vld [vmem:[%s292 + $0xc8] sm:$0x3]
        %v2123 = vld [vmem:[%s292 + $0xca] sm:$0x3]
        %v2124 = vld [vmem:[%s292 + $0xcc] sm:$0x3]
        %v2125 = vld [vmem:[%s292 + $0xce] sm:$0x3]
        %v2126 = vld [vmem:[%s292 + $0xd0] sm:$0x3]
        %v2127 = vld [vmem:[%s292 + $0xd2] sm:$0x3]
        %v2128 = vld [vmem:[%s292 + $0xd4] sm:$0x3]
        %v2129 = vld [vmem:[%s292 + $0xd6] sm:$0x3]
        %v2130 = vld [vmem:[%s292 + $0xd8] sm:$0x3]
        %v2131 = vld [vmem:[%s292 + $0xda] sm:$0x3]
        %v2132 = vld [vmem:[%s292 + $0xdc] sm:$0x3]
        %v2133 = vld [vmem:[%s292 + $0xde] sm:$0x3]
        %v2134 = vld [vmem:[%s292 + $0xe0] sm:$0x3]
        %v2135 = vld [vmem:[%s292 + $0xe2] sm:$0x3]
        %v2136 = vld [vmem:[%s292 + $0xe4] sm:$0x3]
        %v2137 = vld [vmem:[%s292 + $0xe6] sm:$0x3]
        %v2138 = vld [vmem:[%s292 + $0xe8] sm:$0x3]
        %v2139 = vld [vmem:[%s292 + $0xea] sm:$0x3]
        %v2140 = vld [vmem:[%s292 + $0xec] sm:$0x3]
        %v2141 = vld [vmem:[%s292 + $0xee] sm:$0x3]
        %v2142 = vld [vmem:[%s292 + $0xf0] sm:$0x3]
        %v2143 = vld [vmem:[%s292 + $0xf2] sm:$0x3]
        %v2144 = vld [vmem:[%s292 + $0xf4] sm:$0x3]
        %v2145 = vld [vmem:[%s292 + $0xf6] sm:$0x3]
        %v2146 = vld [vmem:[%s292 + $0xf8] sm:$0x3]
        %v2147 = vld [vmem:[%s292 + $0xfa] sm:$0x3]
        %v2148 = vld [vmem:[%s292 + $0xfc] sm:$0x3]
        %v2149 = vld [vmem:[%s292 + $0xfe] sm:$0x3]
        %vm2150 = vcmask 1041408
        %v2151 = vsel %vm2150, %v2022, 0.0
        %v2152 = vrot.slane %v2151, 4
        %v2153 = vadd.f32 %v2151, %v2152
        %v2154 = vrot.slane %v2153, 2
        %v2155 = vadd.f32 %v2153, %v2154
        %v2156 = vrot.slane %v2155, 1
        %v2157 = vadd.f32 %v2155, %v2156
        %v2158 = vsel %vm2150, %v2023, 0.0
        %v2159 = vrot.slane %v2158, 4
        %v2160 = vadd.f32 %v2158, %v2159
        %v2161 = vrot.slane %v2160, 2
        %v2162 = vadd.f32 %v2160, %v2161
        %v2163 = vrot.slane %v2162, 1
        %v2164 = vadd.f32 %v2162, %v2163
        %v2165 = vsel %vm2150, %v2024, 0.0
        %v2166 = vrot.slane %v2165, 4
        %v2167 = vadd.f32 %v2165, %v2166
        %v2168 = vrot.slane %v2167, 2
        %v2169 = vadd.f32 %v2167, %v2168
        %v2170 = vrot.slane %v2169, 1
        %v2171 = vadd.f32 %v2169, %v2170
        %v2172 = vsel %vm2150, %v2025, 0.0
        %v2173 = vrot.slane %v2172, 4
        %v2174 = vadd.f32 %v2172, %v2173
        %v2175 = vrot.slane %v2174, 2
        %v2176 = vadd.f32 %v2174, %v2175
        %v2177 = vrot.slane %v2176, 1
        %v2178 = vadd.f32 %v2176, %v2177
        %v2179 = vsel %vm2150, %v2026, 0.0
        %v2180 = vrot.slane %v2179, 4
        %v2181 = vadd.f32 %v2179, %v2180
        %v2182 = vrot.slane %v2181, 2
        %v2183 = vadd.f32 %v2181, %v2182
        %v2184 = vrot.slane %v2183, 1
        %v2185 = vadd.f32 %v2183, %v2184
        %v2186 = vsel %vm2150, %v2027, 0.0
        %v2187 = vrot.slane %v2186, 4
        %v2188 = vadd.f32 %v2186, %v2187
        %v2189 = vrot.slane %v2188, 2
        %v2190 = vadd.f32 %v2188, %v2189
        %v2191 = vrot.slane %v2190, 1
        %v2192 = vadd.f32 %v2190, %v2191
        %v2193 = vsel %vm2150, %v2028, 0.0
        %v2194 = vrot.slane %v2193, 4
        %v2195 = vadd.f32 %v2193, %v2194
        %v2196 = vrot.slane %v2195, 2
        %v2197 = vadd.f32 %v2195, %v2196
        %v2198 = vrot.slane %v2197, 1
        %v2199 = vadd.f32 %v2197, %v2198
        %v2200 = vsel %vm2150, %v2029, 0.0
        %v2201 = vrot.slane %v2200, 4
        %v2202 = vadd.f32 %v2200, %v2201
        %v2203 = vrot.slane %v2202, 2
        %v2204 = vadd.f32 %v2202, %v2203
        %v2205 = vrot.slane %v2204, 1
        %v2206 = vadd.f32 %v2204, %v2205
        %v2207 = vsel %vm2150, %v2030, 0.0
        %v2208 = vrot.slane %v2207, 4
        %v2209 = vadd.f32 %v2207, %v2208
        %v2210 = vrot.slane %v2209, 2
        %v2211 = vadd.f32 %v2209, %v2210
        %v2212 = vrot.slane %v2211, 1
        %v2213 = vadd.f32 %v2211, %v2212
        %v2214 = vsel %vm2150, %v2031, 0.0
        %v2215 = vrot.slane %v2214, 4
        %v2216 = vadd.f32 %v2214, %v2215
        %v2217 = vrot.slane %v2216, 2
        %v2218 = vadd.f32 %v2216, %v2217
        %v2219 = vrot.slane %v2218, 1
        %v2220 = vadd.f32 %v2218, %v2219
        %v2221 = vsel %vm2150, %v2032, 0.0
        %v2222 = vrot.slane %v2221, 4
        %v2223 = vadd.f32 %v2221, %v2222
        %v2224 = vrot.slane %v2223, 2
        %v2225 = vadd.f32 %v2223, %v2224
        %v2226 = vrot.slane %v2225, 1
        %v2227 = vadd.f32 %v2225, %v2226
        %v2228 = vsel %vm2150, %v2033, 0.0
        %v2229 = vrot.slane %v2228, 4
        %v2230 = vadd.f32 %v2228, %v2229
        %v2231 = vrot.slane %v2230, 2
        %v2232 = vadd.f32 %v2230, %v2231
        %v2233 = vrot.slane %v2232, 1
        %v2234 = vadd.f32 %v2232, %v2233
        %v2235 = vsel %vm2150, %v2034, 0.0
        %v2236 = vrot.slane %v2235, 4
        %v2237 = vadd.f32 %v2235, %v2236
        %v2238 = vrot.slane %v2237, 2
        %v2239 = vadd.f32 %v2237, %v2238
        %v2240 = vrot.slane %v2239, 1
        %v2241 = vadd.f32 %v2239, %v2240
        %v2242 = vsel %vm2150, %v2035, 0.0
        %v2243 = vrot.slane %v2242, 4
        %v2244 = vadd.f32 %v2242, %v2243
        %v2245 = vrot.slane %v2244, 2
        %v2246 = vadd.f32 %v2244, %v2245
        %v2247 = vrot.slane %v2246, 1
        %v2248 = vadd.f32 %v2246, %v2247
        %v2249 = vsel %vm2150, %v2036, 0.0
        %v2250 = vrot.slane %v2249, 4
        %v2251 = vadd.f32 %v2249, %v2250
        %v2252 = vrot.slane %v2251, 2
        %v2253 = vadd.f32 %v2251, %v2252
        %v2254 = vrot.slane %v2253, 1
        %v2255 = vadd.f32 %v2253, %v2254
        %v2256 = vsel %vm2150, %v2037, 0.0
        %v2257 = vrot.slane %v2256, 4
        %v2258 = vadd.f32 %v2256, %v2257
        %v2259 = vrot.slane %v2258, 2
        %v2260 = vadd.f32 %v2258, %v2259
        %v2261 = vrot.slane %v2260, 1
        %v2262 = vadd.f32 %v2260, %v2261
        %v2263 = vsel %vm2150, %v2038, 0.0
        %v2264 = vrot.slane %v2263, 4
        %v2265 = vadd.f32 %v2263, %v2264
        %v2266 = vrot.slane %v2265, 2
        %v2267 = vadd.f32 %v2265, %v2266
        %v2268 = vrot.slane %v2267, 1
        %v2269 = vadd.f32 %v2267, %v2268
        %v2270 = vsel %vm2150, %v2039, 0.0
        %v2271 = vrot.slane %v2270, 4
        %v2272 = vadd.f32 %v2270, %v2271
        %v2273 = vrot.slane %v2272, 2
        %v2274 = vadd.f32 %v2272, %v2273
        %v2275 = vrot.slane %v2274, 1
        %v2276 = vadd.f32 %v2274, %v2275
        %v2277 = vsel %vm2150, %v2040, 0.0
        %v2278 = vrot.slane %v2277, 4
        %v2279 = vadd.f32 %v2277, %v2278
        %v2280 = vrot.slane %v2279, 2
        %v2281 = vadd.f32 %v2279, %v2280
        %v2282 = vrot.slane %v2281, 1
        %v2283 = vadd.f32 %v2281, %v2282
        %v2284 = vsel %vm2150, %v2041, 0.0
        %v2285 = vrot.slane %v2284, 4
        %v2286 = vadd.f32 %v2284, %v2285
        %v2287 = vrot.slane %v2286, 2
        %v2288 = vadd.f32 %v2286, %v2287
        %v2289 = vrot.slane %v2288, 1
        %v2290 = vadd.f32 %v2288, %v2289
        %v2291 = vsel %vm2150, %v2042, 0.0
        %v2292 = vrot.slane %v2291, 4
        %v2293 = vadd.f32 %v2291, %v2292
        %v2294 = vrot.slane %v2293, 2
        %v2295 = vadd.f32 %v2293, %v2294
        %v2296 = vrot.slane %v2295, 1
        %v2297 = vadd.f32 %v2295, %v2296
        %v2298 = vsel %vm2150, %v2043, 0.0
        %v2299 = vrot.slane %v2298, 4
        %v2300 = vadd.f32 %v2298, %v2299
        %v2301 = vrot.slane %v2300, 2
        %v2302 = vadd.f32 %v2300, %v2301
        %v2303 = vrot.slane %v2302, 1
        %v2304 = vadd.f32 %v2302, %v2303
        %v2305 = vsel %vm2150, %v2044, 0.0
        %v2306 = vrot.slane %v2305, 4
        %v2307 = vadd.f32 %v2305, %v2306
        %v2308 = vrot.slane %v2307, 2
        %v2309 = vadd.f32 %v2307, %v2308
        %v2310 = vrot.slane %v2309, 1
        %v2311 = vadd.f32 %v2309, %v2310
        %v2312 = vsel %vm2150, %v2045, 0.0
        %v2313 = vrot.slane %v2312, 4
        %v2314 = vadd.f32 %v2312, %v2313
        %v2315 = vrot.slane %v2314, 2
        %v2316 = vadd.f32 %v2314, %v2315
        %v2317 = vrot.slane %v2316, 1
        %v2318 = vadd.f32 %v2316, %v2317
        %v2319 = vsel %vm2150, %v2046, 0.0
        %v2320 = vrot.slane %v2319, 4
        %v2321 = vadd.f32 %v2319, %v2320
        %v2322 = vrot.slane %v2321, 2
        %v2323 = vadd.f32 %v2321, %v2322
        %v2324 = vrot.slane %v2323, 1
        %v2325 = vadd.f32 %v2323, %v2324
        %v2326 = vsel %vm2150, %v2047, 0.0
        %v2327 = vrot.slane %v2326, 4
        %v2328 = vadd.f32 %v2326, %v2327
        %v2329 = vrot.slane %v2328, 2
        %v2330 = vadd.f32 %v2328, %v2329
        %v2331 = vrot.slane %v2330, 1
        %v2332 = vadd.f32 %v2330, %v2331
        %v2333 = vsel %vm2150, %v2048, 0.0
        %v2334 = vrot.slane %v2333, 4
        %v2335 = vadd.f32 %v2333, %v2334
        %v2336 = vrot.slane %v2335, 2
        %v2337 = vadd.f32 %v2335, %v2336
        %v2338 = vrot.slane %v2337, 1
        %v2339 = vadd.f32 %v2337, %v2338
        %v2340 = vsel %vm2150, %v2049, 0.0
        %v2341 = vrot.slane %v2340, 4
        %v2342 = vadd.f32 %v2340, %v2341
        %v2343 = vrot.slane %v2342, 2
        %v2344 = vadd.f32 %v2342, %v2343
        %v2345 = vrot.slane %v2344, 1
        %v2346 = vadd.f32 %v2344, %v2345
        %v2347 = vsel %vm2150, %v2050, 0.0
        %v2348 = vrot.slane %v2347, 4
        %v2349 = vadd.f32 %v2347, %v2348
        %v2350 = vrot.slane %v2349, 2
        %v2351 = vadd.f32 %v2349, %v2350
        %v2352 = vrot.slane %v2351, 1
        %v2353 = vadd.f32 %v2351, %v2352
        %v2354 = vsel %vm2150, %v2051, 0.0
        %v2355 = vrot.slane %v2354, 4
        %v2356 = vadd.f32 %v2354, %v2355
        %v2357 = vrot.slane %v2356, 2
        %v2358 = vadd.f32 %v2356, %v2357
        %v2359 = vrot.slane %v2358, 1
        %v2360 = vadd.f32 %v2358, %v2359
        %v2361 = vsel %vm2150, %v2052, 0.0
        %v2362 = vrot.slane %v2361, 4
        %v2363 = vadd.f32 %v2361, %v2362
        %v2364 = vrot.slane %v2363, 2
        %v2365 = vadd.f32 %v2363, %v2364
        %v2366 = vrot.slane %v2365, 1
        %v2367 = vadd.f32 %v2365, %v2366
        %v2368 = vsel %vm2150, %v2053, 0.0
        %v2369 = vrot.slane %v2368, 4
        %v2370 = vadd.f32 %v2368, %v2369
        %v2371 = vrot.slane %v2370, 2
        %v2372 = vadd.f32 %v2370, %v2371
        %v2373 = vrot.slane %v2372, 1
        %v2374 = vadd.f32 %v2372, %v2373
        %v2375 = vsel %vm2150, %v2054, 0.0
        %v2376 = vrot.slane %v2375, 4
        %v2377 = vadd.f32 %v2375, %v2376
        %v2378 = vrot.slane %v2377, 2
        %v2379 = vadd.f32 %v2377, %v2378
        %v2380 = vrot.slane %v2379, 1
        %v2381 = vadd.f32 %v2379, %v2380
        %v2382 = vsel %vm2150, %v2055, 0.0
        %v2383 = vrot.slane %v2382, 4
        %v2384 = vadd.f32 %v2382, %v2383
        %v2385 = vrot.slane %v2384, 2
        %v2386 = vadd.f32 %v2384, %v2385
        %v2387 = vrot.slane %v2386, 1
        %v2388 = vadd.f32 %v2386, %v2387
        %v2389 = vsel %vm2150, %v2056, 0.0
        %v2390 = vrot.slane %v2389, 4
        %v2391 = vadd.f32 %v2389, %v2390
        %v2392 = vrot.slane %v2391, 2
        %v2393 = vadd.f32 %v2391, %v2392
        %v2394 = vrot.slane %v2393, 1
        %v2395 = vadd.f32 %v2393, %v2394
        %v2396 = vsel %vm2150, %v2057, 0.0
        %v2397 = vrot.slane %v2396, 4
        %v2398 = vadd.f32 %v2396, %v2397
        %v2399 = vrot.slane %v2398, 2
        %v2400 = vadd.f32 %v2398, %v2399
        %v2401 = vrot.slane %v2400, 1
        %v2402 = vadd.f32 %v2400, %v2401
        %v2403 = vsel %vm2150, %v2058, 0.0
        %v2404 = vrot.slane %v2403, 4
        %v2405 = vadd.f32 %v2403, %v2404
        %v2406 = vrot.slane %v2405, 2
        %v2407 = vadd.f32 %v2405, %v2406
        %v2408 = vrot.slane %v2407, 1
        %v2409 = vadd.f32 %v2407, %v2408
        %v2410 = vsel %vm2150, %v2059, 0.0
        %v2411 = vrot.slane %v2410, 4
        %v2412 = vadd.f32 %v2410, %v2411
        %v2413 = vrot.slane %v2412, 2
        %v2414 = vadd.f32 %v2412, %v2413
        %v2415 = vrot.slane %v2414, 1
        %v2416 = vadd.f32 %v2414, %v2415
        %v2417 = vsel %vm2150, %v2060, 0.0
        %v2418 = vrot.slane %v2417, 4
        %v2419 = vadd.f32 %v2417, %v2418
        %v2420 = vrot.slane %v2419, 2
        %v2421 = vadd.f32 %v2419, %v2420
        %v2422 = vrot.slane %v2421, 1
        %v2423 = vadd.f32 %v2421, %v2422
        %v2424 = vsel %vm2150, %v2061, 0.0
        %v2425 = vrot.slane %v2424, 4
        %v2426 = vadd.f32 %v2424, %v2425
        %v2427 = vrot.slane %v2426, 2
        %v2428 = vadd.f32 %v2426, %v2427
        %v2429 = vrot.slane %v2428, 1
        %v2430 = vadd.f32 %v2428, %v2429
        %v2431 = vsel %vm2150, %v2062, 0.0
        %v2432 = vrot.slane %v2431, 4
        %v2433 = vadd.f32 %v2431, %v2432
        %v2434 = vrot.slane %v2433, 2
        %v2435 = vadd.f32 %v2433, %v2434
        %v2436 = vrot.slane %v2435, 1
        %v2437 = vadd.f32 %v2435, %v2436
        %v2438 = vsel %vm2150, %v2063, 0.0
        %v2439 = vrot.slane %v2438, 4
        %v2440 = vadd.f32 %v2438, %v2439
        %v2441 = vrot.slane %v2440, 2
        %v2442 = vadd.f32 %v2440, %v2441
        %v2443 = vrot.slane %v2442, 1
        %v2444 = vadd.f32 %v2442, %v2443
        %v2445 = vsel %vm2150, %v2064, 0.0
        %v2446 = vrot.slane %v2445, 4
        %v2447 = vadd.f32 %v2445, %v2446
        %v2448 = vrot.slane %v2447, 2
        %v2449 = vadd.f32 %v2447, %v2448
        %v2450 = vrot.slane %v2449, 1
        %v2451 = vadd.f32 %v2449, %v2450
        %v2452 = vsel %vm2150, %v2065, 0.0
        %v2453 = vrot.slane %v2452, 4
        %v2454 = vadd.f32 %v2452, %v2453
        %v2455 = vrot.slane %v2454, 2
        %v2456 = vadd.f32 %v2454, %v2455
        %v2457 = vrot.slane %v2456, 1
        %v2458 = vadd.f32 %v2456, %v2457
        %v2459 = vsel %vm2150, %v2066, 0.0
        %v2460 = vrot.slane %v2459, 4
        %v2461 = vadd.f32 %v2459, %v2460
        %v2462 = vrot.slane %v2461, 2
        %v2463 = vadd.f32 %v2461, %v2462
        %v2464 = vrot.slane %v2463, 1
        %v2465 = vadd.f32 %v2463, %v2464
        %v2466 = vsel %vm2150, %v2067, 0.0
        %v2467 = vrot.slane %v2466, 4
        %v2468 = vadd.f32 %v2466, %v2467
        %v2469 = vrot.slane %v2468, 2
        %v2470 = vadd.f32 %v2468, %v2469
        %v2471 = vrot.slane %v2470, 1
        %v2472 = vadd.f32 %v2470, %v2471
        %v2473 = vsel %vm2150, %v2068, 0.0
        %v2474 = vrot.slane %v2473, 4
        %v2475 = vadd.f32 %v2473, %v2474
        %v2476 = vrot.slane %v2475, 2
        %v2477 = vadd.f32 %v2475, %v2476
        %v2478 = vrot.slane %v2477, 1
        %v2479 = vadd.f32 %v2477, %v2478
        %v2480 = vsel %vm2150, %v2069, 0.0
        %v2481 = vrot.slane %v2480, 4
        %v2482 = vadd.f32 %v2480, %v2481
        %v2483 = vrot.slane %v2482, 2
        %v2484 = vadd.f32 %v2482, %v2483
        %v2485 = vrot.slane %v2484, 1
        %v2486 = vadd.f32 %v2484, %v2485
        %v2487 = vsel %vm2150, %v2070, 0.0
        %v2488 = vrot.slane %v2487, 4
        %v2489 = vadd.f32 %v2487, %v2488
        %v2490 = vrot.slane %v2489, 2
        %v2491 = vadd.f32 %v2489, %v2490
        %v2492 = vrot.slane %v2491, 1
        %v2493 = vadd.f32 %v2491, %v2492
        %v2494 = vsel %vm2150, %v2071, 0.0
        %v2495 = vrot.slane %v2494, 4
        %v2496 = vadd.f32 %v2494, %v2495
        %v2497 = vrot.slane %v2496, 2
        %v2498 = vadd.f32 %v2496, %v2497
        %v2499 = vrot.slane %v2498, 1
        %v2500 = vadd.f32 %v2498, %v2499
        %v2501 = vsel %vm2150, %v2072, 0.0
        %v2502 = vrot.slane %v2501, 4
        %v2503 = vadd.f32 %v2501, %v2502
        %v2504 = vrot.slane %v2503, 2
        %v2505 = vadd.f32 %v2503, %v2504
        %v2506 = vrot.slane %v2505, 1
        %v2507 = vadd.f32 %v2505, %v2506
        %v2508 = vsel %vm2150, %v2073, 0.0
        %v2509 = vrot.slane %v2508, 4
        %v2510 = vadd.f32 %v2508, %v2509
        %v2511 = vrot.slane %v2510, 2
        %v2512 = vadd.f32 %v2510, %v2511
        %v2513 = vrot.slane %v2512, 1
        %v2514 = vadd.f32 %v2512, %v2513
        %v2515 = vsel %vm2150, %v2074, 0.0
        %v2516 = vrot.slane %v2515, 4
        %v2517 = vadd.f32 %v2515, %v2516
        %v2518 = vrot.slane %v2517, 2
        %v2519 = vadd.f32 %v2517, %v2518
        %v2520 = vrot.slane %v2519, 1
        %v2521 = vadd.f32 %v2519, %v2520
        %v2522 = vsel %vm2150, %v2075, 0.0
        %v2523 = vrot.slane %v2522, 4
        %v2524 = vadd.f32 %v2522, %v2523
        %v2525 = vrot.slane %v2524, 2
        %v2526 = vadd.f32 %v2524, %v2525
        %v2527 = vrot.slane %v2526, 1
        %v2528 = vadd.f32 %v2526, %v2527
        %v2529 = vsel %vm2150, %v2076, 0.0
        %v2530 = vrot.slane %v2529, 4
        %v2531 = vadd.f32 %v2529, %v2530
        %v2532 = vrot.slane %v2531, 2
        %v2533 = vadd.f32 %v2531, %v2532
        %v2534 = vrot.slane %v2533, 1
        %v2535 = vadd.f32 %v2533, %v2534
        %v2536 = vsel %vm2150, %v2077, 0.0
        %v2537 = vrot.slane %v2536, 4
        %v2538 = vadd.f32 %v2536, %v2537
        %v2539 = vrot.slane %v2538, 2
        %v2540 = vadd.f32 %v2538, %v2539
        %v2541 = vrot.slane %v2540, 1
        %v2542 = vadd.f32 %v2540, %v2541
        %v2543 = vsel %vm2150, %v2078, 0.0
        %v2544 = vrot.slane %v2543, 4
        %v2545 = vadd.f32 %v2543, %v2544
        %v2546 = vrot.slane %v2545, 2
        %v2547 = vadd.f32 %v2545, %v2546
        %v2548 = vrot.slane %v2547, 1
        %v2549 = vadd.f32 %v2547, %v2548
        %v2550 = vsel %vm2150, %v2079, 0.0
        %v2551 = vrot.slane %v2550, 4
        %v2552 = vadd.f32 %v2550, %v2551
        %v2553 = vrot.slane %v2552, 2
        %v2554 = vadd.f32 %v2552, %v2553
        %v2555 = vrot.slane %v2554, 1
        %v2556 = vadd.f32 %v2554, %v2555
        %v2557 = vsel %vm2150, %v2080, 0.0
        %v2558 = vrot.slane %v2557, 4
        %v2559 = vadd.f32 %v2557, %v2558
        %v2560 = vrot.slane %v2559, 2
        %v2561 = vadd.f32 %v2559, %v2560
        %v2562 = vrot.slane %v2561, 1
        %v2563 = vadd.f32 %v2561, %v2562
        %v2564 = vsel %vm2150, %v2081, 0.0
        %v2565 = vrot.slane %v2564, 4
        %v2566 = vadd.f32 %v2564, %v2565
        %v2567 = vrot.slane %v2566, 2
        %v2568 = vadd.f32 %v2566, %v2567
        %v2569 = vrot.slane %v2568, 1
        %v2570 = vadd.f32 %v2568, %v2569
        %v2571 = vsel %vm2150, %v2082, 0.0
        %v2572 = vrot.slane %v2571, 4
        %v2573 = vadd.f32 %v2571, %v2572
        %v2574 = vrot.slane %v2573, 2
        %v2575 = vadd.f32 %v2573, %v2574
        %v2576 = vrot.slane %v2575, 1
        %v2577 = vadd.f32 %v2575, %v2576
        %v2578 = vsel %vm2150, %v2083, 0.0
        %v2579 = vrot.slane %v2578, 4
        %v2580 = vadd.f32 %v2578, %v2579
        %v2581 = vrot.slane %v2580, 2
        %v2582 = vadd.f32 %v2580, %v2581
        %v2583 = vrot.slane %v2582, 1
        %v2584 = vadd.f32 %v2582, %v2583
        %v2585 = vsel %vm2150, %v2084, 0.0
        %v2586 = vrot.slane %v2585, 4
        %v2587 = vadd.f32 %v2585, %v2586
        %v2588 = vrot.slane %v2587, 2
        %v2589 = vadd.f32 %v2587, %v2588
        %v2590 = vrot.slane %v2589, 1
        %v2591 = vadd.f32 %v2589, %v2590
        %v2592 = vsel %vm2150, %v2085, 0.0
        %v2593 = vrot.slane %v2592, 4
        %v2594 = vadd.f32 %v2592, %v2593
        %v2595 = vrot.slane %v2594, 2
        %v2596 = vadd.f32 %v2594, %v2595
        %v2597 = vrot.slane %v2596, 1
        %v2598 = vadd.f32 %v2596, %v2597
        %v2599 = vsel %vm2150, %v2086, 0.0
        %v2600 = vrot.slane %v2599, 4
        %v2601 = vadd.f32 %v2599, %v2600
        %v2602 = vrot.slane %v2601, 2
        %v2603 = vadd.f32 %v2601, %v2602
        %v2604 = vrot.slane %v2603, 1
        %v2605 = vadd.f32 %v2603, %v2604
        %v2606 = vsel %vm2150, %v2087, 0.0
        %v2607 = vrot.slane %v2606, 4
        %v2608 = vadd.f32 %v2606, %v2607
        %v2609 = vrot.slane %v2608, 2
        %v2610 = vadd.f32 %v2608, %v2609
        %v2611 = vrot.slane %v2610, 1
        %v2612 = vadd.f32 %v2610, %v2611
        %v2613 = vsel %vm2150, %v2088, 0.0
        %v2614 = vrot.slane %v2613, 4
        %v2615 = vadd.f32 %v2613, %v2614
        %v2616 = vrot.slane %v2615, 2
        %v2617 = vadd.f32 %v2615, %v2616
        %v2618 = vrot.slane %v2617, 1
        %v2619 = vadd.f32 %v2617, %v2618
        %v2620 = vsel %vm2150, %v2089, 0.0
        %v2621 = vrot.slane %v2620, 4
        %v2622 = vadd.f32 %v2620, %v2621
        %v2623 = vrot.slane %v2622, 2
        %v2624 = vadd.f32 %v2622, %v2623
        %v2625 = vrot.slane %v2624, 1
        %v2626 = vadd.f32 %v2624, %v2625
        %v2627 = vsel %vm2150, %v2090, 0.0
        %v2628 = vrot.slane %v2627, 4
        %v2629 = vadd.f32 %v2627, %v2628
        %v2630 = vrot.slane %v2629, 2
        %v2631 = vadd.f32 %v2629, %v2630
        %v2632 = vrot.slane %v2631, 1
        %v2633 = vadd.f32 %v2631, %v2632
        %v2634 = vsel %vm2150, %v2091, 0.0
        %v2635 = vrot.slane %v2634, 4
        %v2636 = vadd.f32 %v2634, %v2635
        %v2637 = vrot.slane %v2636, 2
        %v2638 = vadd.f32 %v2636, %v2637
        %v2639 = vrot.slane %v2638, 1
        %v2640 = vadd.f32 %v2638, %v2639
        %v2641 = vsel %vm2150, %v2092, 0.0
        %v2642 = vrot.slane %v2641, 4
        %v2643 = vadd.f32 %v2641, %v2642
        %v2644 = vrot.slane %v2643, 2
        %v2645 = vadd.f32 %v2643, %v2644
        %v2646 = vrot.slane %v2645, 1
        %v2647 = vadd.f32 %v2645, %v2646
        %v2648 = vsel %vm2150, %v2093, 0.0
        %v2649 = vrot.slane %v2648, 4
        %v2650 = vadd.f32 %v2648, %v2649
        %v2651 = vrot.slane %v2650, 2
        %v2652 = vadd.f32 %v2650, %v2651
        %v2653 = vrot.slane %v2652, 1
        %v2654 = vadd.f32 %v2652, %v2653
        %v2655 = vsel %vm2150, %v2094, 0.0
        %v2656 = vrot.slane %v2655, 4
        %v2657 = vadd.f32 %v2655, %v2656
        %v2658 = vrot.slane %v2657, 2
        %v2659 = vadd.f32 %v2657, %v2658
        %v2660 = vrot.slane %v2659, 1
        %v2661 = vadd.f32 %v2659, %v2660
        %v2662 = vsel %vm2150, %v2095, 0.0
        %v2663 = vrot.slane %v2662, 4
        %v2664 = vadd.f32 %v2662, %v2663
        %v2665 = vrot.slane %v2664, 2
        %v2666 = vadd.f32 %v2664, %v2665
        %v2667 = vrot.slane %v2666, 1
        %v2668 = vadd.f32 %v2666, %v2667
        %v2669 = vsel %vm2150, %v2096, 0.0
        %v2670 = vrot.slane %v2669, 4
        %v2671 = vadd.f32 %v2669, %v2670
        %v2672 = vrot.slane %v2671, 2
        %v2673 = vadd.f32 %v2671, %v2672
        %v2674 = vrot.slane %v2673, 1
        %v2675 = vadd.f32 %v2673, %v2674
        %v2676 = vsel %vm2150, %v2097, 0.0
        %v2677 = vrot.slane %v2676, 4
        %v2678 = vadd.f32 %v2676, %v2677
        %v2679 = vrot.slane %v2678, 2
        %v2680 = vadd.f32 %v2678, %v2679
        %v2681 = vrot.slane %v2680, 1
        %v2682 = vadd.f32 %v2680, %v2681
        %v2683 = vsel %vm2150, %v2098, 0.0
        %v2684 = vrot.slane %v2683, 4
        %v2685 = vadd.f32 %v2683, %v2684
        %v2686 = vrot.slane %v2685, 2
        %v2687 = vadd.f32 %v2685, %v2686
        %v2688 = vrot.slane %v2687, 1
        %v2689 = vadd.f32 %v2687, %v2688
        %v2690 = vsel %vm2150, %v2099, 0.0
        %v2691 = vrot.slane %v2690, 4
        %v2692 = vadd.f32 %v2690, %v2691
        %v2693 = vrot.slane %v2692, 2
        %v2694 = vadd.f32 %v2692, %v2693
        %v2695 = vrot.slane %v2694, 1
        %v2696 = vadd.f32 %v2694, %v2695
        %v2697 = vsel %vm2150, %v2100, 0.0
        %v2698 = vrot.slane %v2697, 4
        %v2699 = vadd.f32 %v2697, %v2698
        %v2700 = vrot.slane %v2699, 2
        %v2701 = vadd.f32 %v2699, %v2700
        %v2702 = vrot.slane %v2701, 1
        %v2703 = vadd.f32 %v2701, %v2702
        %v2704 = vsel %vm2150, %v2101, 0.0
        %v2705 = vrot.slane %v2704, 4
        %v2706 = vadd.f32 %v2704, %v2705
        %v2707 = vrot.slane %v2706, 2
        %v2708 = vadd.f32 %v2706, %v2707
        %v2709 = vrot.slane %v2708, 1
        %v2710 = vadd.f32 %v2708, %v2709
        %v2711 = vsel %vm2150, %v2102, 0.0
        %v2712 = vrot.slane %v2711, 4
        %v2713 = vadd.f32 %v2711, %v2712
        %v2714 = vrot.slane %v2713, 2
        %v2715 = vadd.f32 %v2713, %v2714
        %v2716 = vrot.slane %v2715, 1
        %v2717 = vadd.f32 %v2715, %v2716
        %v2718 = vsel %vm2150, %v2103, 0.0
        %v2719 = vrot.slane %v2718, 4
        %v2720 = vadd.f32 %v2718, %v2719
        %v2721 = vrot.slane %v2720, 2
        %v2722 = vadd.f32 %v2720, %v2721
        %v2723 = vrot.slane %v2722, 1
        %v2724 = vadd.f32 %v2722, %v2723
        %v2725 = vsel %vm2150, %v2104, 0.0
        %v2726 = vrot.slane %v2725, 4
        %v2727 = vadd.f32 %v2725, %v2726
        %v2728 = vrot.slane %v2727, 2
        %v2729 = vadd.f32 %v2727, %v2728
        %v2730 = vrot.slane %v2729, 1
        %v2731 = vadd.f32 %v2729, %v2730
        %v2732 = vsel %vm2150, %v2105, 0.0
        %v2733 = vrot.slane %v2732, 4
        %v2734 = vadd.f32 %v2732, %v2733
        %v2735 = vrot.slane %v2734, 2
        %v2736 = vadd.f32 %v2734, %v2735
        %v2737 = vrot.slane %v2736, 1
        %v2738 = vadd.f32 %v2736, %v2737
        %v2739 = vsel %vm2150, %v2106, 0.0
        %v2740 = vrot.slane %v2739, 4
        %v2741 = vadd.f32 %v2739, %v2740
        %v2742 = vrot.slane %v2741, 2
        %v2743 = vadd.f32 %v2741, %v2742
        %v2744 = vrot.slane %v2743, 1
        %v2745 = vadd.f32 %v2743, %v2744
        %v2746 = vsel %vm2150, %v2107, 0.0
        %v2747 = vrot.slane %v2746, 4
        %v2748 = vadd.f32 %v2746, %v2747
        %v2749 = vrot.slane %v2748, 2
        %v2750 = vadd.f32 %v2748, %v2749
        %v2751 = vrot.slane %v2750, 1
        %v2752 = vadd.f32 %v2750, %v2751
        %v2753 = vsel %vm2150, %v2108, 0.0
        %v2754 = vrot.slane %v2753, 4
        %v2755 = vadd.f32 %v2753, %v2754
        %v2756 = vrot.slane %v2755, 2
        %v2757 = vadd.f32 %v2755, %v2756
        %v2758 = vrot.slane %v2757, 1
        %v2759 = vadd.f32 %v2757, %v2758
        %v2760 = vsel %vm2150, %v2109, 0.0
        %v2761 = vrot.slane %v2760, 4
        %v2762 = vadd.f32 %v2760, %v2761
        %v2763 = vrot.slane %v2762, 2
        %v2764 = vadd.f32 %v2762, %v2763
        %v2765 = vrot.slane %v2764, 1
        %v2766 = vadd.f32 %v2764, %v2765
        %v2767 = vsel %vm2150, %v2110, 0.0
        %v2768 = vrot.slane %v2767, 4
        %v2769 = vadd.f32 %v2767, %v2768
        %v2770 = vrot.slane %v2769, 2
        %v2771 = vadd.f32 %v2769, %v2770
        %v2772 = vrot.slane %v2771, 1
        %v2773 = vadd.f32 %v2771, %v2772
        %v2774 = vsel %vm2150, %v2111, 0.0
        %v2775 = vrot.slane %v2774, 4
        %v2776 = vadd.f32 %v2774, %v2775
        %v2777 = vrot.slane %v2776, 2
        %v2778 = vadd.f32 %v2776, %v2777
        %v2779 = vrot.slane %v2778, 1
        %v2780 = vadd.f32 %v2778, %v2779
        %v2781 = vsel %vm2150, %v2112, 0.0
        %v2782 = vrot.slane %v2781, 4
        %v2783 = vadd.f32 %v2781, %v2782
        %v2784 = vrot.slane %v2783, 2
        %v2785 = vadd.f32 %v2783, %v2784
        %v2786 = vrot.slane %v2785, 1
        %v2787 = vadd.f32 %v2785, %v2786
        %v2788 = vsel %vm2150, %v2113, 0.0
        %v2789 = vrot.slane %v2788, 4
        %v2790 = vadd.f32 %v2788, %v2789
        %v2791 = vrot.slane %v2790, 2
        %v2792 = vadd.f32 %v2790, %v2791
        %v2793 = vrot.slane %v2792, 1
        %v2794 = vadd.f32 %v2792, %v2793
        %v2795 = vsel %vm2150, %v2114, 0.0
        %v2796 = vrot.slane %v2795, 4
        %v2797 = vadd.f32 %v2795, %v2796
        %v2798 = vrot.slane %v2797, 2
        %v2799 = vadd.f32 %v2797, %v2798
        %v2800 = vrot.slane %v2799, 1
        %v2801 = vadd.f32 %v2799, %v2800
        %v2802 = vsel %vm2150, %v2115, 0.0
        %v2803 = vrot.slane %v2802, 4
        %v2804 = vadd.f32 %v2802, %v2803
        %v2805 = vrot.slane %v2804, 2
        %v2806 = vadd.f32 %v2804, %v2805
        %v2807 = vrot.slane %v2806, 1
        %v2808 = vadd.f32 %v2806, %v2807
        %v2809 = vsel %vm2150, %v2116, 0.0
        %v2810 = vrot.slane %v2809, 4
        %v2811 = vadd.f32 %v2809, %v2810
        %v2812 = vrot.slane %v2811, 2
        %v2813 = vadd.f32 %v2811, %v2812
        %v2814 = vrot.slane %v2813, 1
        %v2815 = vadd.f32 %v2813, %v2814
        %v2816 = vsel %vm2150, %v2117, 0.0
        %v2817 = vrot.slane %v2816, 4
        %v2818 = vadd.f32 %v2816, %v2817
        %v2819 = vrot.slane %v2818, 2
        %v2820 = vadd.f32 %v2818, %v2819
        %v2821 = vrot.slane %v2820, 1
        %v2822 = vadd.f32 %v2820, %v2821
        %v2823 = vsel %vm2150, %v2118, 0.0
        %v2824 = vrot.slane %v2823, 4
        %v2825 = vadd.f32 %v2823, %v2824
        %v2826 = vrot.slane %v2825, 2
        %v2827 = vadd.f32 %v2825, %v2826
        %v2828 = vrot.slane %v2827, 1
        %v2829 = vadd.f32 %v2827, %v2828
        %v2830 = vsel %vm2150, %v2119, 0.0
        %v2831 = vrot.slane %v2830, 4
        %v2832 = vadd.f32 %v2830, %v2831
        %v2833 = vrot.slane %v2832, 2
        %v2834 = vadd.f32 %v2832, %v2833
        %v2835 = vrot.slane %v2834, 1
        %v2836 = vadd.f32 %v2834, %v2835
        %v2837 = vsel %vm2150, %v2120, 0.0
        %v2838 = vrot.slane %v2837, 4
        %v2839 = vadd.f32 %v2837, %v2838
        %v2840 = vrot.slane %v2839, 2
        %v2841 = vadd.f32 %v2839, %v2840
        %v2842 = vrot.slane %v2841, 1
        %v2843 = vadd.f32 %v2841, %v2842
        %v2844 = vsel %vm2150, %v2121, 0.0
        %v2845 = vrot.slane %v2844, 4
        %v2846 = vadd.f32 %v2844, %v2845
        %v2847 = vrot.slane %v2846, 2
        %v2848 = vadd.f32 %v2846, %v2847
        %v2849 = vrot.slane %v2848, 1
        %v2850 = vadd.f32 %v2848, %v2849
        %v2851 = vsel %vm2150, %v2122, 0.0
        %v2852 = vrot.slane %v2851, 4
        %v2853 = vadd.f32 %v2851, %v2852
        %v2854 = vrot.slane %v2853, 2
        %v2855 = vadd.f32 %v2853, %v2854
        %v2856 = vrot.slane %v2855, 1
        %v2857 = vadd.f32 %v2855, %v2856
        %v2858 = vsel %vm2150, %v2123, 0.0
        %v2859 = vrot.slane %v2858, 4
        %v2860 = vadd.f32 %v2858, %v2859
        %v2861 = vrot.slane %v2860, 2
        %v2862 = vadd.f32 %v2860, %v2861
        %v2863 = vrot.slane %v2862, 1
        %v2864 = vadd.f32 %v2862, %v2863
        %v2865 = vsel %vm2150, %v2124, 0.0
        %v2866 = vrot.slane %v2865, 4
        %v2867 = vadd.f32 %v2865, %v2866
        %v2868 = vrot.slane %v2867, 2
        %v2869 = vadd.f32 %v2867, %v2868
        %v2870 = vrot.slane %v2869, 1
        %v2871 = vadd.f32 %v2869, %v2870
        %v2872 = vsel %vm2150, %v2125, 0.0
        %v2873 = vrot.slane %v2872, 4
        %v2874 = vadd.f32 %v2872, %v2873
        %v2875 = vrot.slane %v2874, 2
        %v2876 = vadd.f32 %v2874, %v2875
        %v2877 = vrot.slane %v2876, 1
        %v2878 = vadd.f32 %v2876, %v2877
        %v2879 = vsel %vm2150, %v2126, 0.0
        %v2880 = vrot.slane %v2879, 4
        %v2881 = vadd.f32 %v2879, %v2880
        %v2882 = vrot.slane %v2881, 2
        %v2883 = vadd.f32 %v2881, %v2882
        %v2884 = vrot.slane %v2883, 1
        %v2885 = vadd.f32 %v2883, %v2884
        %v2886 = vsel %vm2150, %v2127, 0.0
        %v2887 = vrot.slane %v2886, 4
        %v2888 = vadd.f32 %v2886, %v2887
        %v2889 = vrot.slane %v2888, 2
        %v2890 = vadd.f32 %v2888, %v2889
        %v2891 = vrot.slane %v2890, 1
        %v2892 = vadd.f32 %v2890, %v2891
        %v2893 = vsel %vm2150, %v2128, 0.0
        %v2894 = vrot.slane %v2893, 4
        %v2895 = vadd.f32 %v2893, %v2894
        %v2896 = vrot.slane %v2895, 2
        %v2897 = vadd.f32 %v2895, %v2896
        %v2898 = vrot.slane %v2897, 1
        %v2899 = vadd.f32 %v2897, %v2898
        %v2900 = vsel %vm2150, %v2129, 0.0
        %v2901 = vrot.slane %v2900, 4
        %v2902 = vadd.f32 %v2900, %v2901
        %v2903 = vrot.slane %v2902, 2
        %v2904 = vadd.f32 %v2902, %v2903
        %v2905 = vrot.slane %v2904, 1
        %v2906 = vadd.f32 %v2904, %v2905
        %v2907 = vsel %vm2150, %v2130, 0.0
        %v2908 = vrot.slane %v2907, 4
        %v2909 = vadd.f32 %v2907, %v2908
        %v2910 = vrot.slane %v2909, 2
        %v2911 = vadd.f32 %v2909, %v2910
        %v2912 = vrot.slane %v2911, 1
        %v2913 = vadd.f32 %v2911, %v2912
        %v2914 = vsel %vm2150, %v2131, 0.0
        %v2915 = vrot.slane %v2914, 4
        %v2916 = vadd.f32 %v2914, %v2915
        %v2917 = vrot.slane %v2916, 2
        %v2918 = vadd.f32 %v2916, %v2917
        %v2919 = vrot.slane %v2918, 1
        %v2920 = vadd.f32 %v2918, %v2919
        %v2921 = vsel %vm2150, %v2132, 0.0
        %v2922 = vrot.slane %v2921, 4
        %v2923 = vadd.f32 %v2921, %v2922
        %v2924 = vrot.slane %v2923, 2
        %v2925 = vadd.f32 %v2923, %v2924
        %v2926 = vrot.slane %v2925, 1
        %v2927 = vadd.f32 %v2925, %v2926
        %v2928 = vsel %vm2150, %v2133, 0.0
        %v2929 = vrot.slane %v2928, 4
        %v2930 = vadd.f32 %v2928, %v2929
        %v2931 = vrot.slane %v2930, 2
        %v2932 = vadd.f32 %v2930, %v2931
        %v2933 = vrot.slane %v2932, 1
        %v2934 = vadd.f32 %v2932, %v2933
        %v2935 = vsel %vm2150, %v2134, 0.0
        %v2936 = vrot.slane %v2935, 4
        %v2937 = vadd.f32 %v2935, %v2936
        %v2938 = vrot.slane %v2937, 2
        %v2939 = vadd.f32 %v2937, %v2938
        %v2940 = vrot.slane %v2939, 1
        %v2941 = vadd.f32 %v2939, %v2940
        %v2942 = vsel %vm2150, %v2135, 0.0
        %v2943 = vrot.slane %v2942, 4
        %v2944 = vadd.f32 %v2942, %v2943
        %v2945 = vrot.slane %v2944, 2
        %v2946 = vadd.f32 %v2944, %v2945
        %v2947 = vrot.slane %v2946, 1
        %v2948 = vadd.f32 %v2946, %v2947
        %v2949 = vsel %vm2150, %v2136, 0.0
        %v2950 = vrot.slane %v2949, 4
        %v2951 = vadd.f32 %v2949, %v2950
        %v2952 = vrot.slane %v2951, 2
        %v2953 = vadd.f32 %v2951, %v2952
        %v2954 = vrot.slane %v2953, 1
        %v2955 = vadd.f32 %v2953, %v2954
        %v2956 = vsel %vm2150, %v2137, 0.0
        %v2957 = vrot.slane %v2956, 4
        %v2958 = vadd.f32 %v2956, %v2957
        %v2959 = vrot.slane %v2958, 2
        %v2960 = vadd.f32 %v2958, %v2959
        %v2961 = vrot.slane %v2960, 1
        %v2962 = vadd.f32 %v2960, %v2961
        %v2963 = vsel %vm2150, %v2138, 0.0
        %v2964 = vrot.slane %v2963, 4
        %v2965 = vadd.f32 %v2963, %v2964
        %v2966 = vrot.slane %v2965, 2
        %v2967 = vadd.f32 %v2965, %v2966
        %v2968 = vrot.slane %v2967, 1
        %v2969 = vadd.f32 %v2967, %v2968
        %v2970 = vsel %vm2150, %v2139, 0.0
        %v2971 = vrot.slane %v2970, 4
        %v2972 = vadd.f32 %v2970, %v2971
        %v2973 = vrot.slane %v2972, 2
        %v2974 = vadd.f32 %v2972, %v2973
        %v2975 = vrot.slane %v2974, 1
        %v2976 = vadd.f32 %v2974, %v2975
        %v2977 = vsel %vm2150, %v2140, 0.0
        %v2978 = vrot.slane %v2977, 4
        %v2979 = vadd.f32 %v2977, %v2978
        %v2980 = vrot.slane %v2979, 2
        %v2981 = vadd.f32 %v2979, %v2980
        %v2982 = vrot.slane %v2981, 1
        %v2983 = vadd.f32 %v2981, %v2982
        %v2984 = vsel %vm2150, %v2141, 0.0
        %v2985 = vrot.slane %v2984, 4
        %v2986 = vadd.f32 %v2984, %v2985
        %v2987 = vrot.slane %v2986, 2
        %v2988 = vadd.f32 %v2986, %v2987
        %v2989 = vrot.slane %v2988, 1
        %v2990 = vadd.f32 %v2988, %v2989
        %v2991 = vsel %vm2150, %v2142, 0.0
        %v2992 = vrot.slane %v2991, 4
        %v2993 = vadd.f32 %v2991, %v2992
        %v2994 = vrot.slane %v2993, 2
        %v2995 = vadd.f32 %v2993, %v2994
        %v2996 = vrot.slane %v2995, 1
        %v2997 = vadd.f32 %v2995, %v2996
        %v2998 = vsel %vm2150, %v2143, 0.0
        %v2999 = vrot.slane %v2998, 4
        %v3000 = vadd.f32 %v2998, %v2999
        %v3001 = vrot.slane %v3000, 2
        %v3002 = vadd.f32 %v3000, %v3001
        %v3003 = vrot.slane %v3002, 1
        %v3004 = vadd.f32 %v3002, %v3003
        %v3005 = vsel %vm2150, %v2144, 0.0
        %v3006 = vrot.slane %v3005, 4
        %v3007 = vadd.f32 %v3005, %v3006
        %v3008 = vrot.slane %v3007, 2
        %v3009 = vadd.f32 %v3007, %v3008
        %v3010 = vrot.slane %v3009, 1
        %v3011 = vadd.f32 %v3009, %v3010
        %v3012 = vsel %vm2150, %v2145, 0.0
        %v3013 = vrot.slane %v3012, 4
        %v3014 = vadd.f32 %v3012, %v3013
        %v3015 = vrot.slane %v3014, 2
        %v3016 = vadd.f32 %v3014, %v3015
        %v3017 = vrot.slane %v3016, 1
        %v3018 = vadd.f32 %v3016, %v3017
        %v3019 = vsel %vm2150, %v2146, 0.0
        %v3020 = vrot.slane %v3019, 4
        %v3021 = vadd.f32 %v3019, %v3020
        %v3022 = vrot.slane %v3021, 2
        %v3023 = vadd.f32 %v3021, %v3022
        %v3024 = vrot.slane %v3023, 1
        %v3025 = vadd.f32 %v3023, %v3024
        %v3026 = vsel %vm2150, %v2147, 0.0
        %v3027 = vrot.slane %v3026, 4
        %v3028 = vadd.f32 %v3026, %v3027
        %v3029 = vrot.slane %v3028, 2
        %v3030 = vadd.f32 %v3028, %v3029
        %v3031 = vrot.slane %v3030, 1
        %v3032 = vadd.f32 %v3030, %v3031
        %v3033 = vsel %vm2150, %v2148, 0.0
        %v3034 = vrot.slane %v3033, 4
        %v3035 = vadd.f32 %v3033, %v3034
        %v3036 = vrot.slane %v3035, 2
        %v3037 = vadd.f32 %v3035, %v3036
        %v3038 = vrot.slane %v3037, 1
        %v3039 = vadd.f32 %v3037, %v3038
        %v3040 = vsel %vm2150, %v2149, 0.0
        %v3041 = vrot.slane %v3040, 4
        %v3042 = vadd.f32 %v3040, %v3041
        %v3043 = vrot.slane %v3042, 2
        %v3044 = vadd.f32 %v3042, %v3043
        %v3045 = vrot.slane %v3044, 1
        %v3046 = vadd.f32 %v3044, %v3045
        %v3047 = vpack.c.bf16 %v2157, %v2157
        %v3048 = vpack.c.bf16 %v2164, %v2164
        %v3049 = vpack.c.bf16 %v2171, %v2171
        %v3050 = vpack.c.bf16 %v2178, %v2178
        %v3051 = vpack.c.bf16 %v2185, %v2185
        %v3052 = vpack.c.bf16 %v2192, %v2192
        %v3053 = vpack.c.bf16 %v2199, %v2199
        %v3054 = vpack.c.bf16 %v2206, %v2206
        %v3055 = vpack.c.bf16 %v2213, %v2213
        %v3056 = vpack.c.bf16 %v2220, %v2220
        %v3057 = vpack.c.bf16 %v2227, %v2227
        %v3058 = vpack.c.bf16 %v2234, %v2234
        %v3059 = vpack.c.bf16 %v2241, %v2241
        %v3060 = vpack.c.bf16 %v2248, %v2248
        %v3061 = vpack.c.bf16 %v2255, %v2255
        %v3062 = vpack.c.bf16 %v2262, %v2262
        %v3063 = vpack.c.bf16 %v2269, %v2269
        %v3064 = vpack.c.bf16 %v2276, %v2276
        %v3065 = vpack.c.bf16 %v2283, %v2283
        %v3066 = vpack.c.bf16 %v2290, %v2290
        %v3067 = vpack.c.bf16 %v2297, %v2297
        %v3068 = vpack.c.bf16 %v2304, %v2304
        %v3069 = vpack.c.bf16 %v2311, %v2311
        %v3070 = vpack.c.bf16 %v2318, %v2318
        %v3071 = vpack.c.bf16 %v2325, %v2325
        %v3072 = vpack.c.bf16 %v2332, %v2332
        %v3073 = vpack.c.bf16 %v2339, %v2339
        %v3074 = vpack.c.bf16 %v2346, %v2346
        %v3075 = vpack.c.bf16 %v2353, %v2353
        %v3076 = vpack.c.bf16 %v2360, %v2360
        %v3077 = vpack.c.bf16 %v2367, %v2367
        %v3078 = vpack.c.bf16 %v2374, %v2374
        %v3079 = vpack.c.bf16 %v2381, %v2381
        %v3080 = vpack.c.bf16 %v2388, %v2388
        %v3081 = vpack.c.bf16 %v2395, %v2395
        %v3082 = vpack.c.bf16 %v2402, %v2402
        %v3083 = vpack.c.bf16 %v2409, %v2409
        %v3084 = vpack.c.bf16 %v2416, %v2416
        %v3085 = vpack.c.bf16 %v2423, %v2423
        %v3086 = vpack.c.bf16 %v2430, %v2430
        %v3087 = vpack.c.bf16 %v2437, %v2437
        %v3088 = vpack.c.bf16 %v2444, %v2444
        %v3089 = vpack.c.bf16 %v2451, %v2451
        %v3090 = vpack.c.bf16 %v2458, %v2458
        %v3091 = vpack.c.bf16 %v2465, %v2465
        %v3092 = vpack.c.bf16 %v2472, %v2472
        %v3093 = vpack.c.bf16 %v2479, %v2479
        %v3094 = vpack.c.bf16 %v2486, %v2486
        %v3095 = vpack.c.bf16 %v2493, %v2493
        %v3096 = vpack.c.bf16 %v2500, %v2500
        %v3097 = vpack.c.bf16 %v2507, %v2507
        %v3098 = vpack.c.bf16 %v2514, %v2514
        %v3099 = vpack.c.bf16 %v2521, %v2521
        %v3100 = vpack.c.bf16 %v2528, %v2528
        %v3101 = vpack.c.bf16 %v2535, %v2535
        %v3102 = vpack.c.bf16 %v2542, %v2542
        %v3103 = vpack.c.bf16 %v2549, %v2549
        %v3104 = vpack.c.bf16 %v2556, %v2556
        %v3105 = vpack.c.bf16 %v2563, %v2563
        %v3106 = vpack.c.bf16 %v2570, %v2570
        %v3107 = vpack.c.bf16 %v2577, %v2577
        %v3108 = vpack.c.bf16 %v2584, %v2584
        %v3109 = vpack.c.bf16 %v2591, %v2591
        %v3110 = vpack.c.bf16 %v2598, %v2598
        %v3111 = vpack.c.bf16 %v2605, %v2605
        %v3112 = vpack.c.bf16 %v2612, %v2612
        %v3113 = vpack.c.bf16 %v2619, %v2619
        %v3114 = vpack.c.bf16 %v2626, %v2626
        %v3115 = vpack.c.bf16 %v2633, %v2633
        %v3116 = vpack.c.bf16 %v2640, %v2640
        %v3117 = vpack.c.bf16 %v2647, %v2647
        %v3118 = vpack.c.bf16 %v2654, %v2654
        %v3119 = vpack.c.bf16 %v2661, %v2661
        %v3120 = vpack.c.bf16 %v2668, %v2668
        %v3121 = vpack.c.bf16 %v2675, %v2675
        %v3122 = vpack.c.bf16 %v2682, %v2682
        %v3123 = vpack.c.bf16 %v2689, %v2689
        %v3124 = vpack.c.bf16 %v2696, %v2696
        %v3125 = vpack.c.bf16 %v2703, %v2703
        %v3126 = vpack.c.bf16 %v2710, %v2710
        %v3127 = vpack.c.bf16 %v2717, %v2717
        %v3128 = vpack.c.bf16 %v2724, %v2724
        %v3129 = vpack.c.bf16 %v2731, %v2731
        %v3130 = vpack.c.bf16 %v2738, %v2738
        %v3131 = vpack.c.bf16 %v2745, %v2745
        %v3132 = vpack.c.bf16 %v2752, %v2752
        %v3133 = vpack.c.bf16 %v2759, %v2759
        %v3134 = vpack.c.bf16 %v2766, %v2766
        %v3135 = vpack.c.bf16 %v2773, %v2773
        %v3136 = vpack.c.bf16 %v2780, %v2780
        %v3137 = vpack.c.bf16 %v2787, %v2787
        %v3138 = vpack.c.bf16 %v2794, %v2794
        %v3139 = vpack.c.bf16 %v2801, %v2801
        %v3140 = vpack.c.bf16 %v2808, %v2808
        %v3141 = vpack.c.bf16 %v2815, %v2815
        %v3142 = vpack.c.bf16 %v2822, %v2822
        %v3143 = vpack.c.bf16 %v2829, %v2829
        %v3144 = vpack.c.bf16 %v2836, %v2836
        %v3145 = vpack.c.bf16 %v2843, %v2843
        %v3146 = vpack.c.bf16 %v2850, %v2850
        %v3147 = vpack.c.bf16 %v2857, %v2857
        %v3148 = vpack.c.bf16 %v2864, %v2864
        %v3149 = vpack.c.bf16 %v2871, %v2871
        %v3150 = vpack.c.bf16 %v2878, %v2878
        %v3151 = vpack.c.bf16 %v2885, %v2885
        %v3152 = vpack.c.bf16 %v2892, %v2892
        %v3153 = vpack.c.bf16 %v2899, %v2899
        %v3154 = vpack.c.bf16 %v2906, %v2906
        %v3155 = vpack.c.bf16 %v2913, %v2913
        %v3156 = vpack.c.bf16 %v2920, %v2920
        %v3157 = vpack.c.bf16 %v2927, %v2927
        %v3158 = vpack.c.bf16 %v2934, %v2934
        %v3159 = vpack.c.bf16 %v2941, %v2941
        %v3160 = vpack.c.bf16 %v2948, %v2948
        %v3161 = vpack.c.bf16 %v2955, %v2955
        %v3162 = vpack.c.bf16 %v2962, %v2962
        %v3163 = vpack.c.bf16 %v2969, %v2969
        %v3164 = vpack.c.bf16 %v2976, %v2976
        %v3165 = vpack.c.bf16 %v2983, %v2983
        %v3166 = vpack.c.bf16 %v2990, %v2990
        %v3167 = vpack.c.bf16 %v2997, %v2997
        %v3168 = vpack.c.bf16 %v3004, %v3004
        %v3169 = vpack.c.bf16 %v3011, %v3011
        %v3170 = vpack.c.bf16 %v3018, %v3018
        %v3171 = vpack.c.bf16 %v3025, %v3025
        %v3172 = vpack.c.bf16 %v3032, %v3032
        %v3173 = vpack.c.bf16 %v3039, %v3039
        %v3174 = vpack.c.bf16 %v3046, %v3046
        %v3175 = vld [vmem:[#allocation7] sm:$0xf]
        %v3176 = vld [vmem:[#allocation7 + $0x4] sm:$0xf]
        %v3177 = vld [vmem:[#allocation7 + $0x8] sm:$0xf]
        %v3178 = vld [vmem:[#allocation7 + $0xc] sm:$0xf]
        %v3179 = vld [vmem:[#allocation7 + $0x10] sm:$0xf]
        %v3180 = vld [vmem:[#allocation7 + $0x14] sm:$0xf]
        %v3181 = vld [vmem:[#allocation7 + $0x18] sm:$0xf]
        %v3182 = vld [vmem:[#allocation7 + $0x1c] sm:$0xf]
        %v3183 = vld [vmem:[#allocation7 + $0x20] sm:$0xf]
        %v3184 = vld [vmem:[#allocation7 + $0x24] sm:$0xf]
        %v3185 = vld [vmem:[#allocation7 + $0x28] sm:$0xf]
        %v3186 = vld [vmem:[#allocation7 + $0x2c] sm:$0xf]
        %v3187 = vld [vmem:[#allocation7 + $0x30] sm:$0xf]
        %v3188 = vld [vmem:[#allocation7 + $0x34] sm:$0xf]
        %v3189 = vld [vmem:[#allocation7 + $0x38] sm:$0xf]
        %v3190 = vld [vmem:[#allocation7 + $0x3c] sm:$0xf]
        %v3191 = vld [vmem:[%s3] sm:$0x1]
        %v3193 = vperm.slane %v3191, 0
        %v3323 = vunpack.c.l.b16 %v3047
        %v3324 = vunpack.c.l.b16 %v3048
        %v3325 = vunpack.c.l.b16 %v3049
        %v3326 = vunpack.c.l.b16 %v3050
        %v3327 = vunpack.c.l.b16 %v3051
        %v3328 = vunpack.c.l.b16 %v3052
        %v3329 = vunpack.c.l.b16 %v3053
        %v3330 = vunpack.c.l.b16 %v3054
        %v3331 = vunpack.c.l.b16 %v3055
        %v3332 = vunpack.c.l.b16 %v3056
        %v3333 = vunpack.c.l.b16 %v3057
        %v3334 = vunpack.c.l.b16 %v3058
        %v3335 = vunpack.c.l.b16 %v3059
        %v3336 = vunpack.c.l.b16 %v3060
        %v3337 = vunpack.c.l.b16 %v3061
        %v3338 = vunpack.c.l.b16 %v3062
        %v3339 = vunpack.c.l.b16 %v3063
        %v3340 = vunpack.c.l.b16 %v3064
        %v3341 = vunpack.c.l.b16 %v3065
        %v3342 = vunpack.c.l.b16 %v3066
        %v3343 = vunpack.c.l.b16 %v3067
        %v3344 = vunpack.c.l.b16 %v3068
        %v3345 = vunpack.c.l.b16 %v3069
        %v3346 = vunpack.c.l.b16 %v3070
        %v3347 = vunpack.c.l.b16 %v3071
        %v3348 = vunpack.c.l.b16 %v3072
        %v3349 = vunpack.c.l.b16 %v3073
        %v3350 = vunpack.c.l.b16 %v3074
        %v3351 = vunpack.c.l.b16 %v3075
        %v3352 = vunpack.c.l.b16 %v3076
        %v3353 = vunpack.c.l.b16 %v3077
        %v3354 = vunpack.c.l.b16 %v3078
        %v3355 = vunpack.c.l.b16 %v3079
        %v3356 = vunpack.c.l.b16 %v3080
        %v3357 = vunpack.c.l.b16 %v3081
        %v3358 = vunpack.c.l.b16 %v3082
        %v3359 = vunpack.c.l.b16 %v3083
        %v3360 = vunpack.c.l.b16 %v3084
        %v3361 = vunpack.c.l.b16 %v3085
        %v3362 = vunpack.c.l.b16 %v3086
        %v3363 = vunpack.c.l.b16 %v3087
        %v3364 = vunpack.c.l.b16 %v3088
        %v3365 = vunpack.c.l.b16 %v3089
        %v3366 = vunpack.c.l.b16 %v3090
        %v3367 = vunpack.c.l.b16 %v3091
        %v3368 = vunpack.c.l.b16 %v3092
        %v3369 = vunpack.c.l.b16 %v3093
        %v3370 = vunpack.c.l.b16 %v3094
        %v3371 = vunpack.c.l.b16 %v3095
        %v3372 = vunpack.c.l.b16 %v3096
        %v3373 = vunpack.c.l.b16 %v3097
        %v3374 = vunpack.c.l.b16 %v3098
        %v3375 = vunpack.c.l.b16 %v3099
        %v3376 = vunpack.c.l.b16 %v3100
        %v3377 = vunpack.c.l.b16 %v3101
        %v3378 = vunpack.c.l.b16 %v3102
        %v3379 = vunpack.c.l.b16 %v3103
        %v3380 = vunpack.c.l.b16 %v3104
        %v3381 = vunpack.c.l.b16 %v3105
        %v3382 = vunpack.c.l.b16 %v3106
        %v3383 = vunpack.c.l.b16 %v3107
        %v3384 = vunpack.c.l.b16 %v3108
        %v3385 = vunpack.c.l.b16 %v3109
        %v3386 = vunpack.c.l.b16 %v3110
        %v3387 = vunpack.c.l.b16 %v3111
        %v3388 = vunpack.c.l.b16 %v3112
        %v3389 = vunpack.c.l.b16 %v3113
        %v3390 = vunpack.c.l.b16 %v3114
        %v3391 = vunpack.c.l.b16 %v3115
        %v3392 = vunpack.c.l.b16 %v3116
        %v3393 = vunpack.c.l.b16 %v3117
        %v3394 = vunpack.c.l.b16 %v3118
        %v3395 = vunpack.c.l.b16 %v3119
        %v3396 = vunpack.c.l.b16 %v3120
        %v3397 = vunpack.c.l.b16 %v3121
        %v3398 = vunpack.c.l.b16 %v3122
        %v3399 = vunpack.c.l.b16 %v3123
        %v3400 = vunpack.c.l.b16 %v3124
        %v3401 = vunpack.c.l.b16 %v3125
        %v3402 = vunpack.c.l.b16 %v3126
        %v3403 = vunpack.c.l.b16 %v3127
        %v3404 = vunpack.c.l.b16 %v3128
        %v3405 = vunpack.c.l.b16 %v3129
        %v3406 = vunpack.c.l.b16 %v3130
        %v3407 = vunpack.c.l.b16 %v3131
        %v3408 = vunpack.c.l.b16 %v3132
        %v3409 = vunpack.c.l.b16 %v3133
        %v3410 = vunpack.c.l.b16 %v3134
        %v3411 = vunpack.c.l.b16 %v3135
        %v3412 = vunpack.c.l.b16 %v3136
        %v3413 = vunpack.c.l.b16 %v3137
        %v3414 = vunpack.c.l.b16 %v3138
        %v3415 = vunpack.c.l.b16 %v3139
        %v3416 = vunpack.c.l.b16 %v3140
        %v3417 = vunpack.c.l.b16 %v3141
        %v3418 = vunpack.c.l.b16 %v3142
        %v3419 = vunpack.c.l.b16 %v3143
        %v3420 = vunpack.c.l.b16 %v3144
        %v3421 = vunpack.c.l.b16 %v3145
        %v3422 = vunpack.c.l.b16 %v3146
        %v3423 = vunpack.c.l.b16 %v3147
        %v3424 = vunpack.c.l.b16 %v3148
        %v3425 = vunpack.c.l.b16 %v3149
        %v3426 = vunpack.c.l.b16 %v3150
        %v3427 = vunpack.c.l.b16 %v3151
        %v3428 = vunpack.c.l.b16 %v3152
        %v3429 = vunpack.c.l.b16 %v3153
        %v3430 = vunpack.c.l.b16 %v3154
        %v3431 = vunpack.c.l.b16 %v3155
        %v3432 = vunpack.c.l.b16 %v3156
        %v3433 = vunpack.c.l.b16 %v3157
        %v3434 = vunpack.c.l.b16 %v3158
        %v3435 = vunpack.c.l.b16 %v3159
        %v3436 = vunpack.c.l.b16 %v3160
        %v3437 = vunpack.c.l.b16 %v3161
        %v3438 = vunpack.c.l.b16 %v3162
        %v3439 = vunpack.c.l.b16 %v3163
        %v3440 = vunpack.c.l.b16 %v3164
        %v3441 = vunpack.c.l.b16 %v3165
        %v3442 = vunpack.c.l.b16 %v3166
        %v3443 = vunpack.c.l.b16 %v3167
        %v3444 = vunpack.c.l.b16 %v3168
        %v3445 = vunpack.c.l.b16 %v3169
        %v3446 = vunpack.c.l.b16 %v3170
        %v3447 = vunpack.c.l.b16 %v3171
        %v3448 = vunpack.c.l.b16 %v3172
        %v3449 = vunpack.c.l.b16 %v3173
        %v3450 = vunpack.c.l.b16 %v3174
        %v3451 = vsel %vm1503, %v3324, %v3323
        %v3452 = vsel %vm1505, %v3325, %v3451
        %v3453 = vsel %vm1507, %v3326, %v3452
        %v3454 = vsel %vm1509, %v3327, %v3453
        %v3455 = vsel %vm1511, %v3328, %v3454
        %v3456 = vsel %vm1513, %v3329, %v3455
        %v3457 = vsel %vm1515, %v3330, %v3456
        %v3458 = vsel %vm1503, %v3332, %v3331
        %v3459 = vsel %vm1505, %v3333, %v3458
        %v3460 = vsel %vm1507, %v3334, %v3459
        %v3461 = vsel %vm1509, %v3335, %v3460
        %v3462 = vsel %vm1511, %v3336, %v3461
        %v3463 = vsel %vm1513, %v3337, %v3462
        %v3464 = vsel %vm1515, %v3338, %v3463
        %v3465 = vsel %vm1503, %v3340, %v3339
        %v3466 = vsel %vm1505, %v3341, %v3465
        %v3467 = vsel %vm1507, %v3342, %v3466
        %v3468 = vsel %vm1509, %v3343, %v3467
        %v3469 = vsel %vm1511, %v3344, %v3468
        %v3470 = vsel %vm1513, %v3345, %v3469
        %v3471 = vsel %vm1515, %v3346, %v3470
        %v3472 = vsel %vm1503, %v3348, %v3347
        %v3473 = vsel %vm1505, %v3349, %v3472
        %v3474 = vsel %vm1507, %v3350, %v3473
        %v3475 = vsel %vm1509, %v3351, %v3474
        %v3476 = vsel %vm1511, %v3352, %v3475
        %v3477 = vsel %vm1513, %v3353, %v3476
        %v3478 = vsel %vm1515, %v3354, %v3477
        %v3479 = vsel %vm1503, %v3356, %v3355
        %v3480 = vsel %vm1505, %v3357, %v3479
        %v3481 = vsel %vm1507, %v3358, %v3480
        %v3482 = vsel %vm1509, %v3359, %v3481
        %v3483 = vsel %vm1511, %v3360, %v3482
        %v3484 = vsel %vm1513, %v3361, %v3483
        %v3485 = vsel %vm1515, %v3362, %v3484
        %v3486 = vsel %vm1503, %v3364, %v3363
        %v3487 = vsel %vm1505, %v3365, %v3486
        %v3488 = vsel %vm1507, %v3366, %v3487
        %v3489 = vsel %vm1509, %v3367, %v3488
        %v3490 = vsel %vm1511, %v3368, %v3489
        %v3491 = vsel %vm1513, %v3369, %v3490
        %v3492 = vsel %vm1515, %v3370, %v3491
        %v3493 = vsel %vm1503, %v3372, %v3371
        %v3494 = vsel %vm1505, %v3373, %v3493
        %v3495 = vsel %vm1507, %v3374, %v3494
        %v3496 = vsel %vm1509, %v3375, %v3495
        %v3497 = vsel %vm1511, %v3376, %v3496
        %v3498 = vsel %vm1513, %v3377, %v3497
        %v3499 = vsel %vm1515, %v3378, %v3498
        %v3500 = vsel %vm1503, %v3380, %v3379
        %v3501 = vsel %vm1505, %v3381, %v3500
        %v3502 = vsel %vm1507, %v3382, %v3501
        %v3503 = vsel %vm1509, %v3383, %v3502
        %v3504 = vsel %vm1511, %v3384, %v3503
        %v3505 = vsel %vm1513, %v3385, %v3504
        %v3506 = vsel %vm1515, %v3386, %v3505
        %v3507 = vsel %vm1503, %v3388, %v3387
        %v3508 = vsel %vm1505, %v3389, %v3507
        %v3509 = vsel %vm1507, %v3390, %v3508
        %v3510 = vsel %vm1509, %v3391, %v3509
        %v3511 = vsel %vm1511, %v3392, %v3510
        %v3512 = vsel %vm1513, %v3393, %v3511
        %v3513 = vsel %vm1515, %v3394, %v3512
        %v3514 = vsel %vm1503, %v3396, %v3395
        %v3515 = vsel %vm1505, %v3397, %v3514
        %v3516 = vsel %vm1507, %v3398, %v3515
        %v3517 = vsel %vm1509, %v3399, %v3516
        %v3518 = vsel %vm1511, %v3400, %v3517
        %v3519 = vsel %vm1513, %v3401, %v3518
        %v3520 = vsel %vm1515, %v3402, %v3519
        %v3521 = vsel %vm1503, %v3404, %v3403
        %v3522 = vsel %vm1505, %v3405, %v3521
        %v3523 = vsel %vm1507, %v3406, %v3522
        %v3524 = vsel %vm1509, %v3407, %v3523
        %v3525 = vsel %vm1511, %v3408, %v3524
        %v3526 = vsel %vm1513, %v3409, %v3525
        %v3527 = vsel %vm1515, %v3410, %v3526
        %v3528 = vsel %vm1503, %v3412, %v3411
        %v3529 = vsel %vm1505, %v3413, %v3528
        %v3530 = vsel %vm1507, %v3414, %v3529
        %v3531 = vsel %vm1509, %v3415, %v3530
        %v3532 = vsel %vm1511, %v3416, %v3531
        %v3533 = vsel %vm1513, %v3417, %v3532
        %v3534 = vsel %vm1515, %v3418, %v3533
        %v3535 = vsel %vm1503, %v3420, %v3419
        %v3536 = vsel %vm1505, %v3421, %v3535
        %v3537 = vsel %vm1507, %v3422, %v3536
        %v3538 = vsel %vm1509, %v3423, %v3537
        %v3539 = vsel %vm1511, %v3424, %v3538
        %v3540 = vsel %vm1513, %v3425, %v3539
        %v3541 = vsel %vm1515, %v3426, %v3540
        %v3542 = vsel %vm1503, %v3428, %v3427
        %v3543 = vsel %vm1505, %v3429, %v3542
        %v3544 = vsel %vm1507, %v3430, %v3543
        %v3545 = vsel %vm1509, %v3431, %v3544
        %v3546 = vsel %vm1511, %v3432, %v3545
        %v3547 = vsel %vm1513, %v3433, %v3546
        %v3548 = vsel %vm1515, %v3434, %v3547
        %v3549 = vsel %vm1503, %v3436, %v3435
        %v3550 = vsel %vm1505, %v3437, %v3549
        %v3551 = vsel %vm1507, %v3438, %v3550
        %v3552 = vsel %vm1509, %v3439, %v3551
        %v3553 = vsel %vm1511, %v3440, %v3552
        %v3554 = vsel %vm1513, %v3441, %v3553
        %v3555 = vsel %vm1515, %v3442, %v3554
        %v3556 = vsel %vm1503, %v3444, %v3443
        %v3557 = vsel %vm1505, %v3445, %v3556
        %v3558 = vsel %vm1507, %v3446, %v3557
        %v3559 = vsel %vm1509, %v3447, %v3558
        %v3560 = vsel %vm1511, %v3448, %v3559
        %v3561 = vsel %vm1513, %v3449, %v3560
        %v3562 = vsel %vm1515, %v3450, %v3561
        %v3563 = vpack.c.b16 %v3464, %v3457
        %v3564 = vpack.c.b16 %v3478, %v3471
        %v3565 = vpack.c.b16 %v3492, %v3485
        %v3566 = vpack.c.b16 %v3506, %v3499
        %v3567 = vpack.c.b16 %v3520, %v3513
        %v3568 = vpack.c.b16 %v3534, %v3527
        %v3569 = vpack.c.b16 %v3548, %v3541
        %v3570 = vpack.c.b16 %v3562, %v3555
        %v3595 = vunpack.c.l.b16 %v3175
        %v3596 = vunpack.c.l.b16 %v3176
        %v3597 = vunpack.c.l.b16 %v3177
        %v3598 = vunpack.c.l.b16 %v3178
        %v3599 = vunpack.c.l.b16 %v3179
        %v3600 = vunpack.c.l.b16 %v3180
        %v3601 = vunpack.c.l.b16 %v3181
        %v3602 = vunpack.c.l.b16 %v3182
        %v3603 = vunpack.c.l.b16 %v3183
        %v3604 = vunpack.c.l.b16 %v3184
        %v3605 = vunpack.c.l.b16 %v3185
        %v3606 = vunpack.c.l.b16 %v3186
        %v3607 = vunpack.c.l.b16 %v3187
        %v3608 = vunpack.c.l.b16 %v3188
        %v3609 = vunpack.c.l.b16 %v3189
        %v3610 = vunpack.c.l.b16 %v3190
        %v3611 = vpack.c.b16 %v3596, %v3595
        %v3612 = vpack.c.b16 %v3598, %v3597
        %v3613 = vpack.c.b16 %v3600, %v3599
        %v3614 = vpack.c.b16 %v3602, %v3601
        %v3615 = vpack.c.b16 %v3604, %v3603
        %v3616 = vpack.c.b16 %v3606, %v3605
        %v3617 = vpack.c.b16 %v3608, %v3607
        %v3618 = vpack.c.b16 %v3610, %v3609
        %3627 = vmatpush.bf16.msra.mxu0 %v3618
        %3628 = vmatpush.bf16.msra.mxu0 %v3617
        %3629 = vmatpush.bf16.msra.mxu0 %v3616
        %3630 = vmatpush.bf16.msra.mxu0 %v3615
        %3631 = vmatpush.bf16.msra.mxu0 %v3614
        %3632 = vmatpush.bf16.msra.mxu0 %v3613
        %3633 = vmatpush.bf16.msra.mxu0 %v3612
        %3634 = vmatpush.bf16.msra.mxu0 %v3611
        %3635 = vmatmul.bf16.gmra.mxu0 %v3563
        %v3636 = vpop.f32.mrf.mxu0
        %v3637 = vadd.f32 %v3193, %v3636
        %v3638 = vpop.f32.mrf.mxu0
        %v3639 = vadd.f32 %v3193, %v3638
        %3640 = vmatmul.bf16.gmra.mxu0 %v3564
        %v3641 = vpop.f32.mrf.mxu0
        %v3642 = vadd.f32 %v3193, %v3641
        %v3643 = vpop.f32.mrf.mxu0
        %v3644 = vadd.f32 %v3193, %v3643
        %3645 = vmatmul.bf16.gmra.mxu0 %v3565
        %v3646 = vpop.f32.mrf.mxu0
        %v3647 = vadd.f32 %v3193, %v3646
        %v3648 = vpop.f32.mrf.mxu0
        %v3649 = vadd.f32 %v3193, %v3648
        %3650 = vmatmul.bf16.gmra.mxu0 %v3566
        %v3651 = vpop.f32.mrf.mxu0
        %v3652 = vadd.f32 %v3193, %v3651
        %v3653 = vpop.f32.mrf.mxu0
        %v3654 = vadd.f32 %v3193, %v3653
        %3655 = vmatmul.bf16.gmra.mxu0 %v3567
        %v3656 = vpop.f32.mrf.mxu0
        %v3657 = vadd.f32 %v3193, %v3656
        %v3658 = vpop.f32.mrf.mxu0
        %v3659 = vadd.f32 %v3193, %v3658
        %3660 = vmatmul.bf16.gmra.mxu0 %v3568
        %v3661 = vpop.f32.mrf.mxu0
        %v3662 = vadd.f32 %v3193, %v3661
        %v3663 = vpop.f32.mrf.mxu0
        %v3664 = vadd.f32 %v3193, %v3663
        %3665 = vmatmul.bf16.gmra.mxu0 %v3569
        %v3666 = vpop.f32.mrf.mxu0
        %v3667 = vadd.f32 %v3193, %v3666
        %v3668 = vpop.f32.mrf.mxu0
        %v3669 = vadd.f32 %v3193, %v3668
        %3670 = vmatmul.bf16.gmra.mxu0 %v3570
        %v3671 = vpop.f32.mrf.mxu0
        %v3672 = vadd.f32 %v3193, %v3671
        %v3673 = vpop.f32.mrf.mxu0
        %v3674 = vadd.f32 %v3193, %v3673
        %3675 = vdwg.mxu0
        %v3676 = vtanh.pop %v3637
        %v3677 = vtanh.pop %v3639
        %v3678 = vtanh.pop %v3642
        %v3679 = vtanh.pop %v3644
        %v3680 = vtanh.pop %v3647
        %v3681 = vtanh.pop %v3649
        %v3682 = vtanh.pop %v3652
        %v3683 = vtanh.pop %v3654
        %v3684 = vtanh.pop %v3657
        %v3685 = vtanh.pop %v3659
        %v3686 = vtanh.pop %v3662
        %v3687 = vtanh.pop %v3664
        %v3688 = vtanh.pop %v3667
        %v3689 = vtanh.pop %v3669
        %v3690 = vtanh.pop %v3672
        %v3691 = vtanh.pop %v3674
        %v3692 = vpack.c.bf16 %v3677, %v3676
        %v3693 = vpack.c.bf16 %v3679, %v3678
        %v3694 = vpack.c.bf16 %v3681, %v3680
        %v3695 = vpack.c.bf16 %v3683, %v3682
        %v3696 = vpack.c.bf16 %v3685, %v3684
        %v3697 = vpack.c.bf16 %v3687, %v3686
        %v3698 = vpack.c.bf16 %v3689, %v3688
        %v3699 = vpack.c.bf16 %v3691, %v3690
        %v3700 = vld [vmem:[#allocation8] sm:$0xf]
        %v3701 = vld [vmem:[#allocation8 + $0x4] sm:$0xf]
        %v3702 = vld [vmem:[#allocation8 + $0x8] sm:$0xf]
        %v3703 = vld [vmem:[#allocation8 + $0xc] sm:$0xf]
        %v3704 = vld [vmem:[#allocation8 + $0x10] sm:$0xf]
        %v3705 = vld [vmem:[#allocation8 + $0x14] sm:$0xf]
        %v3706 = vld [vmem:[#allocation8 + $0x18] sm:$0xf]
        %v3707 = vld [vmem:[#allocation8 + $0x1c] sm:$0xf]
        %v3708 = vld [vmem:[#allocation8 + $0x20] sm:$0xf]
        %v3709 = vld [vmem:[#allocation8 + $0x24] sm:$0xf]
        %v3710 = vld [vmem:[#allocation8 + $0x28] sm:$0xf]
        %v3711 = vld [vmem:[#allocation8 + $0x2c] sm:$0xf]
        %v3712 = vld [vmem:[#allocation8 + $0x30] sm:$0xf]
        %v3713 = vld [vmem:[#allocation8 + $0x34] sm:$0xf]
        %v3714 = vld [vmem:[#allocation8 + $0x38] sm:$0xf]
        %v3715 = vld [vmem:[#allocation8 + $0x3c] sm:$0xf]
        %v3716 = vld [vmem:[%s5] sm:$0x1]
        %v3718 = vperm.slane %v3716, 0
        %v3736 = vunpack.c.l.b16 %v3700
        %v3737 = vunpack.c.l.b16 %v3701
        %v3738 = vunpack.c.l.b16 %v3702
        %v3739 = vunpack.c.l.b16 %v3703
        %v3740 = vunpack.c.l.b16 %v3704
        %v3741 = vunpack.c.l.b16 %v3705
        %v3742 = vunpack.c.l.b16 %v3706
        %v3743 = vunpack.c.l.b16 %v3707
        %v3744 = vunpack.c.l.b16 %v3708
        %v3745 = vunpack.c.l.b16 %v3709
        %v3746 = vunpack.c.l.b16 %v3710
        %v3747 = vunpack.c.l.b16 %v3711
        %v3748 = vunpack.c.l.b16 %v3712
        %v3749 = vunpack.c.l.b16 %v3713
        %v3750 = vunpack.c.l.b16 %v3714
        %v3751 = vunpack.c.l.b16 %v3715
        %v3752 = vpack.c.b16 %v3737, %v3736
        %v3753 = vpack.c.b16 %v3739, %v3738
        %v3754 = vpack.c.b16 %v3741, %v3740
        %v3755 = vpack.c.b16 %v3743, %v3742
        %v3756 = vpack.c.b16 %v3745, %v3744
        %v3757 = vpack.c.b16 %v3747, %v3746
        %v3758 = vpack.c.b16 %v3749, %v3748
        %v3759 = vpack.c.b16 %v3751, %v3750
        %3768 = vmatpush.bf16.msra.mxu0 %v3759
        %3769 = vmatpush.bf16.msra.mxu0 %v3758
        %3770 = vmatpush.bf16.msra.mxu0 %v3757
        %3771 = vmatpush.bf16.msra.mxu0 %v3756
        %3772 = vmatpush.bf16.msra.mxu0 %v3755
        %3773 = vmatpush.bf16.msra.mxu0 %v3754
        %3774 = vmatpush.bf16.msra.mxu0 %v3753
        %3775 = vmatpush.bf16.msra.mxu0 %v3752
        %3776 = vmatmul.bf16.gmra.mxu0 %v3692
        %v3777 = vpop.f32.mrf.mxu0
        %v3778 = vadd.f32 %v3718, %v3777
        %v3779 = vpop.f32.mrf.mxu0
        %v3780 = vadd.f32 %v3718, %v3779
        %3781 = vmatmul.bf16.gmra.mxu0 %v3693
        %v3782 = vpop.f32.mrf.mxu0
        %v3783 = vadd.f32 %v3718, %v3782
        %v3784 = vpop.f32.mrf.mxu0
        %v3785 = vadd.f32 %v3718, %v3784
        %3786 = vmatmul.bf16.gmra.mxu0 %v3694
        %v3787 = vpop.f32.mrf.mxu0
        %v3788 = vadd.f32 %v3718, %v3787
        %v3789 = vpop.f32.mrf.mxu0
        %v3790 = vadd.f32 %v3718, %v3789
        %3791 = vmatmul.bf16.gmra.mxu0 %v3695
        %v3792 = vpop.f32.mrf.mxu0
        %v3793 = vadd.f32 %v3718, %v3792
        %v3794 = vpop.f32.mrf.mxu0
        %v3795 = vadd.f32 %v3718, %v3794
        %3796 = vmatmul.bf16.gmra.mxu0 %v3696
        %v3797 = vpop.f32.mrf.mxu0
        %v3798 = vadd.f32 %v3718, %v3797
        %v3799 = vpop.f32.mrf.mxu0
        %v3800 = vadd.f32 %v3718, %v3799
        %3801 = vmatmul.bf16.gmra.mxu0 %v3697
        %v3802 = vpop.f32.mrf.mxu0
        %v3803 = vadd.f32 %v3718, %v3802
        %v3804 = vpop.f32.mrf.mxu0
        %v3805 = vadd.f32 %v3718, %v3804
        %3806 = vmatmul.bf16.gmra.mxu0 %v3698
        %v3807 = vpop.f32.mrf.mxu0
        %v3808 = vadd.f32 %v3718, %v3807
        %v3809 = vpop.f32.mrf.mxu0
        %v3810 = vadd.f32 %v3718, %v3809
        %3811 = vmatmul.bf16.gmra.mxu0 %v3699
        %v3812 = vpop.f32.mrf.mxu0
        %v3813 = vadd.f32 %v3718, %v3812
        %v3814 = vpop.f32.mrf.mxu0
        %v3815 = vadd.f32 %v3718, %v3814
        %3816 = vdwg.mxu0
        %v3817 = vmul.f32 %v3778, %v2006
        %v3818 = vmul.f32 %v3780, %v2007
        %v3819 = vmul.f32 %v3783, %v2008
        %v3820 = vmul.f32 %v3785, %v2009
        %v3821 = vmul.f32 %v3788, %v2010
        %v3822 = vmul.f32 %v3790, %v2011
        %v3823 = vmul.f32 %v3793, %v2012
        %v3824 = vmul.f32 %v3795, %v2013
        %v3825 = vmul.f32 %v3798, %v2014
        %v3826 = vmul.f32 %v3800, %v2015
        %v3827 = vmul.f32 %v3803, %v2016
        %v3828 = vmul.f32 %v3805, %v2017
        %v3829 = vmul.f32 %v3808, %v2018
        %v3830 = vmul.f32 %v3810, %v2019
        %v3831 = vmul.f32 %v3813, %v2020
        %v3832 = vmul.f32 %v3815, %v2021
        %v3849 = vrot.slane %v3817, 1
        %v3850 = vrot.slane %v3817, 2
        %v3851 = vrot.slane %v3817, 3
        %v3852 = vrot.slane %v3817, 4
        %v3853 = vrot.slane %v3817, 5
        %v3854 = vrot.slane %v3817, 6
        %v3855 = vrot.slane %v3817, 7
        %v3856 = vrot.slane %v3818, 1
        %v3857 = vrot.slane %v3818, 2
        %v3858 = vrot.slane %v3818, 3
        %v3859 = vrot.slane %v3818, 4
        %v3860 = vrot.slane %v3818, 5
        %v3861 = vrot.slane %v3818, 6
        %v3862 = vrot.slane %v3818, 7
        %v3863 = vrot.slane %v3819, 1
        %v3864 = vrot.slane %v3819, 2
        %v3865 = vrot.slane %v3819, 3
        %v3866 = vrot.slane %v3819, 4
        %v3867 = vrot.slane %v3819, 5
        %v3868 = vrot.slane %v3819, 6
        %v3869 = vrot.slane %v3819, 7
        %v3870 = vrot.slane %v3820, 1
        %v3871 = vrot.slane %v3820, 2
        %v3872 = vrot.slane %v3820, 3
        %v3873 = vrot.slane %v3820, 4
        %v3874 = vrot.slane %v3820, 5
        %v3875 = vrot.slane %v3820, 6
        %v3876 = vrot.slane %v3820, 7
        %v3877 = vrot.slane %v3821, 1
        %v3878 = vrot.slane %v3821, 2
        %v3879 = vrot.slane %v3821, 3
        %v3880 = vrot.slane %v3821, 4
        %v3881 = vrot.slane %v3821, 5
        %v3882 = vrot.slane %v3821, 6
        %v3883 = vrot.slane %v3821, 7
        %v3884 = vrot.slane %v3822, 1
        %v3885 = vrot.slane %v3822, 2
        %v3886 = vrot.slane %v3822, 3
        %v3887 = vrot.slane %v3822, 4
        %v3888 = vrot.slane %v3822, 5
        %v3889 = vrot.slane %v3822, 6
        %v3890 = vrot.slane %v3822, 7
        %v3891 = vrot.slane %v3823, 1
        %v3892 = vrot.slane %v3823, 2
        %v3893 = vrot.slane %v3823, 3
        %v3894 = vrot.slane %v3823, 4
        %v3895 = vrot.slane %v3823, 5
        %v3896 = vrot.slane %v3823, 6
        %v3897 = vrot.slane %v3823, 7
        %v3898 = vrot.slane %v3824, 1
        %v3899 = vrot.slane %v3824, 2
        %v3900 = vrot.slane %v3824, 3
        %v3901 = vrot.slane %v3824, 4
        %v3902 = vrot.slane %v3824, 5
        %v3903 = vrot.slane %v3824, 6
        %v3904 = vrot.slane %v3824, 7
        %v3905 = vrot.slane %v3825, 1
        %v3906 = vrot.slane %v3825, 2
        %v3907 = vrot.slane %v3825, 3
        %v3908 = vrot.slane %v3825, 4
        %v3909 = vrot.slane %v3825, 5
        %v3910 = vrot.slane %v3825, 6
        %v3911 = vrot.slane %v3825, 7
        %v3912 = vrot.slane %v3826, 1
        %v3913 = vrot.slane %v3826, 2
        %v3914 = vrot.slane %v3826, 3
        %v3915 = vrot.slane %v3826, 4
        %v3916 = vrot.slane %v3826, 5
        %v3917 = vrot.slane %v3826, 6
        %v3918 = vrot.slane %v3826, 7
        %v3919 = vrot.slane %v3827, 1
        %v3920 = vrot.slane %v3827, 2
        %v3921 = vrot.slane %v3827, 3
        %v3922 = vrot.slane %v3827, 4
        %v3923 = vrot.slane %v3827, 5
        %v3924 = vrot.slane %v3827, 6
        %v3925 = vrot.slane %v3827, 7
        %v3926 = vrot.slane %v3828, 1
        %v3927 = vrot.slane %v3828, 2
        %v3928 = vrot.slane %v3828, 3
        %v3929 = vrot.slane %v3828, 4
        %v3930 = vrot.slane %v3828, 5
        %v3931 = vrot.slane %v3828, 6
        %v3932 = vrot.slane %v3828, 7
        %v3933 = vrot.slane %v3829, 1
        %v3934 = vrot.slane %v3829, 2
        %v3935 = vrot.slane %v3829, 3
        %v3936 = vrot.slane %v3829, 4
        %v3937 = vrot.slane %v3829, 5
        %v3938 = vrot.slane %v3829, 6
        %v3939 = vrot.slane %v3829, 7
        %v3940 = vrot.slane %v3830, 1
        %v3941 = vrot.slane %v3830, 2
        %v3942 = vrot.slane %v3830, 3
        %v3943 = vrot.slane %v3830, 4
        %v3944 = vrot.slane %v3830, 5
        %v3945 = vrot.slane %v3830, 6
        %v3946 = vrot.slane %v3830, 7
        %v3947 = vrot.slane %v3831, 1
        %v3948 = vrot.slane %v3831, 2
        %v3949 = vrot.slane %v3831, 3
        %v3950 = vrot.slane %v3831, 4
        %v3951 = vrot.slane %v3831, 5
        %v3952 = vrot.slane %v3831, 6
        %v3953 = vrot.slane %v3831, 7
        %v3954 = vrot.slane %v3832, 1
        %v3955 = vrot.slane %v3832, 2
        %v3956 = vrot.slane %v3832, 3
        %v3957 = vrot.slane %v3832, 4
        %v3958 = vrot.slane %v3832, 5
        %v3959 = vrot.slane %v3832, 6
        %v3960 = vrot.slane %v3832, 7
        %v3961 = vperm.slane %v3817, 0
        %v3962 = vperm.slane %v3849, 0
        %v3963 = vperm.slane %v3850, 0
        %v3964 = vperm.slane %v3851, 0
        %v3965 = vperm.slane %v3852, 0
        %v3966 = vperm.slane %v3853, 0
        %v3967 = vperm.slane %v3854, 0
        %v3968 = vperm.slane %v3855, 0
        %v3969 = vperm.slane %v3818, 0
        %v3970 = vperm.slane %v3856, 0
        %v3971 = vperm.slane %v3857, 0
        %v3972 = vperm.slane %v3858, 0
        %v3973 = vperm.slane %v3859, 0
        %v3974 = vperm.slane %v3860, 0
        %v3975 = vperm.slane %v3861, 0
        %v3976 = vperm.slane %v3862, 0
        %v3977 = vperm.slane %v3819, 0
        %v3978 = vperm.slane %v3863, 0
        %v3979 = vperm.slane %v3864, 0
        %v3980 = vperm.slane %v3865, 0
        %v3981 = vperm.slane %v3866, 0
        %v3982 = vperm.slane %v3867, 0
        %v3983 = vperm.slane %v3868, 0
        %v3984 = vperm.slane %v3869, 0
        %v3985 = vperm.slane %v3820, 0
        %v3986 = vperm.slane %v3870, 0
        %v3987 = vperm.slane %v3871, 0
        %v3988 = vperm.slane %v3872, 0
        %v3989 = vperm.slane %v3873, 0
        %v3990 = vperm.slane %v3874, 0
        %v3991 = vperm.slane %v3875, 0
        %v3992 = vperm.slane %v3876, 0
        %v3993 = vperm.slane %v3821, 0
        %v3994 = vperm.slane %v3877, 0
        %v3995 = vperm.slane %v3878, 0
        %v3996 = vperm.slane %v3879, 0
        %v3997 = vperm.slane %v3880, 0
        %v3998 = vperm.slane %v3881, 0
        %v3999 = vperm.slane %v3882, 0
        %v4000 = vperm.slane %v3883, 0
        %v4001 = vperm.slane %v3822, 0
        %v4002 = vperm.slane %v3884, 0
        %v4003 = vperm.slane %v3885, 0
        %v4004 = vperm.slane %v3886, 0
        %v4005 = vperm.slane %v3887, 0
        %v4006 = vperm.slane %v3888, 0
        %v4007 = vperm.slane %v3889, 0
        %v4008 = vperm.slane %v3890, 0
        %v4009 = vperm.slane %v3823, 0
        %v4010 = vperm.slane %v3891, 0
        %v4011 = vperm.slane %v3892, 0
        %v4012 = vperm.slane %v3893, 0
        %v4013 = vperm.slane %v3894, 0
        %v4014 = vperm.slane %v3895, 0
        %v4015 = vperm.slane %v3896, 0
        %v4016 = vperm.slane %v3897, 0
        %v4017 = vperm.slane %v3824, 0
        %v4018 = vperm.slane %v3898, 0
        %v4019 = vperm.slane %v3899, 0
        %v4020 = vperm.slane %v3900, 0
        %v4021 = vperm.slane %v3901, 0
        %v4022 = vperm.slane %v3902, 0
        %v4023 = vperm.slane %v3903, 0
        %v4024 = vperm.slane %v3904, 0
        %v4025 = vperm.slane %v3825, 0
        %v4026 = vperm.slane %v3905, 0
        %v4027 = vperm.slane %v3906, 0
        %v4028 = vperm.slane %v3907, 0
        %v4029 = vperm.slane %v3908, 0
        %v4030 = vperm.slane %v3909, 0
        %v4031 = vperm.slane %v3910, 0
        %v4032 = vperm.slane %v3911, 0
        %v4033 = vperm.slane %v3826, 0
        %v4034 = vperm.slane %v3912, 0
        %v4035 = vperm.slane %v3913, 0
        %v4036 = vperm.slane %v3914, 0
        %v4037 = vperm.slane %v3915, 0
        %v4038 = vperm.slane %v3916, 0
        %v4039 = vperm.slane %v3917, 0
        %v4040 = vperm.slane %v3918, 0
        %v4041 = vperm.slane %v3827, 0
        %v4042 = vperm.slane %v3919, 0
        %v4043 = vperm.slane %v3920, 0
        %v4044 = vperm.slane %v3921, 0
        %v4045 = vperm.slane %v3922, 0
        %v4046 = vperm.slane %v3923, 0
        %v4047 = vperm.slane %v3924, 0
        %v4048 = vperm.slane %v3925, 0
        %v4049 = vperm.slane %v3828, 0
        %v4050 = vperm.slane %v3926, 0
        %v4051 = vperm.slane %v3927, 0
        %v4052 = vperm.slane %v3928, 0
        %v4053 = vperm.slane %v3929, 0
        %v4054 = vperm.slane %v3930, 0
        %v4055 = vperm.slane %v3931, 0
        %v4056 = vperm.slane %v3932, 0
        %v4057 = vperm.slane %v3829, 0
        %v4058 = vperm.slane %v3933, 0
        %v4059 = vperm.slane %v3934, 0
        %v4060 = vperm.slane %v3935, 0
        %v4061 = vperm.slane %v3936, 0
        %v4062 = vperm.slane %v3937, 0
        %v4063 = vperm.slane %v3938, 0
        %v4064 = vperm.slane %v3939, 0
        %v4065 = vperm.slane %v3830, 0
        %v4066 = vperm.slane %v3940, 0
        %v4067 = vperm.slane %v3941, 0
        %v4068 = vperm.slane %v3942, 0
        %v4069 = vperm.slane %v3943, 0
        %v4070 = vperm.slane %v3944, 0
        %v4071 = vperm.slane %v3945, 0
        %v4072 = vperm.slane %v3946, 0
        %v4073 = vperm.slane %v3831, 0
        %v4074 = vperm.slane %v3947, 0
        %v4075 = vperm.slane %v3948, 0
        %v4076 = vperm.slane %v3949, 0
        %v4077 = vperm.slane %v3950, 0
        %v4078 = vperm.slane %v3951, 0
        %v4079 = vperm.slane %v3952, 0
        %v4080 = vperm.slane %v3953, 0
        %v4081 = vperm.slane %v3832, 0
        %v4082 = vperm.slane %v3954, 0
        %v4083 = vperm.slane %v3955, 0
        %v4084 = vperm.slane %v3956, 0
        %v4085 = vperm.slane %v3957, 0
        %v4086 = vperm.slane %v3958, 0
        %v4087 = vperm.slane %v3959, 0
        %v4088 = vperm.slane %v3960, 0
        %4217 = vst [vmem:[%s346] sm:$0x3] %v3961
        %4218 = vst [vmem:[%s346 + $0x2] sm:$0x3] %v3962
        %4219 = vst [vmem:[%s346 + $0x4] sm:$0x3] %v3963
        %4220 = vst [vmem:[%s346 + $0x6] sm:$0x3] %v3964
        %4221 = vst [vmem:[%s346 + $0x8] sm:$0x3] %v3965
        %4222 = vst [vmem:[%s346 + $0xa] sm:$0x3] %v3966
        %4223 = vst [vmem:[%s346 + $0xc] sm:$0x3] %v3967
        %4224 = vst [vmem:[%s346 + $0xe] sm:$0x3] %v3968
        %4225 = vst [vmem:[%s346 + $0x10] sm:$0x3] %v3969
        %4226 = vst [vmem:[%s346 + $0x12] sm:$0x3] %v3970
        %4227 = vst [vmem:[%s346 + $0x14] sm:$0x3] %v3971
        %4228 = vst [vmem:[%s346 + $0x16] sm:$0x3] %v3972
        %4229 = vst [vmem:[%s346 + $0x18] sm:$0x3] %v3973
        %4230 = vst [vmem:[%s346 + $0x1a] sm:$0x3] %v3974
        %4231 = vst [vmem:[%s346 + $0x1c] sm:$0x3] %v3975
        %4232 = vst [vmem:[%s346 + $0x1e] sm:$0x3] %v3976
        %4233 = vst [vmem:[%s346 + $0x20] sm:$0x3] %v3977
        %4234 = vst [vmem:[%s346 + $0x22] sm:$0x3] %v3978
        %4235 = vst [vmem:[%s346 + $0x24] sm:$0x3] %v3979
        %4236 = vst [vmem:[%s346 + $0x26] sm:$0x3] %v3980
        %4237 = vst [vmem:[%s346 + $0x28] sm:$0x3] %v3981
        %4238 = vst [vmem:[%s346 + $0x2a] sm:$0x3] %v3982
        %4239 = vst [vmem:[%s346 + $0x2c] sm:$0x3] %v3983
        %4240 = vst [vmem:[%s346 + $0x2e] sm:$0x3] %v3984
        %4241 = vst [vmem:[%s346 + $0x30] sm:$0x3] %v3985
        %4242 = vst [vmem:[%s346 + $0x32] sm:$0x3] %v3986
        %4243 = vst [vmem:[%s346 + $0x34] sm:$0x3] %v3987
        %4244 = vst [vmem:[%s346 + $0x36] sm:$0x3] %v3988
        %4245 = vst [vmem:[%s346 + $0x38] sm:$0x3] %v3989
        %4246 = vst [vmem:[%s346 + $0x3a] sm:$0x3] %v3990
        %4247 = vst [vmem:[%s346 + $0x3c] sm:$0x3] %v3991
        %4248 = vst [vmem:[%s346 + $0x3e] sm:$0x3] %v3992
        %4249 = vst [vmem:[%s346 + $0x40] sm:$0x3] %v3993
        %4250 = vst [vmem:[%s346 + $0x42] sm:$0x3] %v3994
        %4251 = vst [vmem:[%s346 + $0x44] sm:$0x3] %v3995
        %4252 = vst [vmem:[%s346 + $0x46] sm:$0x3] %v3996
        %4253 = vst [vmem:[%s346 + $0x48] sm:$0x3] %v3997
        %4254 = vst [vmem:[%s346 + $0x4a] sm:$0x3] %v3998
        %4255 = vst [vmem:[%s346 + $0x4c] sm:$0x3] %v3999
        %4256 = vst [vmem:[%s346 + $0x4e] sm:$0x3] %v4000
        %4257 = vst [vmem:[%s346 + $0x50] sm:$0x3] %v4001
        %4258 = vst [vmem:[%s346 + $0x52] sm:$0x3] %v4002
        %4259 = vst [vmem:[%s346 + $0x54] sm:$0x3] %v4003
        %4260 = vst [vmem:[%s346 + $0x56] sm:$0x3] %v4004
        %4261 = vst [vmem:[%s346 + $0x58] sm:$0x3] %v4005
        %4262 = vst [vmem:[%s346 + $0x5a] sm:$0x3] %v4006
        %4263 = vst [vmem:[%s346 + $0x5c] sm:$0x3] %v4007
        %4264 = vst [vmem:[%s346 + $0x5e] sm:$0x3] %v4008
        %4265 = vst [vmem:[%s346 + $0x60] sm:$0x3] %v4009
        %4266 = vst [vmem:[%s346 + $0x62] sm:$0x3] %v4010
        %4267 = vst [vmem:[%s346 + $0x64] sm:$0x3] %v4011
        %4268 = vst [vmem:[%s346 + $0x66] sm:$0x3] %v4012
        %4269 = vst [vmem:[%s346 + $0x68] sm:$0x3] %v4013
        %4270 = vst [vmem:[%s346 + $0x6a] sm:$0x3] %v4014
        %4271 = vst [vmem:[%s346 + $0x6c] sm:$0x3] %v4015
        %4272 = vst [vmem:[%s346 + $0x6e] sm:$0x3] %v4016
        %4273 = vst [vmem:[%s346 + $0x70] sm:$0x3] %v4017
        %4274 = vst [vmem:[%s346 + $0x72] sm:$0x3] %v4018
        %4275 = vst [vmem:[%s346 + $0x74] sm:$0x3] %v4019
        %4276 = vst [vmem:[%s346 + $0x76] sm:$0x3] %v4020
        %4277 = vst [vmem:[%s346 + $0x78] sm:$0x3] %v4021
        %4278 = vst [vmem:[%s346 + $0x7a] sm:$0x3] %v4022
        %4279 = vst [vmem:[%s346 + $0x7c] sm:$0x3] %v4023
        %4280 = vst [vmem:[%s346 + $0x7e] sm:$0x3] %v4024
        %4281 = vst [vmem:[%s346 + $0x80] sm:$0x3] %v4025
        %4282 = vst [vmem:[%s346 + $0x82] sm:$0x3] %v4026
        %4283 = vst [vmem:[%s346 + $0x84] sm:$0x3] %v4027
        %4284 = vst [vmem:[%s346 + $0x86] sm:$0x3] %v4028
        %4285 = vst [vmem:[%s346 + $0x88] sm:$0x3] %v4029
        %4286 = vst [vmem:[%s346 + $0x8a] sm:$0x3] %v4030
        %4287 = vst [vmem:[%s346 + $0x8c] sm:$0x3] %v4031
        %4288 = vst [vmem:[%s346 + $0x8e] sm:$0x3] %v4032
        %4289 = vst [vmem:[%s346 + $0x90] sm:$0x3] %v4033
        %4290 = vst [vmem:[%s346 + $0x92] sm:$0x3] %v4034
        %4291 = vst [vmem:[%s346 + $0x94] sm:$0x3] %v4035
        %4292 = vst [vmem:[%s346 + $0x96] sm:$0x3] %v4036
        %4293 = vst [vmem:[%s346 + $0x98] sm:$0x3] %v4037
        %4294 = vst [vmem:[%s346 + $0x9a] sm:$0x3] %v4038
        %4295 = vst [vmem:[%s346 + $0x9c] sm:$0x3] %v4039
        %4296 = vst [vmem:[%s346 + $0x9e] sm:$0x3] %v4040
        %4297 = vst [vmem:[%s346 + $0xa0] sm:$0x3] %v4041
        %4298 = vst [vmem:[%s346 + $0xa2] sm:$0x3] %v4042
        %4299 = vst [vmem:[%s346 + $0xa4] sm:$0x3] %v4043
        %4300 = vst [vmem:[%s346 + $0xa6] sm:$0x3] %v4044
        %4301 = vst [vmem:[%s346 + $0xa8] sm:$0x3] %v4045
        %4302 = vst [vmem:[%s346 + $0xaa] sm:$0x3] %v4046
        %4303 = vst [vmem:[%s346 + $0xac] sm:$0x3] %v4047
        %4304 = vst [vmem:[%s346 + $0xae] sm:$0x3] %v4048
        %4305 = vst [vmem:[%s346 + $0xb0] sm:$0x3] %v4049
        %4306 = vst [vmem:[%s346 + $0xb2] sm:$0x3] %v4050
        %4307 = vst [vmem:[%s346 + $0xb4] sm:$0x3] %v4051
        %4308 = vst [vmem:[%s346 + $0xb6] sm:$0x3] %v4052
        %4309 = vst [vmem:[%s346 + $0xb8] sm:$0x3] %v4053
        %4310 = vst [vmem:[%s346 + $0xba] sm:$0x3] %v4054
        %4311 = vst [vmem:[%s346 + $0xbc] sm:$0x3] %v4055
        %4312 = vst [vmem:[%s346 + $0xbe] sm:$0x3] %v4056
        %4313 = vst [vmem:[%s346 + $0xc0] sm:$0x3] %v4057
        %4314 = vst [vmem:[%s346 + $0xc2] sm:$0x3] %v4058
        %4315 = vst [vmem:[%s346 + $0xc4] sm:$0x3] %v4059
        %4316 = vst [vmem:[%s346 + $0xc6] sm:$0x3] %v4060
        %4317 = vst [vmem:[%s346 + $0xc8] sm:$0x3] %v4061
        %4318 = vst [vmem:[%s346 + $0xca] sm:$0x3] %v4062
        %4319 = vst [vmem:[%s346 + $0xcc] sm:$0x3] %v4063
        %4320 = vst [vmem:[%s346 + $0xce] sm:$0x3] %v4064
        %4321 = vst [vmem:[%s346 + $0xd0] sm:$0x3] %v4065
        %4322 = vst [vmem:[%s346 + $0xd2] sm:$0x3] %v4066
        %4323 = vst [vmem:[%s346 + $0xd4] sm:$0x3] %v4067
        %4324 = vst [vmem:[%s346 + $0xd6] sm:$0x3] %v4068
        %4325 = vst [vmem:[%s346 + $0xd8] sm:$0x3] %v4069
        %4326 = vst [vmem:[%s346 + $0xda] sm:$0x3] %v4070
        %4327 = vst [vmem:[%s346 + $0xdc] sm:$0x3] %v4071
        %4328 = vst [vmem:[%s346 + $0xde] sm:$0x3] %v4072
        %4329 = vst [vmem:[%s346 + $0xe0] sm:$0x3] %v4073
        %4330 = vst [vmem:[%s346 + $0xe2] sm:$0x3] %v4074
        %4331 = vst [vmem:[%s346 + $0xe4] sm:$0x3] %v4075
        %4332 = vst [vmem:[%s346 + $0xe6] sm:$0x3] %v4076
        %4333 = vst [vmem:[%s346 + $0xe8] sm:$0x3] %v4077
        %4334 = vst [vmem:[%s346 + $0xea] sm:$0x3] %v4078
        %4335 = vst [vmem:[%s346 + $0xec] sm:$0x3] %v4079
        %4336 = vst [vmem:[%s346 + $0xee] sm:$0x3] %v4080
        %4337 = vst [vmem:[%s346 + $0xf0] sm:$0x3] %v4081
        %4338 = vst [vmem:[%s346 + $0xf2] sm:$0x3] %v4082
        %4339 = vst [vmem:[%s346 + $0xf4] sm:$0x3] %v4083
        %4340 = vst [vmem:[%s346 + $0xf6] sm:$0x3] %v4084
        %4341 = vst [vmem:[%s346 + $0xf8] sm:$0x3] %v4085
        %4342 = vst [vmem:[%s346 + $0xfa] sm:$0x3] %v4086
        %4343 = vst [vmem:[%s346 + $0xfc] sm:$0x3] %v4087
        %4344 = vst [vmem:[%s346 + $0xfe] sm:$0x3] %v4088
        %s4345 = sand.u32 %s171, 1
        %s4346 = scalar_lea.sflag [#allocation4], %s4345
        %s4347 = sand.u32 %s171, 1
        %s4348 = smul.addr %s4347, 256
        %s4349 = scalar_lea.vmem [#allocation10], %s4348
        // Predicated region
        $region61: #{tpu_custom_call.1} parent=43 // pred_check
          %p4350 = pneg %p181
        $region62: #{tpu_custom_call.1} parent=43 // pred_check_branch
          %4352 = sbr.rel (%p4350) target = $region64
        $region63: #{tpu_custom_call.1} parent=43 // pred_region
          %s4353 = smul.u32 128, %s27
          %4355 = vsyncadd %s4346, 0
          %s4356 = smul.addr %s4353, 2
          %s4357 = scalar_lea.hbm %s6, %s4356
          %s4358 = sshll.u32 %s4349, 4
          %s4359 = int_to_ptr.vmem [resolvable:$true] %s4358
          %s4360 = sshll.u32 %s4357, 4
          %s4361 = int_to_ptr.hbm [resolvable:$true] %s4360
          %4366 = dma.vmem_to_hbm [thread:$0]  %s4359, 4096, %s4361, %s4346, 32, 32, 2
        $region64: #{tpu_custom_call.1} parent=43 // pred_fallthru
          _
      $region44: #{tpu_custom_call.1} parent=5 // pred_fallthru
        _
      %p4367 = scmp.le.s32.totalorder 2, %s22
      // Predicated region
      $region65: #{tpu_custom_call.1} parent=5 // pred_check
        %p4368 = pneg %p4367
      $region66: #{tpu_custom_call.1} parent=5 // pred_check_branch
        %4370 = sbr.rel (%p4368) target = $region68
      $region67: #{tpu_custom_call.1} parent=5 // pred_region
        %s4371 = ssub.s32 %s22, 2
        // Predicated region
        $region69: #{tpu_custom_call.1} parent=67 // pred_check
          %p4372 = pneg %p187
        $region70: #{tpu_custom_call.1} parent=67 // pred_check_branch
          %4374 = sbr.rel (%p4372) target = $region72
        $region71: #{tpu_custom_call.1} parent=67 // pred_region
          %s4375 = sand.u32 %s172, 1
          %s4376 = scalar_lea.sflag [#allocation4], %s4375
          %s4377 = sand.u32 %s172, 1
          %s4378 = smul.addr %s4377, 256
          %s4379 = scalar_lea.vmem [#allocation10], %s4378
          %4381 = dma.done %s4376, 4096
        $region72: #{tpu_custom_call.1} parent=67 // pred_fallthru
          _
      $region68: #{tpu_custom_call.1} parent=5 // pred_fallthru
        _
    $region6: #{tpu_custom_call.1} parent=1 // loop_footer
      %s26 = sadd.s32 1, %s22
    $region7: #{tpu_custom_call.1} parent=1 // loop_footer_branch
      %21 = sbr.rel target = $region3
    $region8: #{tpu_custom_call.1} parent=1 // loop_exit
      _
    %4382 = vsyncpa [#allocation3], 1
    %s4383 = scalar_lea.sflag [#allocation3], 1
    %4384 = vsyncpa %s4383, 1
    %4385 = vsyncpa [#allocation6], 1
    %s4386 = scalar_lea.sflag [#allocation6], 1
    %4387 = vsyncpa %s4386, 1
    %4388 = vsyncpa [#allocation9], 1
    %4389 = vsyncpa [#allocation4], 1
    %s4390 = scalar_lea.sflag [#allocation4], 1
    %4391 = vsyncpa %s4390, 1

</llo_original>
